<compile_context>
chip_gen: v5e
topology: v5e:2x2
jax: 0.10.0
libtpu: 0.0.40
codegen_flags: <defaults>
</compile_context>

<pallas_src>
import jax
import jax.numpy as jnp
from jax.experimental import pallas as pl
from jax.experimental.pallas import tpu as pltpu

PACK = 128  # samples packed per row == one full lane span of the output


def _round_up(x, m):
    return ((x + m - 1) // m) * m


def _emd_kernel(tri_ref, seg_ref, out_ref, tgt_ref, sw_ref):
    # out_ref/tgt_ref: (TBR, PACK*C) packed blocks; sample s of packed row r
    #                  occupies lanes [C*s, C*s + C).
    # tri_ref: (PACK*C, PACK*C) block-diagonal cumsum-over-bins operator
    #          tri[m, n] = 1 iff same sample and bin(m) <= bin(n). Resident.
    # seg_ref: (PACK*C, PACK) per-sample mean operator (entries 1/C). Resident.
    # sw_ref : (TBR, PACK) samplewise EMD, fully lane-dense.
    d = out_ref[...] - tgt_ref[...]                                      # VPU
    # cdf[r, n] = (cumsum(output) - cumsum(target)) for sample n//C, bin n%C
    cdf = jnp.dot(d, tri_ref[...], preferred_element_type=jnp.float32)   # MXU
    # mse[r, s] = (1/C) * sum_i cdf_i^2 for sample s of packed row r
    mse = jnp.dot(cdf * cdf, seg_ref[...], preferred_element_type=jnp.float32)
    sw_ref[...] = jnp.sqrt(mse)


def emd_loss(output, target, *, max_block_rows=512):
    """Returns (mean_emd scalar, samplewise_emd of shape (B,)).

    max_block_rows = packed rows (of 128 samples) per grid step. Default 512
    (65536 samples/step, ~22 MiB double-buffered VMEM) is sized for v5e/v6e/
    v7x with the explicit 40 MiB vmem limit below; on v7x choose it so the
    "parallel" grid has >= 2 steps (2 TensorCores).
    """
    assert output.shape == target.shape
    assert output.ndim == 2
    B, C = output.shape
    output = output.astype(jnp.float32)
    target = target.astype(jnp.float32)

    W = PACK * C  # packed row width (1280 for NIMA's C=10)

    # Pad only when B is not a multiple of 128 (the packing granularity).
    # Padded rows give d = 0 -> sw = 0 and are sliced off before the mean, so
    # they cannot bias the result. When B % 128 == 0 (the common case) there
    # is no extra HBM pass at all.
    b_pad = _round_up(B, PACK)
    if b_pad != B:
        output = jnp.pad(output, ((0, b_pad - B), (0, 0)))
        target = jnp.pad(target, ((0, b_pad - B), (0, 0)))
    R = b_pad // PACK

    # Free row-major reshape (pure metadata, no HBM movement): lane-packed
    # (R, 128*C) layout -> dense contiguous block DMAs.
    out_p = output.reshape(R, W)
    tgt_p = target.reshape(R, W)

    # Resident constants (DMA'd once; index_map -> (0, 0)).
    j = jnp.arange(W)
    seg_of = j // C          # which of the 128 packed samples a lane belongs to
    bin_of = j % C           # which score bin a lane holds
    # tri[m, n] = 1 iff same sample and bin(m) <= bin(n)   (cumsum over bins)
    tri = ((seg_of[:, None] == seg_of[None, :]) &
           (bin_of[:, None] <= bin_of[None, :])).astype(jnp.float32)
    # seg[m, s] = 1/C iff sample(m) == s                   (per-sample mean)
    seg = (seg_of[:, None] == jnp.arange(PACK)[None, :]).astype(jnp.float32) / C

    # Block of packed rows: either the whole array (single step) or a multiple
    # of 8 sublanes (so partial edge blocks stay legal).
    if R <= max_block_rows:
        tbr = R
    else:
        tbr = max(8, (max_block_rows // 8) * 8)
    grid = (pl.cdiv(R, tbr),)

    cost = pl.CostEstimate(
        flops=2 * R * W * W + 2 * R * W * PACK + 3 * R * W,
        transcendentals=R * PACK,                       # sqrt per sample
        bytes_accessed=(2 * b_pad * C + b_pad) * 4 + (W * W + W * PACK) * 4,
    )

    sw_p = pl.pallas_call(
        _emd_kernel,
        out_shape=jax.ShapeDtypeStruct((R, PACK), jnp.float32),
        grid=grid,
        in_specs=[
            pl.BlockSpec((W, W), lambda i: (0, 0)),      # tri: resident const
            pl.BlockSpec((W, PACK), lambda i: (0, 0)),   # seg: resident const
            pl.BlockSpec((tbr, W), lambda i: (i, 0)),    # packed output block
            pl.BlockSpec((tbr, W), lambda i: (i, 0)),    # packed target block
        ],
        out_specs=pl.BlockSpec((tbr, PACK), lambda i: (i, 0)),
        compiler_params=pltpu.CompilerParams(
            dimension_semantics=("parallel",),
            vmem_limit_bytes=40 * 1024 * 1024,
        ),
        cost_estimate=cost,
    )(tri, seg, out_p, tgt_p)

    sw = sw_p.reshape(b_pad)[:B]
    # Final scalar mean over the true B in the wrapper (keeps the grid axis
    # parallel; padded/edge garbage can never reach the mean).
    return jnp.mean(sw), sw


def _emd_loss_ref(output, target):
    cdf_o = jnp.cumsum(output.astype(jnp.float32), axis=1)
    cdf_t = jnp.cumsum(target.astype(jnp.float32), axis=1)
    diff = cdf_o - cdf_t
    sw = jnp.sqrt(jnp.mean(diff * diff, axis=1))
    return sw.mean(), sw


if __name__ == "__main__":
    key = jax.random.PRNGKey(0)
    k1, k2, k3, k4, k5, k6 = jax.random.split(key, 6)

    C = 10  # NIMA-style 10 score bins

    # Check 1: tiny batch (single packed row, single grid step).
    B = 8
    out1 = jax.nn.softmax(jax.random.normal(k1, (B, C), jnp.float32), axis=1)
    tgt1 = jax.nn.softmax(jax.random.normal(k2, (B, C), jnp.float32), axis=1)
    m1, sw1 = emd_loss(out1, tgt1)
    jax.block_until_ready((m1, sw1))
    rm1, rsw1 = _emd_loss_ref(out1, tgt1)
    assert sw1.shape == (B,)
    assert jnp.allclose(m1, rm1, atol=1e-6, rtol=1e-5)
    assert jnp.allclose(sw1, rsw1, atol=1e-6, rtol=1e-5)

    # Check 2: ragged batch (B % 128 != 0), still a single grid step.
    B2 = 300
    out2 = jax.nn.softmax(jax.random.normal(k3, (B2, C), jnp.float32), axis=1)
    tgt2 = jax.nn.softmax(jax.random.normal(k4, (B2, C), jnp.float32), axis=1)
    m2, sw2 = emd_loss(out2, tgt2)
    jax.block_until_ready((m2, sw2))
    rm2, rsw2 = _emd_loss_ref(out2, tgt2)
    assert sw2.shape == (B2,)
    assert jnp.allclose(m2, rm2, atol=1e-6, rtol=1e-5)
    assert jnp.allclose(sw2, rsw2, atol=1e-6, rtol=1e-5)

    # Check 3: multi-step grid with a partial (out-of-bounds) last block:
    # R = 20 packed rows, 8 rows per block -> grid of 3, rows 20..23 masked.
    B3 = 2560
    out3 = jax.nn.softmax(jax.random.normal(k5, (B3, C), jnp.float32), axis=1)
    tgt3 = jax.nn.softmax(jax.random.normal(k6, (B3, C), jnp.float32), axis=1)
    m3, sw3 = emd_loss(out3, tgt3, max_block_rows=8)
    jax.block_until_ready((m3, sw3))
    rm3, rsw3 = _emd_loss_ref(out3, tgt3)
    assert sw3.shape == (B3,)
    assert jnp.allclose(m3, rm3, atol=1e-6, rtol=1e-5)
    assert jnp.allclose(sw3, rsw3, atol=1e-6, rtol=1e-5)

    print("KERNEL_OK")
</pallas_src>

<mosaic_0001>
module attributes {stable_mosaic.version = 11 : i64} {
  func.func @_emd_kernel(%arg0: i32, %arg1: memref<1280x1280xf32, #tpu.memory_space<vmem>>, %arg2: memref<1280x128xf32, #tpu.memory_space<vmem>>, %arg3: memref<1x1280xf32, #tpu.memory_space<vmem>>, %arg4: memref<1x1280xf32, #tpu.memory_space<vmem>>, %arg5: memref<1x128xf32, #tpu.memory_space<vmem>>) attributes {dimension_semantics = [#tpu.dimension_semantics<parallel>], iteration_bounds = array<i64: 1>, scalar_prefetch = 0 : i64, scratch_operands = 0 : i64, tpu.core_type = #tpu.core_type<tc>, window_params = [{pipeline_mode = #tpu.pipeline_mode<synchronous>, transform_indices = @transform_0, window_bounds = array<i64: 1280, 1280>}, {pipeline_mode = #tpu.pipeline_mode<synchronous>, transform_indices = @transform_1, window_bounds = array<i64: 1280, 128>}, {transform_indices = @transform_2, window_bounds = array<i64: 1, 1280>}, {transform_indices = @transform_3, window_bounds = array<i64: 1, 1280>}, {transform_indices = @transform_4, window_bounds = array<i64: 1, 128>}]} {
    %c0 = arith.constant 0 : index
    %c0_0 = arith.constant 0 : index
    %0 = vector.load %arg3[%c0, %c0_0] : memref<1x1280xf32, #tpu.memory_space<vmem>>, vector<1x1280xf32>
    %c0_1 = arith.constant 0 : index
    %c0_2 = arith.constant 0 : index
    %1 = vector.load %arg4[%c0_1, %c0_2] : memref<1x1280xf32, #tpu.memory_space<vmem>>, vector<1x1280xf32>
    %2 = arith.subf %0, %1 : vector<1x1280xf32>
    %c0_3 = arith.constant 0 : index
    %c0_4 = arith.constant 0 : index
    %3 = vector.load %arg1[%c0_3, %c0_4] : memref<1280x1280xf32, #tpu.memory_space<vmem>>, vector<1280x1280xf32>
    %cst = arith.constant dense<0.000000e+00> : vector<1x1280xf32>
    %4 = tpu.matmul %2, %3, %cst {dimension_numbers = #tpu.dot_dimension_numbers<[1], [0], [0], [1], [0, 0, 1, 1], [], []>} : vector<1x1280xf32>, vector<1280x1280xf32>, vector<1x1280xf32> -> vector<1x1280xf32>
    %5 = arith.mulf %4, %4 : vector<1x1280xf32>
    %c0_5 = arith.constant 0 : index
    %c0_6 = arith.constant 0 : index
    %6 = vector.load %arg2[%c0_5, %c0_6] : memref<1280x128xf32, #tpu.memory_space<vmem>>, vector<1280x128xf32>
    %cst_7 = arith.constant dense<0.000000e+00> : vector<1x128xf32>
    %7 = tpu.matmul %5, %6, %cst_7 {dimension_numbers = #tpu.dot_dimension_numbers<[1], [0], [0], [1], [0, 0, 1, 1], [], []>} : vector<1x1280xf32>, vector<1280x128xf32>, vector<1x128xf32> -> vector<1x128xf32>
    %8 = math.sqrt %7 : vector<1x128xf32>
    %c0_8 = arith.constant 0 : index
    %c0_9 = arith.constant 0 : index
    %9 = vector.load %arg5[%c0_8, %c0_9] : memref<1x128xf32, #tpu.memory_space<vmem>>, vector<1x128xf32>
    tpu.vector_store %arg5[%c0_8, %c0_9], %8 {strides = array<i32>} : memref<1x128xf32, #tpu.memory_space<vmem>>, vector<1x128xf32>,
    return
  }
  func.func @transform_0(%arg0: i32) -> (i32, i32) {
    %c0_i32 = arith.constant 0 : i32
    %c0_i32_0 = arith.constant 0 : i32
    %c0_i32_1 = arith.constant 0 : i32
    return %c0_i32, %c0_i32_0 : i32, i32
  }
  func.func @transform_1(%arg0: i32) -> (i32, i32) {
    %c0_i32 = arith.constant 0 : i32
    %c0_i32_0 = arith.constant 0 : i32
    %c0_i32_1 = arith.constant 0 : i32
    return %c0_i32, %c0_i32_0 : i32, i32
  }
  func.func @transform_2(%arg0: i32) -> (i32, i32) {
    %c0_i32 = arith.constant 0 : i32
    %c0_i32_0 = arith.constant 0 : i32
    return %arg0, %c0_i32 : i32, i32
  }
  func.func @transform_3(%arg0: i32) -> (i32, i32) {
    %c0_i32 = arith.constant 0 : i32
    %c0_i32_0 = arith.constant 0 : i32
    return %arg0, %c0_i32 : i32, i32
  }
  func.func @transform_4(%arg0: i32) -> (i32, i32) {
    %c0_i32 = arith.constant 0 : i32
    %c0_i32_0 = arith.constant 0 : i32
    return %arg0, %c0_i32 : i32, i32
  }
}

</mosaic_0001>

<llo_original>
// kernel: tpu_custom_call.1
$region0: #{tpu_custom_call.1}
  #allocation0 [shape = 'u32[]', space=smem, size = 0x4, offset = 0x4, fixed_abs, tag = 'smem constant byte address 0x4 - core index']
  #allocation1 [shape = 'u32[72,128]{1,0:T(1,128)}', space=vmem, size = 0x9000, scoped, tag = 'internal scratch']
  %s0 = inlined_call_operand.hbm [shape: f32[1280,1280], index: 0, kind: input, shape index: {}]
  %s1 = inlined_call_operand.hbm [shape: f32[1280,128], index: 1, kind: input, shape index: {}]
  %s2 = inlined_call_operand.hbm [shape: f32[1,1280], index: 2, kind: input, shape index: {}]
  %s3 = inlined_call_operand.hbm [shape: f32[1,1280], index: 3, kind: input, shape index: {}]
  %s4 = inlined_call_operand.hbm [shape: f32[1,128], index: 4, kind: output, shape index: {}]
  %s5 = sld [smem:[#allocation0]]
  $region42: #{tpu_custom_call.1} parent=0
    _
  %s7 = ssub.s32 1, %s5
  %s8 = scalar_select 0, %s7, %s5
  $region1: #{tpu_custom_call.1} parent=0
    #allocation2 [shape = 'u8[6553600]{0}', space=vmem, size = 0x640000, scoped, tag = 'input window, operand 0, single buffered']
    #allocation3 [shape = 's32[1]{0}', space=sflag, size = 0x4, scoped, tag = 'scoped memory for tpu_custom_call.1']
    #allocation4 [shape = 's32[1]{0}', space=sflag, size = 0x4, scoped, tag = 'scoped memory for tpu_custom_call.1']
    #allocation5 [shape = 'u8[655360]{0}', space=vmem, size = 0xa0000, scoped, tag = 'input window, operand 1, single buffered']
    #allocation6 [shape = 's32[1]{0}', space=sflag, size = 0x4, scoped, tag = 'scoped memory for tpu_custom_call.1']
    #allocation7 [shape = 'u8[5120]{0}', space=vmem, size = 0x1400, scoped, tag = 'input window, operand 2, single buffered']
    #allocation8 [shape = 'u8[5120]{0}', space=vmem, size = 0x1400, scoped, tag = 'input window, operand 3, single buffered']
    #allocation9 [shape = 's32[1]{0}', space=sflag, size = 0x4, scoped, tag = 'scoped memory for tpu_custom_call.1']
    #allocation10 [shape = 'u8[512]{0}', space=vmem, size = 0x400, scoped, tag = 'output window, operand 0, single buffered']
    %9 = vsyncpa [#allocation3], 0
    %10 = vsyncpa [#allocation6], 0
    %11 = vsyncpa [#allocation9], 0
    %12 = vsyncpa [#allocation4], 0
    // Predicated region
    $region2: #{tpu_custom_call.1} parent=1 // pred_check
      _
    $region3: #{tpu_custom_call.1} parent=1 // pred_check_branch
      %14 = sbr.rel (0) target = $region5
    $region4: #{tpu_custom_call.1} parent=1 // pred_region
      %16 = vsyncadd [#allocation3], 0
      %s17 = sshll.u32 %s0, 4
      %s18 = int_to_ptr.hbm [resolvable:$true] %s17
      %s19 = sshll.u32 [#allocation2], 4
      %s20 = int_to_ptr.vmem [resolvable:$true] %s19
      %25 = dma.hbm_to_vmem [thread:$0]  %s18, 204800, %s20, [#allocation3], 1280, 1280, 80
    $region5: #{tpu_custom_call.1} parent=1 // pred_fallthru
      _
    // Predicated region
    $region6: #{tpu_custom_call.1} parent=1 // pred_check
      _
    $region7: #{tpu_custom_call.1} parent=1 // pred_check_branch
      %27 = sbr.rel (0) target = $region9
    $region8: #{tpu_custom_call.1} parent=1 // pred_region
      %29 = vsyncadd [#allocation6], 0
      %s30 = sshll.u32 %s1, 4
      %s31 = int_to_ptr.hbm [resolvable:$true] %s30
      %s32 = sshll.u32 [#allocation5], 4
      %s33 = int_to_ptr.vmem [resolvable:$true] %s32
      %38 = dma.hbm_to_vmem [thread:$0]  %s31, 20480, %s33, [#allocation6], 128, 128, 8
    $region9: #{tpu_custom_call.1} parent=1 // pred_fallthru
      _
    // Predicated region
    $region10: #{tpu_custom_call.1} parent=1 // pred_check
      _
    $region11: #{tpu_custom_call.1} parent=1 // pred_check_branch
      %40 = sbr.rel (0) target = $region13
    $region12: #{tpu_custom_call.1} parent=1 // pred_region
      %42 = vsyncadd [#allocation6], 0
      %s44 = sshll.u32 %s2, 4
      %s45 = int_to_ptr.hbm [resolvable:$true] %s44
      %s46 = sshll.u32 [#allocation7], 4
      %s47 = int_to_ptr.vmem [resolvable:$true] %s46
      %49 = dma.hbm_to_vmem [thread:$0]  %s45, 160, %s47, [#allocation6]
    $region13: #{tpu_custom_call.1} parent=1 // pred_fallthru
      _
    // Predicated region
    $region14: #{tpu_custom_call.1} parent=1 // pred_check
      _
    $region15: #{tpu_custom_call.1} parent=1 // pred_check_branch
      %51 = sbr.rel (0) target = $region17
    $region16: #{tpu_custom_call.1} parent=1 // pred_region
      %53 = vsyncadd [#allocation9], 0
      %s55 = sshll.u32 %s3, 4
      %s56 = int_to_ptr.hbm [resolvable:$true] %s55
      %s57 = sshll.u32 [#allocation8], 4
      %s58 = int_to_ptr.vmem [resolvable:$true] %s57
      %60 = dma.hbm_to_vmem [thread:$0]  %s56, 160, %s58, [#allocation9]
    $region17: #{tpu_custom_call.1} parent=1 // pred_fallthru
      _
    // Predicated region
    $region18: #{tpu_custom_call.1} parent=1 // pred_check
      _
    $region19: #{tpu_custom_call.1} parent=1 // pred_check_branch
      %62 = sbr.rel (0) target = $region21
    $region20: #{tpu_custom_call.1} parent=1 // pred_region
      %64 = dma.done [#allocation3], 204800
    $region21: #{tpu_custom_call.1} parent=1 // pred_fallthru
      _
    // Predicated region
    $region22: #{tpu_custom_call.1} parent=1 // pred_check
      _
    $region23: #{tpu_custom_call.1} parent=1 // pred_check_branch
      %66 = sbr.rel (0) target = $region25
    $region24: #{tpu_custom_call.1} parent=1 // pred_region
      %68 = dma.done [#allocation6], 20480
    $region25: #{tpu_custom_call.1} parent=1 // pred_fallthru
      _
    // Predicated region
    $region26: #{tpu_custom_call.1} parent=1 // pred_check
      _
    $region27: #{tpu_custom_call.1} parent=1 // pred_check_branch
      %70 = sbr.rel (0) target = $region29
    $region28: #{tpu_custom_call.1} parent=1 // pred_region
      %72 = dma.done [#allocation6], 160
    $region29: #{tpu_custom_call.1} parent=1 // pred_fallthru
      _
    // Predicated region
    $region30: #{tpu_custom_call.1} parent=1 // pred_check
      _
    $region31: #{tpu_custom_call.1} parent=1 // pred_check_branch
      %74 = sbr.rel (0) target = $region33
    $region32: #{tpu_custom_call.1} parent=1 // pred_region
      %76 = dma.done [#allocation9], 160
    $region33: #{tpu_custom_call.1} parent=1 // pred_fallthru
      _
    %v77 = vld [vmem:[#allocation7] sm:$0xff]
    %v78 = vld [vmem:[#allocation7 + $0x8] sm:$0x3]
    %v79 = vld [vmem:[#allocation8] sm:$0xff]
    %v80 = vld [vmem:[#allocation8 + $0x8] sm:$0x3]
    %v81 = vsub.f32 %v77, %v79
    %v82 = vsub.f32 %v78, %v80
    %v83 = vld [vmem:[#allocation2] sm:$0xff]
    %v84 = vld [vmem:[#allocation2 + $0x8] sm:$0xff]
    %v85 = vld [vmem:[#allocation2 + $0x10] sm:$0xff]
    %v86 = vld [vmem:[#allocation2 + $0x18] sm:$0xff]
    %v87 = vld [vmem:[#allocation2 + $0x20] sm:$0xff]
    %v88 = vld [vmem:[#allocation2 + $0x28] sm:$0xff]
    %v89 = vld [vmem:[#allocation2 + $0x30] sm:$0xff]
    %v90 = vld [vmem:[#allocation2 + $0x38] sm:$0xff]
    %v91 = vld [vmem:[#allocation2 + $0x40] sm:$0xff]
    %v92 = vld [vmem:[#allocation2 + $0x48] sm:$0xff]
    %v93 = vld [vmem:[#allocation2 + $0x50] sm:$0xff]
    %v94 = vld [vmem:[#allocation2 + $0x58] sm:$0xff]
    %v95 = vld [vmem:[#allocation2 + $0x60] sm:$0xff]
    %v96 = vld [vmem:[#allocation2 + $0x68] sm:$0xff]
    %v97 = vld [vmem:[#allocation2 + $0x70] sm:$0xff]
    %v98 = vld [vmem:[#allocation2 + $0x78] sm:$0xff]
    %v99 = vld [vmem:[#allocation2 + $0x80] sm:$0xff]
    %v100 = vld [vmem:[#allocation2 + $0x88] sm:$0xff]
    %v101 = vld [vmem:[#allocation2 + $0x90] sm:$0xff]
    %v102 = vld [vmem:[#allocation2 + $0x98] sm:$0xff]
    %v103 = vld [vmem:[#allocation2 + $0xa0] sm:$0xff]
    %v104 = vld [vmem:[#allocation2 + $0xa8] sm:$0xff]
    %v105 = vld [vmem:[#allocation2 + $0xb0] sm:$0xff]
    %v106 = vld [vmem:[#allocation2 + $0xb8] sm:$0xff]
    %v107 = vld [vmem:[#allocation2 + $0xc0] sm:$0xff]
    %v108 = vld [vmem:[#allocation2 + $0xc8] sm:$0xff]
    %v109 = vld [vmem:[#allocation2 + $0xd0] sm:$0xff]
    %v110 = vld [vmem:[#allocation2 + $0xd8] sm:$0xff]
    %v111 = vld [vmem:[#allocation2 + $0xe0] sm:$0xff]
    %v112 = vld [vmem:[#allocation2 + $0xe8] sm:$0xff]
    %v113 = vld [vmem:[#allocation2 + $0xf0] sm:$0xff]
    %v114 = vld [vmem:[#allocation2 + $0xf8] sm:$0xff]
    %v115 = vld [vmem:[#allocation2 + $0x100] sm:$0xff]
    %v116 = vld [vmem:[#allocation2 + $0x108] sm:$0xff]
    %v117 = vld [vmem:[#allocation2 + $0x110] sm:$0xff]
    %v118 = vld [vmem:[#allocation2 + $0x118] sm:$0xff]
    %v119 = vld [vmem:[#allocation2 + $0x120] sm:$0xff]
    %v120 = vld [vmem:[#allocation2 + $0x128] sm:$0xff]
    %v121 = vld [vmem:[#allocation2 + $0x130] sm:$0xff]
    %v122 = vld [vmem:[#allocation2 + $0x138] sm:$0xff]
    %v123 = vld [vmem:[#allocation2 + $0x140] sm:$0xff]
    %v124 = vld [vmem:[#allocation2 + $0x148] sm:$0xff]
    %v125 = vld [vmem:[#allocation2 + $0x150] sm:$0xff]
    %v126 = vld [vmem:[#allocation2 + $0x158] sm:$0xff]
    %v127 = vld [vmem:[#allocation2 + $0x160] sm:$0xff]
    %v128 = vld [vmem:[#allocation2 + $0x168] sm:$0xff]
    %v129 = vld [vmem:[#allocation2 + $0x170] sm:$0xff]
    %v130 = vld [vmem:[#allocation2 + $0x178] sm:$0xff]
    %v131 = vld [vmem:[#allocation2 + $0x180] sm:$0xff]
    %v132 = vld [vmem:[#allocation2 + $0x188] sm:$0xff]
    %v133 = vld [vmem:[#allocation2 + $0x190] sm:$0xff]
    %v134 = vld [vmem:[#allocation2 + $0x198] sm:$0xff]
    %v135 = vld [vmem:[#allocation2 + $0x1a0] sm:$0xff]
    %v136 = vld [vmem:[#allocation2 + $0x1a8] sm:$0xff]
    %v137 = vld [vmem:[#allocation2 + $0x1b0] sm:$0xff]
    %v138 = vld [vmem:[#allocation2 + $0x1b8] sm:$0xff]
    %v139 = vld [vmem:[#allocation2 + $0x1c0] sm:$0xff]
    %v140 = vld [vmem:[#allocation2 + $0x1c8] sm:$0xff]
    %v141 = vld [vmem:[#allocation2 + $0x1d0] sm:$0xff]
    %v142 = vld [vmem:[#allocation2 + $0x1d8] sm:$0xff]
    %v143 = vld [vmem:[#allocation2 + $0x1e0] sm:$0xff]
    %v144 = vld [vmem:[#allocation2 + $0x1e8] sm:$0xff]
    %v145 = vld [vmem:[#allocation2 + $0x1f0] sm:$0xff]
    %v146 = vld [vmem:[#allocation2 + $0x1f8] sm:$0xff]
    %v147 = vld [vmem:[#allocation2 + $0x200] sm:$0xff]
    %v148 = vld [vmem:[#allocation2 + $0x208] sm:$0xff]
    %v149 = vld [vmem:[#allocation2 + $0x210] sm:$0xff]
    %v150 = vld [vmem:[#allocation2 + $0x218] sm:$0xff]
    %v151 = vld [vmem:[#allocation2 + $0x220] sm:$0xff]
    %v152 = vld [vmem:[#allocation2 + $0x228] sm:$0xff]
    %v153 = vld [vmem:[#allocation2 + $0x230] sm:$0xff]
    %v154 = vld [vmem:[#allocation2 + $0x238] sm:$0xff]
    %v155 = vld [vmem:[#allocation2 + $0x240] sm:$0xff]
    %v156 = vld [vmem:[#allocation2 + $0x248] sm:$0xff]
    %v157 = vld [vmem:[#allocation2 + $0x250] sm:$0xff]
    %v158 = vld [vmem:[#allocation2 + $0x258] sm:$0xff]
    %v159 = vld [vmem:[#allocation2 + $0x260] sm:$0xff]
    %v160 = vld [vmem:[#allocation2 + $0x268] sm:$0xff]
    %v161 = vld [vmem:[#allocation2 + $0x270] sm:$0xff]
    %v162 = vld [vmem:[#allocation2 + $0x278] sm:$0xff]
    %v163 = vld [vmem:[#allocation2 + $0x280] sm:$0xff]
    %v164 = vld [vmem:[#allocation2 + $0x288] sm:$0xff]
    %v165 = vld [vmem:[#allocation2 + $0x290] sm:$0xff]
    %v166 = vld [vmem:[#allocation2 + $0x298] sm:$0xff]
    %v167 = vld [vmem:[#allocation2 + $0x2a0] sm:$0xff]
    %v168 = vld [vmem:[#allocation2 + $0x2a8] sm:$0xff]
    %v169 = vld [vmem:[#allocation2 + $0x2b0] sm:$0xff]
    %v170 = vld [vmem:[#allocation2 + $0x2b8] sm:$0xff]
    %v171 = vld [vmem:[#allocation2 + $0x2c0] sm:$0xff]
    %v172 = vld [vmem:[#allocation2 + $0x2c8] sm:$0xff]
    %v173 = vld [vmem:[#allocation2 + $0x2d0] sm:$0xff]
    %v174 = vld [vmem:[#allocation2 + $0x2d8] sm:$0xff]
    %v175 = vld [vmem:[#allocation2 + $0x2e0] sm:$0xff]
    %v176 = vld [vmem:[#allocation2 + $0x2e8] sm:$0xff]
    %v177 = vld [vmem:[#allocation2 + $0x2f0] sm:$0xff]
    %v178 = vld [vmem:[#allocation2 + $0x2f8] sm:$0xff]
    %v179 = vld [vmem:[#allocation2 + $0x300] sm:$0xff]
    %v180 = vld [vmem:[#allocation2 + $0x308] sm:$0xff]
    %v181 = vld [vmem:[#allocation2 + $0x310] sm:$0xff]
    %v182 = vld [vmem:[#allocation2 + $0x318] sm:$0xff]
    %v183 = vld [vmem:[#allocation2 + $0x320] sm:$0xff]
    %v184 = vld [vmem:[#allocation2 + $0x328] sm:$0xff]
    %v185 = vld [vmem:[#allocation2 + $0x330] sm:$0xff]
    %v186 = vld [vmem:[#allocation2 + $0x338] sm:$0xff]
    %v187 = vld [vmem:[#allocation2 + $0x340] sm:$0xff]
    %v188 = vld [vmem:[#allocation2 + $0x348] sm:$0xff]
    %v189 = vld [vmem:[#allocation2 + $0x350] sm:$0xff]
    %v190 = vld [vmem:[#allocation2 + $0x358] sm:$0xff]
    %v191 = vld [vmem:[#allocation2 + $0x360] sm:$0xff]
    %v192 = vld [vmem:[#allocation2 + $0x368] sm:$0xff]
    %v193 = vld [vmem:[#allocation2 + $0x370] sm:$0xff]
    %v194 = vld [vmem:[#allocation2 + $0x378] sm:$0xff]
    %v195 = vld [vmem:[#allocation2 + $0x380] sm:$0xff]
    %v196 = vld [vmem:[#allocation2 + $0x388] sm:$0xff]
    %v197 = vld [vmem:[#allocation2 + $0x390] sm:$0xff]
    %v198 = vld [vmem:[#allocation2 + $0x398] sm:$0xff]
    %v199 = vld [vmem:[#allocation2 + $0x3a0] sm:$0xff]
    %v200 = vld [vmem:[#allocation2 + $0x3a8] sm:$0xff]
    %v201 = vld [vmem:[#allocation2 + $0x3b0] sm:$0xff]
    %v202 = vld [vmem:[#allocation2 + $0x3b8] sm:$0xff]
    %v203 = vld [vmem:[#allocation2 + $0x3c0] sm:$0xff]
    %v204 = vld [vmem:[#allocation2 + $0x3c8] sm:$0xff]
    %v205 = vld [vmem:[#allocation2 + $0x3d0] sm:$0xff]
    %v206 = vld [vmem:[#allocation2 + $0x3d8] sm:$0xff]
    %v207 = vld [vmem:[#allocation2 + $0x3e0] sm:$0xff]
    %v208 = vld [vmem:[#allocation2 + $0x3e8] sm:$0xff]
    %v209 = vld [vmem:[#allocation2 + $0x3f0] sm:$0xff]
    %v210 = vld [vmem:[#allocation2 + $0x3f8] sm:$0xff]
    %v211 = vld [vmem:[#allocation2 + $0x400] sm:$0xff]
    %v212 = vld [vmem:[#allocation2 + $0x408] sm:$0xff]
    %v213 = vld [vmem:[#allocation2 + $0x410] sm:$0xff]
    %v214 = vld [vmem:[#allocation2 + $0x418] sm:$0xff]
    %v215 = vld [vmem:[#allocation2 + $0x420] sm:$0xff]
    %v216 = vld [vmem:[#allocation2 + $0x428] sm:$0xff]
    %v217 = vld [vmem:[#allocation2 + $0x430] sm:$0xff]
    %v218 = vld [vmem:[#allocation2 + $0x438] sm:$0xff]
    %v219 = vld [vmem:[#allocation2 + $0x440] sm:$0xff]
    %v220 = vld [vmem:[#allocation2 + $0x448] sm:$0xff]
    %v221 = vld [vmem:[#allocation2 + $0x450] sm:$0xff]
    %v222 = vld [vmem:[#allocation2 + $0x458] sm:$0xff]
    %v223 = vld [vmem:[#allocation2 + $0x460] sm:$0xff]
    %v224 = vld [vmem:[#allocation2 + $0x468] sm:$0xff]
    %v225 = vld [vmem:[#allocation2 + $0x470] sm:$0xff]
    %v226 = vld [vmem:[#allocation2 + $0x478] sm:$0xff]
    %v227 = vld [vmem:[#allocation2 + $0x480] sm:$0xff]
    %v228 = vld [vmem:[#allocation2 + $0x488] sm:$0xff]
    %v229 = vld [vmem:[#allocation2 + $0x490] sm:$0xff]
    %v230 = vld [vmem:[#allocation2 + $0x498] sm:$0xff]
    %v231 = vld [vmem:[#allocation2 + $0x4a0] sm:$0xff]
    %v232 = vld [vmem:[#allocation2 + $0x4a8] sm:$0xff]
    %v233 = vld [vmem:[#allocation2 + $0x4b0] sm:$0xff]
    %v234 = vld [vmem:[#allocation2 + $0x4b8] sm:$0xff]
    %v235 = vld [vmem:[#allocation2 + $0x4c0] sm:$0xff]
    %v236 = vld [vmem:[#allocation2 + $0x4c8] sm:$0xff]
    %v237 = vld [vmem:[#allocation2 + $0x4d0] sm:$0xff]
    %v238 = vld [vmem:[#allocation2 + $0x4d8] sm:$0xff]
    %v239 = vld [vmem:[#allocation2 + $0x4e0] sm:$0xff]
    %v240 = vld [vmem:[#allocation2 + $0x4e8] sm:$0xff]
    %v241 = vld [vmem:[#allocation2 + $0x4f0] sm:$0xff]
    %v242 = vld [vmem:[#allocation2 + $0x4f8] sm:$0xff]
    %v243 = vld [vmem:[#allocation2 + $0x500] sm:$0xff]
    %v244 = vld [vmem:[#allocation2 + $0x508] sm:$0xff]
    %v245 = vld [vmem:[#allocation2 + $0x510] sm:$0xff]
    %v246 = vld [vmem:[#allocation2 + $0x518] sm:$0xff]
    %v247 = vld [vmem:[#allocation2 + $0x520] sm:$0xff]
    %v248 = vld [vmem:[#allocation2 + $0x528] sm:$0xff]
    %v249 = vld [vmem:[#allocation2 + $0x530] sm:$0xff]
    %v250 = vld [vmem:[#allocation2 + $0x538] sm:$0xff]
    %v251 = vld [vmem:[#allocation2 + $0x540] sm:$0xff]
    %v252 = vld [vmem:[#allocation2 + $0x548] sm:$0xff]
    %v253 = vld [vmem:[#allocation2 + $0x550] sm:$0xff]
    %v254 = vld [vmem:[#allocation2 + $0x558] sm:$0xff]
    %v255 = vld [vmem:[#allocation2 + $0x560] sm:$0xff]
    %v256 = vld [vmem:[#allocation2 + $0x568] sm:$0xff]
    %v257 = vld [vmem:[#allocation2 + $0x570] sm:$0xff]
    %v258 = vld [vmem:[#allocation2 + $0x578] sm:$0xff]
    %v259 = vld [vmem:[#allocation2 + $0x580] sm:$0xff]
    %v260 = vld [vmem:[#allocation2 + $0x588] sm:$0xff]
    %v261 = vld [vmem:[#allocation2 + $0x590] sm:$0xff]
    %v262 = vld [vmem:[#allocation2 + $0x598] sm:$0xff]
    %v263 = vld [vmem:[#allocation2 + $0x5a0] sm:$0xff]
    %v264 = vld [vmem:[#allocation2 + $0x5a8] sm:$0xff]
    %v265 = vld [vmem:[#allocation2 + $0x5b0] sm:$0xff]
    %v266 = vld [vmem:[#allocation2 + $0x5b8] sm:$0xff]
    %v267 = vld [vmem:[#allocation2 + $0x5c0] sm:$0xff]
    %v268 = vld [vmem:[#allocation2 + $0x5c8] sm:$0xff]
    %v269 = vld [vmem:[#allocation2 + $0x5d0] sm:$0xff]
    %v270 = vld [vmem:[#allocation2 + $0x5d8] sm:$0xff]
    %v271 = vld [vmem:[#allocation2 + $0x5e0] sm:$0xff]
    %v272 = vld [vmem:[#allocation2 + $0x5e8] sm:$0xff]
    %v273 = vld [vmem:[#allocation2 + $0x5f0] sm:$0xff]
    %v274 = vld [vmem:[#allocation2 + $0x5f8] sm:$0xff]
    %v275 = vld [vmem:[#allocation2 + $0x600] sm:$0xff]
    %v276 = vld [vmem:[#allocation2 + $0x608] sm:$0xff]
    %v277 = vld [vmem:[#allocation2 + $0x610] sm:$0xff]
    %v278 = vld [vmem:[#allocation2 + $0x618] sm:$0xff]
    %v279 = vld [vmem:[#allocation2 + $0x620] sm:$0xff]
    %v280 = vld [vmem:[#allocation2 + $0x628] sm:$0xff]
    %v281 = vld [vmem:[#allocation2 + $0x630] sm:$0xff]
    %v282 = vld [vmem:[#allocation2 + $0x638] sm:$0xff]
    %v283 = vld [vmem:[#allocation2 + $0x640] sm:$0xff]
    %v284 = vld [vmem:[#allocation2 + $0x648] sm:$0xff]
    %v285 = vld [vmem:[#allocation2 + $0x650] sm:$0xff]
    %v286 = vld [vmem:[#allocation2 + $0x658] sm:$0xff]
    %v287 = vld [vmem:[#allocation2 + $0x660] sm:$0xff]
    %v288 = vld [vmem:[#allocation2 + $0x668] sm:$0xff]
    %v289 = vld [vmem:[#allocation2 + $0x670] sm:$0xff]
    %v290 = vld [vmem:[#allocation2 + $0x678] sm:$0xff]
    %v291 = vld [vmem:[#allocation2 + $0x680] sm:$0xff]
    %v292 = vld [vmem:[#allocation2 + $0x688] sm:$0xff]
    %v293 = vld [vmem:[#allocation2 + $0x690] sm:$0xff]
    %v294 = vld [vmem:[#allocation2 + $0x698] sm:$0xff]
    %v295 = vld [vmem:[#allocation2 + $0x6a0] sm:$0xff]
    %v296 = vld [vmem:[#allocation2 + $0x6a8] sm:$0xff]
    %v297 = vld [vmem:[#allocation2 + $0x6b0] sm:$0xff]
    %v298 = vld [vmem:[#allocation2 + $0x6b8] sm:$0xff]
    %v299 = vld [vmem:[#allocation2 + $0x6c0] sm:$0xff]
    %v300 = vld [vmem:[#allocation2 + $0x6c8] sm:$0xff]
    %v301 = vld [vmem:[#allocation2 + $0x6d0] sm:$0xff]
    %v302 = vld [vmem:[#allocation2 + $0x6d8] sm:$0xff]
    %v303 = vld [vmem:[#allocation2 + $0x6e0] sm:$0xff]
    %v304 = vld [vmem:[#allocation2 + $0x6e8] sm:$0xff]
    %v305 = vld [vmem:[#allocation2 + $0x6f0] sm:$0xff]
    %v306 = vld [vmem:[#allocation2 + $0x6f8] sm:$0xff]
    %v307 = vld [vmem:[#allocation2 + $0x700] sm:$0xff]
    %v308 = vld [vmem:[#allocation2 + $0x708] sm:$0xff]
    %v309 = vld [vmem:[#allocation2 + $0x710] sm:$0xff]
    %v310 = vld [vmem:[#allocation2 + $0x718] sm:$0xff]
    %v311 = vld [vmem:[#allocation2 + $0x720] sm:$0xff]
    %v312 = vld [vmem:[#allocation2 + $0x728] sm:$0xff]
    %v313 = vld [vmem:[#allocation2 + $0x730] sm:$0xff]
    %v314 = vld [vmem:[#allocation2 + $0x738] sm:$0xff]
    %v315 = vld [vmem:[#allocation2 + $0x740] sm:$0xff]
    %v316 = vld [vmem:[#allocation2 + $0x748] sm:$0xff]
    %v317 = vld [vmem:[#allocation2 + $0x750] sm:$0xff]
    %v318 = vld [vmem:[#allocation2 + $0x758] sm:$0xff]
    %v319 = vld [vmem:[#allocation2 + $0x760] sm:$0xff]
    %v320 = vld [vmem:[#allocation2 + $0x768] sm:$0xff]
    %v321 = vld [vmem:[#allocation2 + $0x770] sm:$0xff]
    %v322 = vld [vmem:[#allocation2 + $0x778] sm:$0xff]
    %v323 = vld [vmem:[#allocation2 + $0x780] sm:$0xff]
    %v324 = vld [vmem:[#allocation2 + $0x788] sm:$0xff]
    %v325 = vld [vmem:[#allocation2 + $0x790] sm:$0xff]
    %v326 = vld [vmem:[#allocation2 + $0x798] sm:$0xff]
    %v327 = vld [vmem:[#allocation2 + $0x7a0] sm:$0xff]
    %v328 = vld [vmem:[#allocation2 + $0x7a8] sm:$0xff]
    %v329 = vld [vmem:[#allocation2 + $0x7b0] sm:$0xff]
    %v330 = vld [vmem:[#allocation2 + $0x7b8] sm:$0xff]
    %v331 = vld [vmem:[#allocation2 + $0x7c0] sm:$0xff]
    %v332 = vld [vmem:[#allocation2 + $0x7c8] sm:$0xff]
    %v333 = vld [vmem:[#allocation2 + $0x7d0] sm:$0xff]
    %v334 = vld [vmem:[#allocation2 + $0x7d8] sm:$0xff]
    %v335 = vld [vmem:[#allocation2 + $0x7e0] sm:$0xff]
    %v336 = vld [vmem:[#allocation2 + $0x7e8] sm:$0xff]
    %v337 = vld [vmem:[#allocation2 + $0x7f0] sm:$0xff]
    %v338 = vld [vmem:[#allocation2 + $0x7f8] sm:$0xff]
    %v339 = vld [vmem:[#allocation2 + $0x800] sm:$0xff]
    %v340 = vld [vmem:[#allocation2 + $0x808] sm:$0xff]
    %v341 = vld [vmem:[#allocation2 + $0x810] sm:$0xff]
    %v342 = vld [vmem:[#allocation2 + $0x818] sm:$0xff]
    %v343 = vld [vmem:[#allocation2 + $0x820] sm:$0xff]
    %v344 = vld [vmem:[#allocation2 + $0x828] sm:$0xff]
    %v345 = vld [vmem:[#allocation2 + $0x830] sm:$0xff]
    %v346 = vld [vmem:[#allocation2 + $0x838] sm:$0xff]
    %v347 = vld [vmem:[#allocation2 + $0x840] sm:$0xff]
    %v348 = vld [vmem:[#allocation2 + $0x848] sm:$0xff]
    %v349 = vld [vmem:[#allocation2 + $0x850] sm:$0xff]
    %v350 = vld [vmem:[#allocation2 + $0x858] sm:$0xff]
    %v351 = vld [vmem:[#allocation2 + $0x860] sm:$0xff]
    %v352 = vld [vmem:[#allocation2 + $0x868] sm:$0xff]
    %v353 = vld [vmem:[#allocation2 + $0x870] sm:$0xff]
    %v354 = vld [vmem:[#allocation2 + $0x878] sm:$0xff]
    %v355 = vld [vmem:[#allocation2 + $0x880] sm:$0xff]
    %v356 = vld [vmem:[#allocation2 + $0x888] sm:$0xff]
    %v357 = vld [vmem:[#allocation2 + $0x890] sm:$0xff]
    %v358 = vld [vmem:[#allocation2 + $0x898] sm:$0xff]
    %v359 = vld [vmem:[#allocation2 + $0x8a0] sm:$0xff]
    %v360 = vld [vmem:[#allocation2 + $0x8a8] sm:$0xff]
    %v361 = vld [vmem:[#allocation2 + $0x8b0] sm:$0xff]
    %v362 = vld [vmem:[#allocation2 + $0x8b8] sm:$0xff]
    %v363 = vld [vmem:[#allocation2 + $0x8c0] sm:$0xff]
    %v364 = vld [vmem:[#allocation2 + $0x8c8] sm:$0xff]
    %v365 = vld [vmem:[#allocation2 + $0x8d0] sm:$0xff]
    %v366 = vld [vmem:[#allocation2 + $0x8d8] sm:$0xff]
    %v367 = vld [vmem:[#allocation2 + $0x8e0] sm:$0xff]
    %v368 = vld [vmem:[#allocation2 + $0x8e8] sm:$0xff]
    %v369 = vld [vmem:[#allocation2 + $0x8f0] sm:$0xff]
    %v370 = vld [vmem:[#allocation2 + $0x8f8] sm:$0xff]
    %v371 = vld [vmem:[#allocation2 + $0x900] sm:$0xff]
    %v372 = vld [vmem:[#allocation2 + $0x908] sm:$0xff]
    %v373 = vld [vmem:[#allocation2 + $0x910] sm:$0xff]
    %v374 = vld [vmem:[#allocation2 + $0x918] sm:$0xff]
    %v375 = vld [vmem:[#allocation2 + $0x920] sm:$0xff]
    %v376 = vld [vmem:[#allocation2 + $0x928] sm:$0xff]
    %v377 = vld [vmem:[#allocation2 + $0x930] sm:$0xff]
    %v378 = vld [vmem:[#allocation2 + $0x938] sm:$0xff]
    %v379 = vld [vmem:[#allocation2 + $0x940] sm:$0xff]
    %v380 = vld [vmem:[#allocation2 + $0x948] sm:$0xff]
    %v381 = vld [vmem:[#allocation2 + $0x950] sm:$0xff]
    %v382 = vld [vmem:[#allocation2 + $0x958] sm:$0xff]
    %v383 = vld [vmem:[#allocation2 + $0x960] sm:$0xff]
    %v384 = vld [vmem:[#allocation2 + $0x968] sm:$0xff]
    %v385 = vld [vmem:[#allocation2 + $0x970] sm:$0xff]
    %v386 = vld [vmem:[#allocation2 + $0x978] sm:$0xff]
    %v387 = vld [vmem:[#allocation2 + $0x980] sm:$0xff]
    %v388 = vld [vmem:[#allocation2 + $0x988] sm:$0xff]
    %v389 = vld [vmem:[#allocation2 + $0x990] sm:$0xff]
    %v390 = vld [vmem:[#allocation2 + $0x998] sm:$0xff]
    %v391 = vld [vmem:[#allocation2 + $0x9a0] sm:$0xff]
    %v392 = vld [vmem:[#allocation2 + $0x9a8] sm:$0xff]
    %v393 = vld [vmem:[#allocation2 + $0x9b0] sm:$0xff]
    %v394 = vld [vmem:[#allocation2 + $0x9b8] sm:$0xff]
    %v395 = vld [vmem:[#allocation2 + $0x9c0] sm:$0xff]
    %v396 = vld [vmem:[#allocation2 + $0x9c8] sm:$0xff]
    %v397 = vld [vmem:[#allocation2 + $0x9d0] sm:$0xff]
    %v398 = vld [vmem:[#allocation2 + $0x9d8] sm:$0xff]
    %v399 = vld [vmem:[#allocation2 + $0x9e0] sm:$0xff]
    %v400 = vld [vmem:[#allocation2 + $0x9e8] sm:$0xff]
    %v401 = vld [vmem:[#allocation2 + $0x9f0] sm:$0xff]
    %v402 = vld [vmem:[#allocation2 + $0x9f8] sm:$0xff]
    %v403 = vld [vmem:[#allocation2 + $0xa00] sm:$0xff]
    %v404 = vld [vmem:[#allocation2 + $0xa08] sm:$0xff]
    %v405 = vld [vmem:[#allocation2 + $0xa10] sm:$0xff]
    %v406 = vld [vmem:[#allocation2 + $0xa18] sm:$0xff]
    %v407 = vld [vmem:[#allocation2 + $0xa20] sm:$0xff]
    %v408 = vld [vmem:[#allocation2 + $0xa28] sm:$0xff]
    %v409 = vld [vmem:[#allocation2 + $0xa30] sm:$0xff]
    %v410 = vld [vmem:[#allocation2 + $0xa38] sm:$0xff]
    %v411 = vld [vmem:[#allocation2 + $0xa40] sm:$0xff]
    %v412 = vld [vmem:[#allocation2 + $0xa48] sm:$0xff]
    %v413 = vld [vmem:[#allocation2 + $0xa50] sm:$0xff]
    %v414 = vld [vmem:[#allocation2 + $0xa58] sm:$0xff]
    %v415 = vld [vmem:[#allocation2 + $0xa60] sm:$0xff]
    %v416 = vld [vmem:[#allocation2 + $0xa68] sm:$0xff]
    %v417 = vld [vmem:[#allocation2 + $0xa70] sm:$0xff]
    %v418 = vld [vmem:[#allocation2 + $0xa78] sm:$0xff]
    %v419 = vld [vmem:[#allocation2 + $0xa80] sm:$0xff]
    %v420 = vld [vmem:[#allocation2 + $0xa88] sm:$0xff]
    %v421 = vld [vmem:[#allocation2 + $0xa90] sm:$0xff]
    %v422 = vld [vmem:[#allocation2 + $0xa98] sm:$0xff]
    %v423 = vld [vmem:[#allocation2 + $0xaa0] sm:$0xff]
    %v424 = vld [vmem:[#allocation2 + $0xaa8] sm:$0xff]
    %v425 = vld [vmem:[#allocation2 + $0xab0] sm:$0xff]
    %v426 = vld [vmem:[#allocation2 + $0xab8] sm:$0xff]
    %v427 = vld [vmem:[#allocation2 + $0xac0] sm:$0xff]
    %v428 = vld [vmem:[#allocation2 + $0xac8] sm:$0xff]
    %v429 = vld [vmem:[#allocation2 + $0xad0] sm:$0xff]
    %v430 = vld [vmem:[#allocation2 + $0xad8] sm:$0xff]
    %v431 = vld [vmem:[#allocation2 + $0xae0] sm:$0xff]
    %v432 = vld [vmem:[#allocation2 + $0xae8] sm:$0xff]
    %v433 = vld [vmem:[#allocation2 + $0xaf0] sm:$0xff]
    %v434 = vld [vmem:[#allocation2 + $0xaf8] sm:$0xff]
    %v435 = vld [vmem:[#allocation2 + $0xb00] sm:$0xff]
    %v436 = vld [vmem:[#allocation2 + $0xb08] sm:$0xff]
    %v437 = vld [vmem:[#allocation2 + $0xb10] sm:$0xff]
    %v438 = vld [vmem:[#allocation2 + $0xb18] sm:$0xff]
    %v439 = vld [vmem:[#allocation2 + $0xb20] sm:$0xff]
    %v440 = vld [vmem:[#allocation2 + $0xb28] sm:$0xff]
    %v441 = vld [vmem:[#allocation2 + $0xb30] sm:$0xff]
    %v442 = vld [vmem:[#allocation2 + $0xb38] sm:$0xff]
    %v443 = vld [vmem:[#allocation2 + $0xb40] sm:$0xff]
    %v444 = vld [vmem:[#allocation2 + $0xb48] sm:$0xff]
    %v445 = vld [vmem:[#allocation2 + $0xb50] sm:$0xff]
    %v446 = vld [vmem:[#allocation2 + $0xb58] sm:$0xff]
    %v447 = vld [vmem:[#allocation2 + $0xb60] sm:$0xff]
    %v448 = vld [vmem:[#allocation2 + $0xb68] sm:$0xff]
    %v449 = vld [vmem:[#allocation2 + $0xb70] sm:$0xff]
    %v450 = vld [vmem:[#allocation2 + $0xb78] sm:$0xff]
    %v451 = vld [vmem:[#allocation2 + $0xb80] sm:$0xff]
    %v452 = vld [vmem:[#allocation2 + $0xb88] sm:$0xff]
    %v453 = vld [vmem:[#allocation2 + $0xb90] sm:$0xff]
    %v454 = vld [vmem:[#allocation2 + $0xb98] sm:$0xff]
    %v455 = vld [vmem:[#allocation2 + $0xba0] sm:$0xff]
    %v456 = vld [vmem:[#allocation2 + $0xba8] sm:$0xff]
    %v457 = vld [vmem:[#allocation2 + $0xbb0] sm:$0xff]
    %v458 = vld [vmem:[#allocation2 + $0xbb8] sm:$0xff]
    %v459 = vld [vmem:[#allocation2 + $0xbc0] sm:$0xff]
    %v460 = vld [vmem:[#allocation2 + $0xbc8] sm:$0xff]
    %v461 = vld [vmem:[#allocation2 + $0xbd0] sm:$0xff]
    %v462 = vld [vmem:[#allocation2 + $0xbd8] sm:$0xff]
    %v463 = vld [vmem:[#allocation2 + $0xbe0] sm:$0xff]
    %v464 = vld [vmem:[#allocation2 + $0xbe8] sm:$0xff]
    %v465 = vld [vmem:[#allocation2 + $0xbf0] sm:$0xff]
    %v466 = vld [vmem:[#allocation2 + $0xbf8] sm:$0xff]
    %v467 = vld [vmem:[#allocation2 + $0xc00] sm:$0xff]
    %v468 = vld [vmem:[#allocation2 + $0xc08] sm:$0xff]
    %v469 = vld [vmem:[#allocation2 + $0xc10] sm:$0xff]
    %v470 = vld [vmem:[#allocation2 + $0xc18] sm:$0xff]
    %v471 = vld [vmem:[#allocation2 + $0xc20] sm:$0xff]
    %v472 = vld [vmem:[#allocation2 + $0xc28] sm:$0xff]
    %v473 = vld [vmem:[#allocation2 + $0xc30] sm:$0xff]
    %v474 = vld [vmem:[#allocation2 + $0xc38] sm:$0xff]
    %v475 = vld [vmem:[#allocation2 + $0xc40] sm:$0xff]
    %v476 = vld [vmem:[#allocation2 + $0xc48] sm:$0xff]
    %v477 = vld [vmem:[#allocation2 + $0xc50] sm:$0xff]
    %v478 = vld [vmem:[#allocation2 + $0xc58] sm:$0xff]
    %v479 = vld [vmem:[#allocation2 + $0xc60] sm:$0xff]
    %v480 = vld [vmem:[#allocation2 + $0xc68] sm:$0xff]
    %v481 = vld [vmem:[#allocation2 + $0xc70] sm:$0xff]
    %v482 = vld [vmem:[#allocation2 + $0xc78] sm:$0xff]
    %v483 = vld [vmem:[#allocation2 + $0xc80] sm:$0xff]
    %v484 = vld [vmem:[#allocation2 + $0xc88] sm:$0xff]
    %v485 = vld [vmem:[#allocation2 + $0xc90] sm:$0xff]
    %v486 = vld [vmem:[#allocation2 + $0xc98] sm:$0xff]
    %v487 = vld [vmem:[#allocation2 + $0xca0] sm:$0xff]
    %v488 = vld [vmem:[#allocation2 + $0xca8] sm:$0xff]
    %v489 = vld [vmem:[#allocation2 + $0xcb0] sm:$0xff]
    %v490 = vld [vmem:[#allocation2 + $0xcb8] sm:$0xff]
    %v491 = vld [vmem:[#allocation2 + $0xcc0] sm:$0xff]
    %v492 = vld [vmem:[#allocation2 + $0xcc8] sm:$0xff]
    %v493 = vld [vmem:[#allocation2 + $0xcd0] sm:$0xff]
    %v494 = vld [vmem:[#allocation2 + $0xcd8] sm:$0xff]
    %v495 = vld [vmem:[#allocation2 + $0xce0] sm:$0xff]
    %v496 = vld [vmem:[#allocation2 + $0xce8] sm:$0xff]
    %v497 = vld [vmem:[#allocation2 + $0xcf0] sm:$0xff]
    %v498 = vld [vmem:[#allocation2 + $0xcf8] sm:$0xff]
    %v499 = vld [vmem:[#allocation2 + $0xd00] sm:$0xff]
    %v500 = vld [vmem:[#allocation2 + $0xd08] sm:$0xff]
    %v501 = vld [vmem:[#allocation2 + $0xd10] sm:$0xff]
    %v502 = vld [vmem:[#allocation2 + $0xd18] sm:$0xff]
    %v503 = vld [vmem:[#allocation2 + $0xd20] sm:$0xff]
    %v504 = vld [vmem:[#allocation2 + $0xd28] sm:$0xff]
    %v505 = vld [vmem:[#allocation2 + $0xd30] sm:$0xff]
    %v506 = vld [vmem:[#allocation2 + $0xd38] sm:$0xff]
    %v507 = vld [vmem:[#allocation2 + $0xd40] sm:$0xff]
    %v508 = vld [vmem:[#allocation2 + $0xd48] sm:$0xff]
    %v509 = vld [vmem:[#allocation2 + $0xd50] sm:$0xff]
    %v510 = vld [vmem:[#allocation2 + $0xd58] sm:$0xff]
    %v511 = vld [vmem:[#allocation2 + $0xd60] sm:$0xff]
    %v512 = vld [vmem:[#allocation2 + $0xd68] sm:$0xff]
    %v513 = vld [vmem:[#allocation2 + $0xd70] sm:$0xff]
    %v514 = vld [vmem:[#allocation2 + $0xd78] sm:$0xff]
    %v515 = vld [vmem:[#allocation2 + $0xd80] sm:$0xff]
    %v516 = vld [vmem:[#allocation2 + $0xd88] sm:$0xff]
    %v517 = vld [vmem:[#allocation2 + $0xd90] sm:$0xff]
    %v518 = vld [vmem:[#allocation2 + $0xd98] sm:$0xff]
    %v519 = vld [vmem:[#allocation2 + $0xda0] sm:$0xff]
    %v520 = vld [vmem:[#allocation2 + $0xda8] sm:$0xff]
    %v521 = vld [vmem:[#allocation2 + $0xdb0] sm:$0xff]
    %v522 = vld [vmem:[#allocation2 + $0xdb8] sm:$0xff]
    %v523 = vld [vmem:[#allocation2 + $0xdc0] sm:$0xff]
    %v524 = vld [vmem:[#allocation2 + $0xdc8] sm:$0xff]
    %v525 = vld [vmem:[#allocation2 + $0xdd0] sm:$0xff]
    %v526 = vld [vmem:[#allocation2 + $0xdd8] sm:$0xff]
    %v527 = vld [vmem:[#allocation2 + $0xde0] sm:$0xff]
    %v528 = vld [vmem:[#allocation2 + $0xde8] sm:$0xff]
    %v529 = vld [vmem:[#allocation2 + $0xdf0] sm:$0xff]
    %v530 = vld [vmem:[#allocation2 + $0xdf8] sm:$0xff]
    %v531 = vld [vmem:[#allocation2 + $0xe00] sm:$0xff]
    %v532 = vld [vmem:[#allocation2 + $0xe08] sm:$0xff]
    %v533 = vld [vmem:[#allocation2 + $0xe10] sm:$0xff]
    %v534 = vld [vmem:[#allocation2 + $0xe18] sm:$0xff]
    %v535 = vld [vmem:[#allocation2 + $0xe20] sm:$0xff]
    %v536 = vld [vmem:[#allocation2 + $0xe28] sm:$0xff]
    %v537 = vld [vmem:[#allocation2 + $0xe30] sm:$0xff]
    %v538 = vld [vmem:[#allocation2 + $0xe38] sm:$0xff]
    %v539 = vld [vmem:[#allocation2 + $0xe40] sm:$0xff]
    %v540 = vld [vmem:[#allocation2 + $0xe48] sm:$0xff]
    %v541 = vld [vmem:[#allocation2 + $0xe50] sm:$0xff]
    %v542 = vld [vmem:[#allocation2 + $0xe58] sm:$0xff]
    %v543 = vld [vmem:[#allocation2 + $0xe60] sm:$0xff]
    %v544 = vld [vmem:[#allocation2 + $0xe68] sm:$0xff]
    %v545 = vld [vmem:[#allocation2 + $0xe70] sm:$0xff]
    %v546 = vld [vmem:[#allocation2 + $0xe78] sm:$0xff]
    %v547 = vld [vmem:[#allocation2 + $0xe80] sm:$0xff]
    %v548 = vld [vmem:[#allocation2 + $0xe88] sm:$0xff]
    %v549 = vld [vmem:[#allocation2 + $0xe90] sm:$0xff]
    %v550 = vld [vmem:[#allocation2 + $0xe98] sm:$0xff]
    %v551 = vld [vmem:[#allocation2 + $0xea0] sm:$0xff]
    %v552 = vld [vmem:[#allocation2 + $0xea8] sm:$0xff]
    %v553 = vld [vmem:[#allocation2 + $0xeb0] sm:$0xff]
    %v554 = vld [vmem:[#allocation2 + $0xeb8] sm:$0xff]
    %v555 = vld [vmem:[#allocation2 + $0xec0] sm:$0xff]
    %v556 = vld [vmem:[#allocation2 + $0xec8] sm:$0xff]
    %v557 = vld [vmem:[#allocation2 + $0xed0] sm:$0xff]
    %v558 = vld [vmem:[#allocation2 + $0xed8] sm:$0xff]
    %v559 = vld [vmem:[#allocation2 + $0xee0] sm:$0xff]
    %v560 = vld [vmem:[#allocation2 + $0xee8] sm:$0xff]
    %v561 = vld [vmem:[#allocation2 + $0xef0] sm:$0xff]
    %v562 = vld [vmem:[#allocation2 + $0xef8] sm:$0xff]
    %v563 = vld [vmem:[#allocation2 + $0xf00] sm:$0xff]
    %v564 = vld [vmem:[#allocation2 + $0xf08] sm:$0xff]
    %v565 = vld [vmem:[#allocation2 + $0xf10] sm:$0xff]
    %v566 = vld [vmem:[#allocation2 + $0xf18] sm:$0xff]
    %v567 = vld [vmem:[#allocation2 + $0xf20] sm:$0xff]
    %v568 = vld [vmem:[#allocation2 + $0xf28] sm:$0xff]
    %v569 = vld [vmem:[#allocation2 + $0xf30] sm:$0xff]
    %v570 = vld [vmem:[#allocation2 + $0xf38] sm:$0xff]
    %v571 = vld [vmem:[#allocation2 + $0xf40] sm:$0xff]
    %v572 = vld [vmem:[#allocation2 + $0xf48] sm:$0xff]
    %v573 = vld [vmem:[#allocation2 + $0xf50] sm:$0xff]
    %v574 = vld [vmem:[#allocation2 + $0xf58] sm:$0xff]
    %v575 = vld [vmem:[#allocation2 + $0xf60] sm:$0xff]
    %v576 = vld [vmem:[#allocation2 + $0xf68] sm:$0xff]
    %v577 = vld [vmem:[#allocation2 + $0xf70] sm:$0xff]
    %v578 = vld [vmem:[#allocation2 + $0xf78] sm:$0xff]
    %v579 = vld [vmem:[#allocation2 + $0xf80] sm:$0xff]
    %v580 = vld [vmem:[#allocation2 + $0xf88] sm:$0xff]
    %v581 = vld [vmem:[#allocation2 + $0xf90] sm:$0xff]
    %v582 = vld [vmem:[#allocation2 + $0xf98] sm:$0xff]
    %v583 = vld [vmem:[#allocation2 + $0xfa0] sm:$0xff]
    %v584 = vld [vmem:[#allocation2 + $0xfa8] sm:$0xff]
    %v585 = vld [vmem:[#allocation2 + $0xfb0] sm:$0xff]
    %v586 = vld [vmem:[#allocation2 + $0xfb8] sm:$0xff]
    %v587 = vld [vmem:[#allocation2 + $0xfc0] sm:$0xff]
    %v588 = vld [vmem:[#allocation2 + $0xfc8] sm:$0xff]
    %v589 = vld [vmem:[#allocation2 + $0xfd0] sm:$0xff]
    %v590 = vld [vmem:[#allocation2 + $0xfd8] sm:$0xff]
    %v591 = vld [vmem:[#allocation2 + $0xfe0] sm:$0xff]
    %v592 = vld [vmem:[#allocation2 + $0xfe8] sm:$0xff]
    %v593 = vld [vmem:[#allocation2 + $0xff0] sm:$0xff]
    %v594 = vld [vmem:[#allocation2 + $0xff8] sm:$0xff]
    %v595 = vld [vmem:[#allocation2 + $0x1000] sm:$0xff]
    %v596 = vld [vmem:[#allocation2 + $0x1008] sm:$0xff]
    %v597 = vld [vmem:[#allocation2 + $0x1010] sm:$0xff]
    %v598 = vld [vmem:[#allocation2 + $0x1018] sm:$0xff]
    %v599 = vld [vmem:[#allocation2 + $0x1020] sm:$0xff]
    %v600 = vld [vmem:[#allocation2 + $0x1028] sm:$0xff]
    %v601 = vld [vmem:[#allocation2 + $0x1030] sm:$0xff]
    %v602 = vld [vmem:[#allocation2 + $0x1038] sm:$0xff]
    %v603 = vld [vmem:[#allocation2 + $0x1040] sm:$0xff]
    %v604 = vld [vmem:[#allocation2 + $0x1048] sm:$0xff]
    %v605 = vld [vmem:[#allocation2 + $0x1050] sm:$0xff]
    %v606 = vld [vmem:[#allocation2 + $0x1058] sm:$0xff]
    %v607 = vld [vmem:[#allocation2 + $0x1060] sm:$0xff]
    %v608 = vld [vmem:[#allocation2 + $0x1068] sm:$0xff]
    %v609 = vld [vmem:[#allocation2 + $0x1070] sm:$0xff]
    %v610 = vld [vmem:[#allocation2 + $0x1078] sm:$0xff]
    %v611 = vld [vmem:[#allocation2 + $0x1080] sm:$0xff]
    %v612 = vld [vmem:[#allocation2 + $0x1088] sm:$0xff]
    %v613 = vld [vmem:[#allocation2 + $0x1090] sm:$0xff]
    %v614 = vld [vmem:[#allocation2 + $0x1098] sm:$0xff]
    %v615 = vld [vmem:[#allocation2 + $0x10a0] sm:$0xff]
    %v616 = vld [vmem:[#allocation2 + $0x10a8] sm:$0xff]
    %v617 = vld [vmem:[#allocation2 + $0x10b0] sm:$0xff]
    %v618 = vld [vmem:[#allocation2 + $0x10b8] sm:$0xff]
    %v619 = vld [vmem:[#allocation2 + $0x10c0] sm:$0xff]
    %v620 = vld [vmem:[#allocation2 + $0x10c8] sm:$0xff]
    %v621 = vld [vmem:[#allocation2 + $0x10d0] sm:$0xff]
    %v622 = vld [vmem:[#allocation2 + $0x10d8] sm:$0xff]
    %v623 = vld [vmem:[#allocation2 + $0x10e0] sm:$0xff]
    %v624 = vld [vmem:[#allocation2 + $0x10e8] sm:$0xff]
    %v625 = vld [vmem:[#allocation2 + $0x10f0] sm:$0xff]
    %v626 = vld [vmem:[#allocation2 + $0x10f8] sm:$0xff]
    %v627 = vld [vmem:[#allocation2 + $0x1100] sm:$0xff]
    %v628 = vld [vmem:[#allocation2 + $0x1108] sm:$0xff]
    %v629 = vld [vmem:[#allocation2 + $0x1110] sm:$0xff]
    %v630 = vld [vmem:[#allocation2 + $0x1118] sm:$0xff]
    %v631 = vld [vmem:[#allocation2 + $0x1120] sm:$0xff]
    %v632 = vld [vmem:[#allocation2 + $0x1128] sm:$0xff]
    %v633 = vld [vmem:[#allocation2 + $0x1130] sm:$0xff]
    %v634 = vld [vmem:[#allocation2 + $0x1138] sm:$0xff]
    %v635 = vld [vmem:[#allocation2 + $0x1140] sm:$0xff]
    %v636 = vld [vmem:[#allocation2 + $0x1148] sm:$0xff]
    %v637 = vld [vmem:[#allocation2 + $0x1150] sm:$0xff]
    %v638 = vld [vmem:[#allocation2 + $0x1158] sm:$0xff]
    %v639 = vld [vmem:[#allocation2 + $0x1160] sm:$0xff]
    %v640 = vld [vmem:[#allocation2 + $0x1168] sm:$0xff]
    %v641 = vld [vmem:[#allocation2 + $0x1170] sm:$0xff]
    %v642 = vld [vmem:[#allocation2 + $0x1178] sm:$0xff]
    %v643 = vld [vmem:[#allocation2 + $0x1180] sm:$0xff]
    %v644 = vld [vmem:[#allocation2 + $0x1188] sm:$0xff]
    %v645 = vld [vmem:[#allocation2 + $0x1190] sm:$0xff]
    %v646 = vld [vmem:[#allocation2 + $0x1198] sm:$0xff]
    %v647 = vld [vmem:[#allocation2 + $0x11a0] sm:$0xff]
    %v648 = vld [vmem:[#allocation2 + $0x11a8] sm:$0xff]
    %v649 = vld [vmem:[#allocation2 + $0x11b0] sm:$0xff]
    %v650 = vld [vmem:[#allocation2 + $0x11b8] sm:$0xff]
    %v651 = vld [vmem:[#allocation2 + $0x11c0] sm:$0xff]
    %v652 = vld [vmem:[#allocation2 + $0x11c8] sm:$0xff]
    %v653 = vld [vmem:[#allocation2 + $0x11d0] sm:$0xff]
    %v654 = vld [vmem:[#allocation2 + $0x11d8] sm:$0xff]
    %v655 = vld [vmem:[#allocation2 + $0x11e0] sm:$0xff]
    %v656 = vld [vmem:[#allocation2 + $0x11e8] sm:$0xff]
    %v657 = vld [vmem:[#allocation2 + $0x11f0] sm:$0xff]
    %v658 = vld [vmem:[#allocation2 + $0x11f8] sm:$0xff]
    %v659 = vld [vmem:[#allocation2 + $0x1200] sm:$0xff]
    %v660 = vld [vmem:[#allocation2 + $0x1208] sm:$0xff]
    %v661 = vld [vmem:[#allocation2 + $0x1210] sm:$0xff]
    %v662 = vld [vmem:[#allocation2 + $0x1218] sm:$0xff]
    %v663 = vld [vmem:[#allocation2 + $0x1220] sm:$0xff]
    %v664 = vld [vmem:[#allocation2 + $0x1228] sm:$0xff]
    %v665 = vld [vmem:[#allocation2 + $0x1230] sm:$0xff]
    %v666 = vld [vmem:[#allocation2 + $0x1238] sm:$0xff]
    %v667 = vld [vmem:[#allocation2 + $0x1240] sm:$0xff]
    %v668 = vld [vmem:[#allocation2 + $0x1248] sm:$0xff]
    %v669 = vld [vmem:[#allocation2 + $0x1250] sm:$0xff]
    %v670 = vld [vmem:[#allocation2 + $0x1258] sm:$0xff]
    %v671 = vld [vmem:[#allocation2 + $0x1260] sm:$0xff]
    %v672 = vld [vmem:[#allocation2 + $0x1268] sm:$0xff]
    %v673 = vld [vmem:[#allocation2 + $0x1270] sm:$0xff]
    %v674 = vld [vmem:[#allocation2 + $0x1278] sm:$0xff]
    %v675 = vld [vmem:[#allocation2 + $0x1280] sm:$0xff]
    %v676 = vld [vmem:[#allocation2 + $0x1288] sm:$0xff]
    %v677 = vld [vmem:[#allocation2 + $0x1290] sm:$0xff]
    %v678 = vld [vmem:[#allocation2 + $0x1298] sm:$0xff]
    %v679 = vld [vmem:[#allocation2 + $0x12a0] sm:$0xff]
    %v680 = vld [vmem:[#allocation2 + $0x12a8] sm:$0xff]
    %v681 = vld [vmem:[#allocation2 + $0x12b0] sm:$0xff]
    %v682 = vld [vmem:[#allocation2 + $0x12b8] sm:$0xff]
    %v683 = vld [vmem:[#allocation2 + $0x12c0] sm:$0xff]
    %v684 = vld [vmem:[#allocation2 + $0x12c8] sm:$0xff]
    %v685 = vld [vmem:[#allocation2 + $0x12d0] sm:$0xff]
    %v686 = vld [vmem:[#allocation2 + $0x12d8] sm:$0xff]
    %v687 = vld [vmem:[#allocation2 + $0x12e0] sm:$0xff]
    %v688 = vld [vmem:[#allocation2 + $0x12e8] sm:$0xff]
    %v689 = vld [vmem:[#allocation2 + $0x12f0] sm:$0xff]
    %v690 = vld [vmem:[#allocation2 + $0x12f8] sm:$0xff]
    %v691 = vld [vmem:[#allocation2 + $0x1300] sm:$0xff]
    %v692 = vld [vmem:[#allocation2 + $0x1308] sm:$0xff]
    %v693 = vld [vmem:[#allocation2 + $0x1310] sm:$0xff]
    %v694 = vld [vmem:[#allocation2 + $0x1318] sm:$0xff]
    %v695 = vld [vmem:[#allocation2 + $0x1320] sm:$0xff]
    %v696 = vld [vmem:[#allocation2 + $0x1328] sm:$0xff]
    %v697 = vld [vmem:[#allocation2 + $0x1330] sm:$0xff]
    %v698 = vld [vmem:[#allocation2 + $0x1338] sm:$0xff]
    %v699 = vld [vmem:[#allocation2 + $0x1340] sm:$0xff]
    %v700 = vld [vmem:[#allocation2 + $0x1348] sm:$0xff]
    %v701 = vld [vmem:[#allocation2 + $0x1350] sm:$0xff]
    %v702 = vld [vmem:[#allocation2 + $0x1358] sm:$0xff]
    %v703 = vld [vmem:[#allocation2 + $0x1360] sm:$0xff]
    %v704 = vld [vmem:[#allocation2 + $0x1368] sm:$0xff]
    %v705 = vld [vmem:[#allocation2 + $0x1370] sm:$0xff]
    %v706 = vld [vmem:[#allocation2 + $0x1378] sm:$0xff]
    %v707 = vld [vmem:[#allocation2 + $0x1380] sm:$0xff]
    %v708 = vld [vmem:[#allocation2 + $0x1388] sm:$0xff]
    %v709 = vld [vmem:[#allocation2 + $0x1390] sm:$0xff]
    %v710 = vld [vmem:[#allocation2 + $0x1398] sm:$0xff]
    %v711 = vld [vmem:[#allocation2 + $0x13a0] sm:$0xff]
    %v712 = vld [vmem:[#allocation2 + $0x13a8] sm:$0xff]
    %v713 = vld [vmem:[#allocation2 + $0x13b0] sm:$0xff]
    %v714 = vld [vmem:[#allocation2 + $0x13b8] sm:$0xff]
    %v715 = vld [vmem:[#allocation2 + $0x13c0] sm:$0xff]
    %v716 = vld [vmem:[#allocation2 + $0x13c8] sm:$0xff]
    %v717 = vld [vmem:[#allocation2 + $0x13d0] sm:$0xff]
    %v718 = vld [vmem:[#allocation2 + $0x13d8] sm:$0xff]
    %v719 = vld [vmem:[#allocation2 + $0x13e0] sm:$0xff]
    %v720 = vld [vmem:[#allocation2 + $0x13e8] sm:$0xff]
    %v721 = vld [vmem:[#allocation2 + $0x13f0] sm:$0xff]
    %v722 = vld [vmem:[#allocation2 + $0x13f8] sm:$0xff]
    %v723 = vld [vmem:[#allocation2 + $0x1400] sm:$0xff]
    %v724 = vld [vmem:[#allocation2 + $0x1408] sm:$0xff]
    %v725 = vld [vmem:[#allocation2 + $0x1410] sm:$0xff]
    %v726 = vld [vmem:[#allocation2 + $0x1418] sm:$0xff]
    %v727 = vld [vmem:[#allocation2 + $0x1420] sm:$0xff]
    %v728 = vld [vmem:[#allocation2 + $0x1428] sm:$0xff]
    %v729 = vld [vmem:[#allocation2 + $0x1430] sm:$0xff]
    %v730 = vld [vmem:[#allocation2 + $0x1438] sm:$0xff]
    %v731 = vld [vmem:[#allocation2 + $0x1440] sm:$0xff]
    %v732 = vld [vmem:[#allocation2 + $0x1448] sm:$0xff]
    %v733 = vld [vmem:[#allocation2 + $0x1450] sm:$0xff]
    %v734 = vld [vmem:[#allocation2 + $0x1458] sm:$0xff]
    %v735 = vld [vmem:[#allocation2 + $0x1460] sm:$0xff]
    %v736 = vld [vmem:[#allocation2 + $0x1468] sm:$0xff]
    %v737 = vld [vmem:[#allocation2 + $0x1470] sm:$0xff]
    %v738 = vld [vmem:[#allocation2 + $0x1478] sm:$0xff]
    %v739 = vld [vmem:[#allocation2 + $0x1480] sm:$0xff]
    %v740 = vld [vmem:[#allocation2 + $0x1488] sm:$0xff]
    %v741 = vld [vmem:[#allocation2 + $0x1490] sm:$0xff]
    %v742 = vld [vmem:[#allocation2 + $0x1498] sm:$0xff]
    %v743 = vld [vmem:[#allocation2 + $0x14a0] sm:$0xff]
    %v744 = vld [vmem:[#allocation2 + $0x14a8] sm:$0xff]
    %v745 = vld [vmem:[#allocation2 + $0x14b0] sm:$0xff]
    %v746 = vld [vmem:[#allocation2 + $0x14b8] sm:$0xff]
    %v747 = vld [vmem:[#allocation2 + $0x14c0] sm:$0xff]
    %v748 = vld [vmem:[#allocation2 + $0x14c8] sm:$0xff]
    %v749 = vld [vmem:[#allocation2 + $0x14d0] sm:$0xff]
    %v750 = vld [vmem:[#allocation2 + $0x14d8] sm:$0xff]
    %v751 = vld [vmem:[#allocation2 + $0x14e0] sm:$0xff]
    %v752 = vld [vmem:[#allocation2 + $0x14e8] sm:$0xff]
    %v753 = vld [vmem:[#allocation2 + $0x14f0] sm:$0xff]
    %v754 = vld [vmem:[#allocation2 + $0x14f8] sm:$0xff]
    %v755 = vld [vmem:[#allocation2 + $0x1500] sm:$0xff]
    %v756 = vld [vmem:[#allocation2 + $0x1508] sm:$0xff]
    %v757 = vld [vmem:[#allocation2 + $0x1510] sm:$0xff]
    %v758 = vld [vmem:[#allocation2 + $0x1518] sm:$0xff]
    %v759 = vld [vmem:[#allocation2 + $0x1520] sm:$0xff]
    %v760 = vld [vmem:[#allocation2 + $0x1528] sm:$0xff]
    %v761 = vld [vmem:[#allocation2 + $0x1530] sm:$0xff]
    %v762 = vld [vmem:[#allocation2 + $0x1538] sm:$0xff]
    %v763 = vld [vmem:[#allocation2 + $0x1540] sm:$0xff]
    %v764 = vld [vmem:[#allocation2 + $0x1548] sm:$0xff]
    %v765 = vld [vmem:[#allocation2 + $0x1550] sm:$0xff]
    %v766 = vld [vmem:[#allocation2 + $0x1558] sm:$0xff]
    %v767 = vld [vmem:[#allocation2 + $0x1560] sm:$0xff]
    %v768 = vld [vmem:[#allocation2 + $0x1568] sm:$0xff]
    %v769 = vld [vmem:[#allocation2 + $0x1570] sm:$0xff]
    %v770 = vld [vmem:[#allocation2 + $0x1578] sm:$0xff]
    %v771 = vld [vmem:[#allocation2 + $0x1580] sm:$0xff]
    %v772 = vld [vmem:[#allocation2 + $0x1588] sm:$0xff]
    %v773 = vld [vmem:[#allocation2 + $0x1590] sm:$0xff]
    %v774 = vld [vmem:[#allocation2 + $0x1598] sm:$0xff]
    %v775 = vld [vmem:[#allocation2 + $0x15a0] sm:$0xff]
    %v776 = vld [vmem:[#allocation2 + $0x15a8] sm:$0xff]
    %v777 = vld [vmem:[#allocation2 + $0x15b0] sm:$0xff]
    %v778 = vld [vmem:[#allocation2 + $0x15b8] sm:$0xff]
    %v779 = vld [vmem:[#allocation2 + $0x15c0] sm:$0xff]
    %v780 = vld [vmem:[#allocation2 + $0x15c8] sm:$0xff]
    %v781 = vld [vmem:[#allocation2 + $0x15d0] sm:$0xff]
    %v782 = vld [vmem:[#allocation2 + $0x15d8] sm:$0xff]
    %v783 = vld [vmem:[#allocation2 + $0x15e0] sm:$0xff]
    %v784 = vld [vmem:[#allocation2 + $0x15e8] sm:$0xff]
    %v785 = vld [vmem:[#allocation2 + $0x15f0] sm:$0xff]
    %v786 = vld [vmem:[#allocation2 + $0x15f8] sm:$0xff]
    %v787 = vld [vmem:[#allocation2 + $0x1600] sm:$0xff]
    %v788 = vld [vmem:[#allocation2 + $0x1608] sm:$0xff]
    %v789 = vld [vmem:[#allocation2 + $0x1610] sm:$0xff]
    %v790 = vld [vmem:[#allocation2 + $0x1618] sm:$0xff]
    %v791 = vld [vmem:[#allocation2 + $0x1620] sm:$0xff]
    %v792 = vld [vmem:[#allocation2 + $0x1628] sm:$0xff]
    %v793 = vld [vmem:[#allocation2 + $0x1630] sm:$0xff]
    %v794 = vld [vmem:[#allocation2 + $0x1638] sm:$0xff]
    %v795 = vld [vmem:[#allocation2 + $0x1640] sm:$0xff]
    %v796 = vld [vmem:[#allocation2 + $0x1648] sm:$0xff]
    %v797 = vld [vmem:[#allocation2 + $0x1650] sm:$0xff]
    %v798 = vld [vmem:[#allocation2 + $0x1658] sm:$0xff]
    %v799 = vld [vmem:[#allocation2 + $0x1660] sm:$0xff]
    %v800 = vld [vmem:[#allocation2 + $0x1668] sm:$0xff]
    %v801 = vld [vmem:[#allocation2 + $0x1670] sm:$0xff]
    %v802 = vld [vmem:[#allocation2 + $0x1678] sm:$0xff]
    %v803 = vld [vmem:[#allocation2 + $0x1680] sm:$0xff]
    %v804 = vld [vmem:[#allocation2 + $0x1688] sm:$0xff]
    %v805 = vld [vmem:[#allocation2 + $0x1690] sm:$0xff]
    %v806 = vld [vmem:[#allocation2 + $0x1698] sm:$0xff]
    %v807 = vld [vmem:[#allocation2 + $0x16a0] sm:$0xff]
    %v808 = vld [vmem:[#allocation2 + $0x16a8] sm:$0xff]
    %v809 = vld [vmem:[#allocation2 + $0x16b0] sm:$0xff]
    %v810 = vld [vmem:[#allocation2 + $0x16b8] sm:$0xff]
    %v811 = vld [vmem:[#allocation2 + $0x16c0] sm:$0xff]
    %v812 = vld [vmem:[#allocation2 + $0x16c8] sm:$0xff]
    %v813 = vld [vmem:[#allocation2 + $0x16d0] sm:$0xff]
    %v814 = vld [vmem:[#allocation2 + $0x16d8] sm:$0xff]
    %v815 = vld [vmem:[#allocation2 + $0x16e0] sm:$0xff]
    %v816 = vld [vmem:[#allocation2 + $0x16e8] sm:$0xff]
    %v817 = vld [vmem:[#allocation2 + $0x16f0] sm:$0xff]
    %v818 = vld [vmem:[#allocation2 + $0x16f8] sm:$0xff]
    %v819 = vld [vmem:[#allocation2 + $0x1700] sm:$0xff]
    %v820 = vld [vmem:[#allocation2 + $0x1708] sm:$0xff]
    %v821 = vld [vmem:[#allocation2 + $0x1710] sm:$0xff]
    %v822 = vld [vmem:[#allocation2 + $0x1718] sm:$0xff]
    %v823 = vld [vmem:[#allocation2 + $0x1720] sm:$0xff]
    %v824 = vld [vmem:[#allocation2 + $0x1728] sm:$0xff]
    %v825 = vld [vmem:[#allocation2 + $0x1730] sm:$0xff]
    %v826 = vld [vmem:[#allocation2 + $0x1738] sm:$0xff]
    %v827 = vld [vmem:[#allocation2 + $0x1740] sm:$0xff]
    %v828 = vld [vmem:[#allocation2 + $0x1748] sm:$0xff]
    %v829 = vld [vmem:[#allocation2 + $0x1750] sm:$0xff]
    %v830 = vld [vmem:[#allocation2 + $0x1758] sm:$0xff]
    %v831 = vld [vmem:[#allocation2 + $0x1760] sm:$0xff]
    %v832 = vld [vmem:[#allocation2 + $0x1768] sm:$0xff]
    %v833 = vld [vmem:[#allocation2 + $0x1770] sm:$0xff]
    %v834 = vld [vmem:[#allocation2 + $0x1778] sm:$0xff]
    %v835 = vld [vmem:[#allocation2 + $0x1780] sm:$0xff]
    %v836 = vld [vmem:[#allocation2 + $0x1788] sm:$0xff]
    %v837 = vld [vmem:[#allocation2 + $0x1790] sm:$0xff]
    %v838 = vld [vmem:[#allocation2 + $0x1798] sm:$0xff]
    %v839 = vld [vmem:[#allocation2 + $0x17a0] sm:$0xff]
    %v840 = vld [vmem:[#allocation2 + $0x17a8] sm:$0xff]
    %v841 = vld [vmem:[#allocation2 + $0x17b0] sm:$0xff]
    %v842 = vld [vmem:[#allocation2 + $0x17b8] sm:$0xff]
    %v843 = vld [vmem:[#allocation2 + $0x17c0] sm:$0xff]
    %v844 = vld [vmem:[#allocation2 + $0x17c8] sm:$0xff]
    %v845 = vld [vmem:[#allocation2 + $0x17d0] sm:$0xff]
    %v846 = vld [vmem:[#allocation2 + $0x17d8] sm:$0xff]
    %v847 = vld [vmem:[#allocation2 + $0x17e0] sm:$0xff]
    %v848 = vld [vmem:[#allocation2 + $0x17e8] sm:$0xff]
    %v849 = vld [vmem:[#allocation2 + $0x17f0] sm:$0xff]
    %v850 = vld [vmem:[#allocation2 + $0x17f8] sm:$0xff]
    %v851 = vld [vmem:[#allocation2 + $0x1800] sm:$0xff]
    %v852 = vld [vmem:[#allocation2 + $0x1808] sm:$0xff]
    %v853 = vld [vmem:[#allocation2 + $0x1810] sm:$0xff]
    %v854 = vld [vmem:[#allocation2 + $0x1818] sm:$0xff]
    %v855 = vld [vmem:[#allocation2 + $0x1820] sm:$0xff]
    %v856 = vld [vmem:[#allocation2 + $0x1828] sm:$0xff]
    %v857 = vld [vmem:[#allocation2 + $0x1830] sm:$0xff]
    %v858 = vld [vmem:[#allocation2 + $0x1838] sm:$0xff]
    %v859 = vld [vmem:[#allocation2 + $0x1840] sm:$0xff]
    %v860 = vld [vmem:[#allocation2 + $0x1848] sm:$0xff]
    %v861 = vld [vmem:[#allocation2 + $0x1850] sm:$0xff]
    %v862 = vld [vmem:[#allocation2 + $0x1858] sm:$0xff]
    %v863 = vld [vmem:[#allocation2 + $0x1860] sm:$0xff]
    %v864 = vld [vmem:[#allocation2 + $0x1868] sm:$0xff]
    %v865 = vld [vmem:[#allocation2 + $0x1870] sm:$0xff]
    %v866 = vld [vmem:[#allocation2 + $0x1878] sm:$0xff]
    %v867 = vld [vmem:[#allocation2 + $0x1880] sm:$0xff]
    %v868 = vld [vmem:[#allocation2 + $0x1888] sm:$0xff]
    %v869 = vld [vmem:[#allocation2 + $0x1890] sm:$0xff]
    %v870 = vld [vmem:[#allocation2 + $0x1898] sm:$0xff]
    %v871 = vld [vmem:[#allocation2 + $0x18a0] sm:$0xff]
    %v872 = vld [vmem:[#allocation2 + $0x18a8] sm:$0xff]
    %v873 = vld [vmem:[#allocation2 + $0x18b0] sm:$0xff]
    %v874 = vld [vmem:[#allocation2 + $0x18b8] sm:$0xff]
    %v875 = vld [vmem:[#allocation2 + $0x18c0] sm:$0xff]
    %v876 = vld [vmem:[#allocation2 + $0x18c8] sm:$0xff]
    %v877 = vld [vmem:[#allocation2 + $0x18d0] sm:$0xff]
    %v878 = vld [vmem:[#allocation2 + $0x18d8] sm:$0xff]
    %v879 = vld [vmem:[#allocation2 + $0x18e0] sm:$0xff]
    %v880 = vld [vmem:[#allocation2 + $0x18e8] sm:$0xff]
    %v881 = vld [vmem:[#allocation2 + $0x18f0] sm:$0xff]
    %v882 = vld [vmem:[#allocation2 + $0x18f8] sm:$0xff]
    %v883 = vld [vmem:[#allocation2 + $0x1900] sm:$0xff]
    %v884 = vld [vmem:[#allocation2 + $0x1908] sm:$0xff]
    %v885 = vld [vmem:[#allocation2 + $0x1910] sm:$0xff]
    %v886 = vld [vmem:[#allocation2 + $0x1918] sm:$0xff]
    %v887 = vld [vmem:[#allocation2 + $0x1920] sm:$0xff]
    %v888 = vld [vmem:[#allocation2 + $0x1928] sm:$0xff]
    %v889 = vld [vmem:[#allocation2 + $0x1930] sm:$0xff]
    %v890 = vld [vmem:[#allocation2 + $0x1938] sm:$0xff]
    %v891 = vld [vmem:[#allocation2 + $0x1940] sm:$0xff]
    %v892 = vld [vmem:[#allocation2 + $0x1948] sm:$0xff]
    %v893 = vld [vmem:[#allocation2 + $0x1950] sm:$0xff]
    %v894 = vld [vmem:[#allocation2 + $0x1958] sm:$0xff]
    %v895 = vld [vmem:[#allocation2 + $0x1960] sm:$0xff]
    %v896 = vld [vmem:[#allocation2 + $0x1968] sm:$0xff]
    %v897 = vld [vmem:[#allocation2 + $0x1970] sm:$0xff]
    %v898 = vld [vmem:[#allocation2 + $0x1978] sm:$0xff]
    %v899 = vld [vmem:[#allocation2 + $0x1980] sm:$0xff]
    %v900 = vld [vmem:[#allocation2 + $0x1988] sm:$0xff]
    %v901 = vld [vmem:[#allocation2 + $0x1990] sm:$0xff]
    %v902 = vld [vmem:[#allocation2 + $0x1998] sm:$0xff]
    %v903 = vld [vmem:[#allocation2 + $0x19a0] sm:$0xff]
    %v904 = vld [vmem:[#allocation2 + $0x19a8] sm:$0xff]
    %v905 = vld [vmem:[#allocation2 + $0x19b0] sm:$0xff]
    %v906 = vld [vmem:[#allocation2 + $0x19b8] sm:$0xff]
    %v907 = vld [vmem:[#allocation2 + $0x19c0] sm:$0xff]
    %v908 = vld [vmem:[#allocation2 + $0x19c8] sm:$0xff]
    %v909 = vld [vmem:[#allocation2 + $0x19d0] sm:$0xff]
    %v910 = vld [vmem:[#allocation2 + $0x19d8] sm:$0xff]
    %v911 = vld [vmem:[#allocation2 + $0x19e0] sm:$0xff]
    %v912 = vld [vmem:[#allocation2 + $0x19e8] sm:$0xff]
    %v913 = vld [vmem:[#allocation2 + $0x19f0] sm:$0xff]
    %v914 = vld [vmem:[#allocation2 + $0x19f8] sm:$0xff]
    %v915 = vld [vmem:[#allocation2 + $0x1a00] sm:$0xff]
    %v916 = vld [vmem:[#allocation2 + $0x1a08] sm:$0xff]
    %v917 = vld [vmem:[#allocation2 + $0x1a10] sm:$0xff]
    %v918 = vld [vmem:[#allocation2 + $0x1a18] sm:$0xff]
    %v919 = vld [vmem:[#allocation2 + $0x1a20] sm:$0xff]
    %v920 = vld [vmem:[#allocation2 + $0x1a28] sm:$0xff]
    %v921 = vld [vmem:[#allocation2 + $0x1a30] sm:$0xff]
    %v922 = vld [vmem:[#allocation2 + $0x1a38] sm:$0xff]
    %v923 = vld [vmem:[#allocation2 + $0x1a40] sm:$0xff]
    %v924 = vld [vmem:[#allocation2 + $0x1a48] sm:$0xff]
    %v925 = vld [vmem:[#allocation2 + $0x1a50] sm:$0xff]
    %v926 = vld [vmem:[#allocation2 + $0x1a58] sm:$0xff]
    %v927 = vld [vmem:[#allocation2 + $0x1a60] sm:$0xff]
    %v928 = vld [vmem:[#allocation2 + $0x1a68] sm:$0xff]
    %v929 = vld [vmem:[#allocation2 + $0x1a70] sm:$0xff]
    %v930 = vld [vmem:[#allocation2 + $0x1a78] sm:$0xff]
    %v931 = vld [vmem:[#allocation2 + $0x1a80] sm:$0xff]
    %v932 = vld [vmem:[#allocation2 + $0x1a88] sm:$0xff]
    %v933 = vld [vmem:[#allocation2 + $0x1a90] sm:$0xff]
    %v934 = vld [vmem:[#allocation2 + $0x1a98] sm:$0xff]
    %v935 = vld [vmem:[#allocation2 + $0x1aa0] sm:$0xff]
    %v936 = vld [vmem:[#allocation2 + $0x1aa8] sm:$0xff]
    %v937 = vld [vmem:[#allocation2 + $0x1ab0] sm:$0xff]
    %v938 = vld [vmem:[#allocation2 + $0x1ab8] sm:$0xff]
    %v939 = vld [vmem:[#allocation2 + $0x1ac0] sm:$0xff]
    %v940 = vld [vmem:[#allocation2 + $0x1ac8] sm:$0xff]
    %v941 = vld [vmem:[#allocation2 + $0x1ad0] sm:$0xff]
    %v942 = vld [vmem:[#allocation2 + $0x1ad8] sm:$0xff]
    %v943 = vld [vmem:[#allocation2 + $0x1ae0] sm:$0xff]
    %v944 = vld [vmem:[#allocation2 + $0x1ae8] sm:$0xff]
    %v945 = vld [vmem:[#allocation2 + $0x1af0] sm:$0xff]
    %v946 = vld [vmem:[#allocation2 + $0x1af8] sm:$0xff]
    %v947 = vld [vmem:[#allocation2 + $0x1b00] sm:$0xff]
    %v948 = vld [vmem:[#allocation2 + $0x1b08] sm:$0xff]
    %v949 = vld [vmem:[#allocation2 + $0x1b10] sm:$0xff]
    %v950 = vld [vmem:[#allocation2 + $0x1b18] sm:$0xff]
    %v951 = vld [vmem:[#allocation2 + $0x1b20] sm:$0xff]
    %v952 = vld [vmem:[#allocation2 + $0x1b28] sm:$0xff]
    %v953 = vld [vmem:[#allocation2 + $0x1b30] sm:$0xff]
    %v954 = vld [vmem:[#allocation2 + $0x1b38] sm:$0xff]
    %v955 = vld [vmem:[#allocation2 + $0x1b40] sm:$0xff]
    %v956 = vld [vmem:[#allocation2 + $0x1b48] sm:$0xff]
    %v957 = vld [vmem:[#allocation2 + $0x1b50] sm:$0xff]
    %v958 = vld [vmem:[#allocation2 + $0x1b58] sm:$0xff]
    %v959 = vld [vmem:[#allocation2 + $0x1b60] sm:$0xff]
    %v960 = vld [vmem:[#allocation2 + $0x1b68] sm:$0xff]
    %v961 = vld [vmem:[#allocation2 + $0x1b70] sm:$0xff]
    %v962 = vld [vmem:[#allocation2 + $0x1b78] sm:$0xff]
    %v963 = vld [vmem:[#allocation2 + $0x1b80] sm:$0xff]
    %v964 = vld [vmem:[#allocation2 + $0x1b88] sm:$0xff]
    %v965 = vld [vmem:[#allocation2 + $0x1b90] sm:$0xff]
    %v966 = vld [vmem:[#allocation2 + $0x1b98] sm:$0xff]
    %v967 = vld [vmem:[#allocation2 + $0x1ba0] sm:$0xff]
    %v968 = vld [vmem:[#allocation2 + $0x1ba8] sm:$0xff]
    %v969 = vld [vmem:[#allocation2 + $0x1bb0] sm:$0xff]
    %v970 = vld [vmem:[#allocation2 + $0x1bb8] sm:$0xff]
    %v971 = vld [vmem:[#allocation2 + $0x1bc0] sm:$0xff]
    %v972 = vld [vmem:[#allocation2 + $0x1bc8] sm:$0xff]
    %v973 = vld [vmem:[#allocation2 + $0x1bd0] sm:$0xff]
    %v974 = vld [vmem:[#allocation2 + $0x1bd8] sm:$0xff]
    %v975 = vld [vmem:[#allocation2 + $0x1be0] sm:$0xff]
    %v976 = vld [vmem:[#allocation2 + $0x1be8] sm:$0xff]
    %v977 = vld [vmem:[#allocation2 + $0x1bf0] sm:$0xff]
    %v978 = vld [vmem:[#allocation2 + $0x1bf8] sm:$0xff]
    %v979 = vld [vmem:[#allocation2 + $0x1c00] sm:$0xff]
    %v980 = vld [vmem:[#allocation2 + $0x1c08] sm:$0xff]
    %v981 = vld [vmem:[#allocation2 + $0x1c10] sm:$0xff]
    %v982 = vld [vmem:[#allocation2 + $0x1c18] sm:$0xff]
    %v983 = vld [vmem:[#allocation2 + $0x1c20] sm:$0xff]
    %v984 = vld [vmem:[#allocation2 + $0x1c28] sm:$0xff]
    %v985 = vld [vmem:[#allocation2 + $0x1c30] sm:$0xff]
    %v986 = vld [vmem:[#allocation2 + $0x1c38] sm:$0xff]
    %v987 = vld [vmem:[#allocation2 + $0x1c40] sm:$0xff]
    %v988 = vld [vmem:[#allocation2 + $0x1c48] sm:$0xff]
    %v989 = vld [vmem:[#allocation2 + $0x1c50] sm:$0xff]
    %v990 = vld [vmem:[#allocation2 + $0x1c58] sm:$0xff]
    %v991 = vld [vmem:[#allocation2 + $0x1c60] sm:$0xff]
    %v992 = vld [vmem:[#allocation2 + $0x1c68] sm:$0xff]
    %v993 = vld [vmem:[#allocation2 + $0x1c70] sm:$0xff]
    %v994 = vld [vmem:[#allocation2 + $0x1c78] sm:$0xff]
    %v995 = vld [vmem:[#allocation2 + $0x1c80] sm:$0xff]
    %v996 = vld [vmem:[#allocation2 + $0x1c88] sm:$0xff]
    %v997 = vld [vmem:[#allocation2 + $0x1c90] sm:$0xff]
    %v998 = vld [vmem:[#allocation2 + $0x1c98] sm:$0xff]
    %v999 = vld [vmem:[#allocation2 + $0x1ca0] sm:$0xff]
    %v1000 = vld [vmem:[#allocation2 + $0x1ca8] sm:$0xff]
    %v1001 = vld [vmem:[#allocation2 + $0x1cb0] sm:$0xff]
    %v1002 = vld [vmem:[#allocation2 + $0x1cb8] sm:$0xff]
    %v1003 = vld [vmem:[#allocation2 + $0x1cc0] sm:$0xff]
    %v1004 = vld [vmem:[#allocation2 + $0x1cc8] sm:$0xff]
    %v1005 = vld [vmem:[#allocation2 + $0x1cd0] sm:$0xff]
    %v1006 = vld [vmem:[#allocation2 + $0x1cd8] sm:$0xff]
    %v1007 = vld [vmem:[#allocation2 + $0x1ce0] sm:$0xff]
    %v1008 = vld [vmem:[#allocation2 + $0x1ce8] sm:$0xff]
    %v1009 = vld [vmem:[#allocation2 + $0x1cf0] sm:$0xff]
    %v1010 = vld [vmem:[#allocation2 + $0x1cf8] sm:$0xff]
    %v1011 = vld [vmem:[#allocation2 + $0x1d00] sm:$0xff]
    %v1012 = vld [vmem:[#allocation2 + $0x1d08] sm:$0xff]
    %v1013 = vld [vmem:[#allocation2 + $0x1d10] sm:$0xff]
    %v1014 = vld [vmem:[#allocation2 + $0x1d18] sm:$0xff]
    %v1015 = vld [vmem:[#allocation2 + $0x1d20] sm:$0xff]
    %v1016 = vld [vmem:[#allocation2 + $0x1d28] sm:$0xff]
    %v1017 = vld [vmem:[#allocation2 + $0x1d30] sm:$0xff]
    %v1018 = vld [vmem:[#allocation2 + $0x1d38] sm:$0xff]
    %v1019 = vld [vmem:[#allocation2 + $0x1d40] sm:$0xff]
    %v1020 = vld [vmem:[#allocation2 + $0x1d48] sm:$0xff]
    %v1021 = vld [vmem:[#allocation2 + $0x1d50] sm:$0xff]
    %v1022 = vld [vmem:[#allocation2 + $0x1d58] sm:$0xff]
    %v1023 = vld [vmem:[#allocation2 + $0x1d60] sm:$0xff]
    %v1024 = vld [vmem:[#allocation2 + $0x1d68] sm:$0xff]
    %v1025 = vld [vmem:[#allocation2 + $0x1d70] sm:$0xff]
    %v1026 = vld [vmem:[#allocation2 + $0x1d78] sm:$0xff]
    %v1027 = vld [vmem:[#allocation2 + $0x1d80] sm:$0xff]
    %v1028 = vld [vmem:[#allocation2 + $0x1d88] sm:$0xff]
    %v1029 = vld [vmem:[#allocation2 + $0x1d90] sm:$0xff]
    %v1030 = vld [vmem:[#allocation2 + $0x1d98] sm:$0xff]
    %v1031 = vld [vmem:[#allocation2 + $0x1da0] sm:$0xff]
    %v1032 = vld [vmem:[#allocation2 + $0x1da8] sm:$0xff]
    %v1033 = vld [vmem:[#allocation2 + $0x1db0] sm:$0xff]
    %v1034 = vld [vmem:[#allocation2 + $0x1db8] sm:$0xff]
    %v1035 = vld [vmem:[#allocation2 + $0x1dc0] sm:$0xff]
    %v1036 = vld [vmem:[#allocation2 + $0x1dc8] sm:$0xff]
    %v1037 = vld [vmem:[#allocation2 + $0x1dd0] sm:$0xff]
    %v1038 = vld [vmem:[#allocation2 + $0x1dd8] sm:$0xff]
    %v1039 = vld [vmem:[#allocation2 + $0x1de0] sm:$0xff]
    %v1040 = vld [vmem:[#allocation2 + $0x1de8] sm:$0xff]
    %v1041 = vld [vmem:[#allocation2 + $0x1df0] sm:$0xff]
    %v1042 = vld [vmem:[#allocation2 + $0x1df8] sm:$0xff]
    %v1043 = vld [vmem:[#allocation2 + $0x1e00] sm:$0xff]
    %v1044 = vld [vmem:[#allocation2 + $0x1e08] sm:$0xff]
    %v1045 = vld [vmem:[#allocation2 + $0x1e10] sm:$0xff]
    %v1046 = vld [vmem:[#allocation2 + $0x1e18] sm:$0xff]
    %v1047 = vld [vmem:[#allocation2 + $0x1e20] sm:$0xff]
    %v1048 = vld [vmem:[#allocation2 + $0x1e28] sm:$0xff]
    %v1049 = vld [vmem:[#allocation2 + $0x1e30] sm:$0xff]
    %v1050 = vld [vmem:[#allocation2 + $0x1e38] sm:$0xff]
    %v1051 = vld [vmem:[#allocation2 + $0x1e40] sm:$0xff]
    %v1052 = vld [vmem:[#allocation2 + $0x1e48] sm:$0xff]
    %v1053 = vld [vmem:[#allocation2 + $0x1e50] sm:$0xff]
    %v1054 = vld [vmem:[#allocation2 + $0x1e58] sm:$0xff]
    %v1055 = vld [vmem:[#allocation2 + $0x1e60] sm:$0xff]
    %v1056 = vld [vmem:[#allocation2 + $0x1e68] sm:$0xff]
    %v1057 = vld [vmem:[#allocation2 + $0x1e70] sm:$0xff]
    %v1058 = vld [vmem:[#allocation2 + $0x1e78] sm:$0xff]
    %v1059 = vld [vmem:[#allocation2 + $0x1e80] sm:$0xff]
    %v1060 = vld [vmem:[#allocation2 + $0x1e88] sm:$0xff]
    %v1061 = vld [vmem:[#allocation2 + $0x1e90] sm:$0xff]
    %v1062 = vld [vmem:[#allocation2 + $0x1e98] sm:$0xff]
    %v1063 = vld [vmem:[#allocation2 + $0x1ea0] sm:$0xff]
    %v1064 = vld [vmem:[#allocation2 + $0x1ea8] sm:$0xff]
    %v1065 = vld [vmem:[#allocation2 + $0x1eb0] sm:$0xff]
    %v1066 = vld [vmem:[#allocation2 + $0x1eb8] sm:$0xff]
    %v1067 = vld [vmem:[#allocation2 + $0x1ec0] sm:$0xff]
    %v1068 = vld [vmem:[#allocation2 + $0x1ec8] sm:$0xff]
    %v1069 = vld [vmem:[#allocation2 + $0x1ed0] sm:$0xff]
    %v1070 = vld [vmem:[#allocation2 + $0x1ed8] sm:$0xff]
    %v1071 = vld [vmem:[#allocation2 + $0x1ee0] sm:$0xff]
    %v1072 = vld [vmem:[#allocation2 + $0x1ee8] sm:$0xff]
    %v1073 = vld [vmem:[#allocation2 + $0x1ef0] sm:$0xff]
    %v1074 = vld [vmem:[#allocation2 + $0x1ef8] sm:$0xff]
    %v1075 = vld [vmem:[#allocation2 + $0x1f00] sm:$0xff]
    %v1076 = vld [vmem:[#allocation2 + $0x1f08] sm:$0xff]
    %v1077 = vld [vmem:[#allocation2 + $0x1f10] sm:$0xff]
    %v1078 = vld [vmem:[#allocation2 + $0x1f18] sm:$0xff]
    %v1079 = vld [vmem:[#allocation2 + $0x1f20] sm:$0xff]
    %v1080 = vld [vmem:[#allocation2 + $0x1f28] sm:$0xff]
    %v1081 = vld [vmem:[#allocation2 + $0x1f30] sm:$0xff]
    %v1082 = vld [vmem:[#allocation2 + $0x1f38] sm:$0xff]
    %v1083 = vld [vmem:[#allocation2 + $0x1f40] sm:$0xff]
    %v1084 = vld [vmem:[#allocation2 + $0x1f48] sm:$0xff]
    %v1085 = vld [vmem:[#allocation2 + $0x1f50] sm:$0xff]
    %v1086 = vld [vmem:[#allocation2 + $0x1f58] sm:$0xff]
    %v1087 = vld [vmem:[#allocation2 + $0x1f60] sm:$0xff]
    %v1088 = vld [vmem:[#allocation2 + $0x1f68] sm:$0xff]
    %v1089 = vld [vmem:[#allocation2 + $0x1f70] sm:$0xff]
    %v1090 = vld [vmem:[#allocation2 + $0x1f78] sm:$0xff]
    %v1091 = vld [vmem:[#allocation2 + $0x1f80] sm:$0xff]
    %v1092 = vld [vmem:[#allocation2 + $0x1f88] sm:$0xff]
    %v1093 = vld [vmem:[#allocation2 + $0x1f90] sm:$0xff]
    %v1094 = vld [vmem:[#allocation2 + $0x1f98] sm:$0xff]
    %v1095 = vld [vmem:[#allocation2 + $0x1fa0] sm:$0xff]
    %v1096 = vld [vmem:[#allocation2 + $0x1fa8] sm:$0xff]
    %v1097 = vld [vmem:[#allocation2 + $0x1fb0] sm:$0xff]
    %v1098 = vld [vmem:[#allocation2 + $0x1fb8] sm:$0xff]
    %v1099 = vld [vmem:[#allocation2 + $0x1fc0] sm:$0xff]
    %v1100 = vld [vmem:[#allocation2 + $0x1fc8] sm:$0xff]
    %v1101 = vld [vmem:[#allocation2 + $0x1fd0] sm:$0xff]
    %v1102 = vld [vmem:[#allocation2 + $0x1fd8] sm:$0xff]
    %v1103 = vld [vmem:[#allocation2 + $0x1fe0] sm:$0xff]
    %v1104 = vld [vmem:[#allocation2 + $0x1fe8] sm:$0xff]
    %v1105 = vld [vmem:[#allocation2 + $0x1ff0] sm:$0xff]
    %v1106 = vld [vmem:[#allocation2 + $0x1ff8] sm:$0xff]
    %v1107 = vld [vmem:[#allocation2 + $0x2000] sm:$0xff]
    %v1108 = vld [vmem:[#allocation2 + $0x2008] sm:$0xff]
    %v1109 = vld [vmem:[#allocation2 + $0x2010] sm:$0xff]
    %v1110 = vld [vmem:[#allocation2 + $0x2018] sm:$0xff]
    %v1111 = vld [vmem:[#allocation2 + $0x2020] sm:$0xff]
    %v1112 = vld [vmem:[#allocation2 + $0x2028] sm:$0xff]
    %v1113 = vld [vmem:[#allocation2 + $0x2030] sm:$0xff]
    %v1114 = vld [vmem:[#allocation2 + $0x2038] sm:$0xff]
    %v1115 = vld [vmem:[#allocation2 + $0x2040] sm:$0xff]
    %v1116 = vld [vmem:[#allocation2 + $0x2048] sm:$0xff]
    %v1117 = vld [vmem:[#allocation2 + $0x2050] sm:$0xff]
    %v1118 = vld [vmem:[#allocation2 + $0x2058] sm:$0xff]
    %v1119 = vld [vmem:[#allocation2 + $0x2060] sm:$0xff]
    %v1120 = vld [vmem:[#allocation2 + $0x2068] sm:$0xff]
    %v1121 = vld [vmem:[#allocation2 + $0x2070] sm:$0xff]
    %v1122 = vld [vmem:[#allocation2 + $0x2078] sm:$0xff]
    %v1123 = vld [vmem:[#allocation2 + $0x2080] sm:$0xff]
    %v1124 = vld [vmem:[#allocation2 + $0x2088] sm:$0xff]
    %v1125 = vld [vmem:[#allocation2 + $0x2090] sm:$0xff]
    %v1126 = vld [vmem:[#allocation2 + $0x2098] sm:$0xff]
    %v1127 = vld [vmem:[#allocation2 + $0x20a0] sm:$0xff]
    %v1128 = vld [vmem:[#allocation2 + $0x20a8] sm:$0xff]
    %v1129 = vld [vmem:[#allocation2 + $0x20b0] sm:$0xff]
    %v1130 = vld [vmem:[#allocation2 + $0x20b8] sm:$0xff]
    %v1131 = vld [vmem:[#allocation2 + $0x20c0] sm:$0xff]
    %v1132 = vld [vmem:[#allocation2 + $0x20c8] sm:$0xff]
    %v1133 = vld [vmem:[#allocation2 + $0x20d0] sm:$0xff]
    %v1134 = vld [vmem:[#allocation2 + $0x20d8] sm:$0xff]
    %v1135 = vld [vmem:[#allocation2 + $0x20e0] sm:$0xff]
    %v1136 = vld [vmem:[#allocation2 + $0x20e8] sm:$0xff]
    %v1137 = vld [vmem:[#allocation2 + $0x20f0] sm:$0xff]
    %v1138 = vld [vmem:[#allocation2 + $0x20f8] sm:$0xff]
    %v1139 = vld [vmem:[#allocation2 + $0x2100] sm:$0xff]
    %v1140 = vld [vmem:[#allocation2 + $0x2108] sm:$0xff]
    %v1141 = vld [vmem:[#allocation2 + $0x2110] sm:$0xff]
    %v1142 = vld [vmem:[#allocation2 + $0x2118] sm:$0xff]
    %v1143 = vld [vmem:[#allocation2 + $0x2120] sm:$0xff]
    %v1144 = vld [vmem:[#allocation2 + $0x2128] sm:$0xff]
    %v1145 = vld [vmem:[#allocation2 + $0x2130] sm:$0xff]
    %v1146 = vld [vmem:[#allocation2 + $0x2138] sm:$0xff]
    %v1147 = vld [vmem:[#allocation2 + $0x2140] sm:$0xff]
    %v1148 = vld [vmem:[#allocation2 + $0x2148] sm:$0xff]
    %v1149 = vld [vmem:[#allocation2 + $0x2150] sm:$0xff]
    %v1150 = vld [vmem:[#allocation2 + $0x2158] sm:$0xff]
    %v1151 = vld [vmem:[#allocation2 + $0x2160] sm:$0xff]
    %v1152 = vld [vmem:[#allocation2 + $0x2168] sm:$0xff]
    %v1153 = vld [vmem:[#allocation2 + $0x2170] sm:$0xff]
    %v1154 = vld [vmem:[#allocation2 + $0x2178] sm:$0xff]
    %v1155 = vld [vmem:[#allocation2 + $0x2180] sm:$0xff]
    %v1156 = vld [vmem:[#allocation2 + $0x2188] sm:$0xff]
    %v1157 = vld [vmem:[#allocation2 + $0x2190] sm:$0xff]
    %v1158 = vld [vmem:[#allocation2 + $0x2198] sm:$0xff]
    %v1159 = vld [vmem:[#allocation2 + $0x21a0] sm:$0xff]
    %v1160 = vld [vmem:[#allocation2 + $0x21a8] sm:$0xff]
    %v1161 = vld [vmem:[#allocation2 + $0x21b0] sm:$0xff]
    %v1162 = vld [vmem:[#allocation2 + $0x21b8] sm:$0xff]
    %v1163 = vld [vmem:[#allocation2 + $0x21c0] sm:$0xff]
    %v1164 = vld [vmem:[#allocation2 + $0x21c8] sm:$0xff]
    %v1165 = vld [vmem:[#allocation2 + $0x21d0] sm:$0xff]
    %v1166 = vld [vmem:[#allocation2 + $0x21d8] sm:$0xff]
    %v1167 = vld [vmem:[#allocation2 + $0x21e0] sm:$0xff]
    %v1168 = vld [vmem:[#allocation2 + $0x21e8] sm:$0xff]
    %v1169 = vld [vmem:[#allocation2 + $0x21f0] sm:$0xff]
    %v1170 = vld [vmem:[#allocation2 + $0x21f8] sm:$0xff]
    %v1171 = vld [vmem:[#allocation2 + $0x2200] sm:$0xff]
    %v1172 = vld [vmem:[#allocation2 + $0x2208] sm:$0xff]
    %v1173 = vld [vmem:[#allocation2 + $0x2210] sm:$0xff]
    %v1174 = vld [vmem:[#allocation2 + $0x2218] sm:$0xff]
    %v1175 = vld [vmem:[#allocation2 + $0x2220] sm:$0xff]
    %v1176 = vld [vmem:[#allocation2 + $0x2228] sm:$0xff]
    %v1177 = vld [vmem:[#allocation2 + $0x2230] sm:$0xff]
    %v1178 = vld [vmem:[#allocation2 + $0x2238] sm:$0xff]
    %v1179 = vld [vmem:[#allocation2 + $0x2240] sm:$0xff]
    %v1180 = vld [vmem:[#allocation2 + $0x2248] sm:$0xff]
    %v1181 = vld [vmem:[#allocation2 + $0x2250] sm:$0xff]
    %v1182 = vld [vmem:[#allocation2 + $0x2258] sm:$0xff]
    %v1183 = vld [vmem:[#allocation2 + $0x2260] sm:$0xff]
    %v1184 = vld [vmem:[#allocation2 + $0x2268] sm:$0xff]
    %v1185 = vld [vmem:[#allocation2 + $0x2270] sm:$0xff]
    %v1186 = vld [vmem:[#allocation2 + $0x2278] sm:$0xff]
    %v1187 = vld [vmem:[#allocation2 + $0x2280] sm:$0xff]
    %v1188 = vld [vmem:[#allocation2 + $0x2288] sm:$0xff]
    %v1189 = vld [vmem:[#allocation2 + $0x2290] sm:$0xff]
    %v1190 = vld [vmem:[#allocation2 + $0x2298] sm:$0xff]
    %v1191 = vld [vmem:[#allocation2 + $0x22a0] sm:$0xff]
    %v1192 = vld [vmem:[#allocation2 + $0x22a8] sm:$0xff]
    %v1193 = vld [vmem:[#allocation2 + $0x22b0] sm:$0xff]
    %v1194 = vld [vmem:[#allocation2 + $0x22b8] sm:$0xff]
    %v1195 = vld [vmem:[#allocation2 + $0x22c0] sm:$0xff]
    %v1196 = vld [vmem:[#allocation2 + $0x22c8] sm:$0xff]
    %v1197 = vld [vmem:[#allocation2 + $0x22d0] sm:$0xff]
    %v1198 = vld [vmem:[#allocation2 + $0x22d8] sm:$0xff]
    %v1199 = vld [vmem:[#allocation2 + $0x22e0] sm:$0xff]
    %v1200 = vld [vmem:[#allocation2 + $0x22e8] sm:$0xff]
    %v1201 = vld [vmem:[#allocation2 + $0x22f0] sm:$0xff]
    %v1202 = vld [vmem:[#allocation2 + $0x22f8] sm:$0xff]
    %v1203 = vld [vmem:[#allocation2 + $0x2300] sm:$0xff]
    %v1204 = vld [vmem:[#allocation2 + $0x2308] sm:$0xff]
    %v1205 = vld [vmem:[#allocation2 + $0x2310] sm:$0xff]
    %v1206 = vld [vmem:[#allocation2 + $0x2318] sm:$0xff]
    %v1207 = vld [vmem:[#allocation2 + $0x2320] sm:$0xff]
    %v1208 = vld [vmem:[#allocation2 + $0x2328] sm:$0xff]
    %v1209 = vld [vmem:[#allocation2 + $0x2330] sm:$0xff]
    %v1210 = vld [vmem:[#allocation2 + $0x2338] sm:$0xff]
    %v1211 = vld [vmem:[#allocation2 + $0x2340] sm:$0xff]
    %v1212 = vld [vmem:[#allocation2 + $0x2348] sm:$0xff]
    %v1213 = vld [vmem:[#allocation2 + $0x2350] sm:$0xff]
    %v1214 = vld [vmem:[#allocation2 + $0x2358] sm:$0xff]
    %v1215 = vld [vmem:[#allocation2 + $0x2360] sm:$0xff]
    %v1216 = vld [vmem:[#allocation2 + $0x2368] sm:$0xff]
    %v1217 = vld [vmem:[#allocation2 + $0x2370] sm:$0xff]
    %v1218 = vld [vmem:[#allocation2 + $0x2378] sm:$0xff]
    %v1219 = vld [vmem:[#allocation2 + $0x2380] sm:$0xff]
    %v1220 = vld [vmem:[#allocation2 + $0x2388] sm:$0xff]
    %v1221 = vld [vmem:[#allocation2 + $0x2390] sm:$0xff]
    %v1222 = vld [vmem:[#allocation2 + $0x2398] sm:$0xff]
    %v1223 = vld [vmem:[#allocation2 + $0x23a0] sm:$0xff]
    %v1224 = vld [vmem:[#allocation2 + $0x23a8] sm:$0xff]
    %v1225 = vld [vmem:[#allocation2 + $0x23b0] sm:$0xff]
    %v1226 = vld [vmem:[#allocation2 + $0x23b8] sm:$0xff]
    %v1227 = vld [vmem:[#allocation2 + $0x23c0] sm:$0xff]
    %v1228 = vld [vmem:[#allocation2 + $0x23c8] sm:$0xff]
    %v1229 = vld [vmem:[#allocation2 + $0x23d0] sm:$0xff]
    %v1230 = vld [vmem:[#allocation2 + $0x23d8] sm:$0xff]
    %v1231 = vld [vmem:[#allocation2 + $0x23e0] sm:$0xff]
    %v1232 = vld [vmem:[#allocation2 + $0x23e8] sm:$0xff]
    %v1233 = vld [vmem:[#allocation2 + $0x23f0] sm:$0xff]
    %v1234 = vld [vmem:[#allocation2 + $0x23f8] sm:$0xff]
    %v1235 = vld [vmem:[#allocation2 + $0x2400] sm:$0xff]
    %v1236 = vld [vmem:[#allocation2 + $0x2408] sm:$0xff]
    %v1237 = vld [vmem:[#allocation2 + $0x2410] sm:$0xff]
    %v1238 = vld [vmem:[#allocation2 + $0x2418] sm:$0xff]
    %v1239 = vld [vmem:[#allocation2 + $0x2420] sm:$0xff]
    %v1240 = vld [vmem:[#allocation2 + $0x2428] sm:$0xff]
    %v1241 = vld [vmem:[#allocation2 + $0x2430] sm:$0xff]
    %v1242 = vld [vmem:[#allocation2 + $0x2438] sm:$0xff]
    %v1243 = vld [vmem:[#allocation2 + $0x2440] sm:$0xff]
    %v1244 = vld [vmem:[#allocation2 + $0x2448] sm:$0xff]
    %v1245 = vld [vmem:[#allocation2 + $0x2450] sm:$0xff]
    %v1246 = vld [vmem:[#allocation2 + $0x2458] sm:$0xff]
    %v1247 = vld [vmem:[#allocation2 + $0x2460] sm:$0xff]
    %v1248 = vld [vmem:[#allocation2 + $0x2468] sm:$0xff]
    %v1249 = vld [vmem:[#allocation2 + $0x2470] sm:$0xff]
    %v1250 = vld [vmem:[#allocation2 + $0x2478] sm:$0xff]
    %v1251 = vld [vmem:[#allocation2 + $0x2480] sm:$0xff]
    %v1252 = vld [vmem:[#allocation2 + $0x2488] sm:$0xff]
    %v1253 = vld [vmem:[#allocation2 + $0x2490] sm:$0xff]
    %v1254 = vld [vmem:[#allocation2 + $0x2498] sm:$0xff]
    %v1255 = vld [vmem:[#allocation2 + $0x24a0] sm:$0xff]
    %v1256 = vld [vmem:[#allocation2 + $0x24a8] sm:$0xff]
    %v1257 = vld [vmem:[#allocation2 + $0x24b0] sm:$0xff]
    %v1258 = vld [vmem:[#allocation2 + $0x24b8] sm:$0xff]
    %v1259 = vld [vmem:[#allocation2 + $0x24c0] sm:$0xff]
    %v1260 = vld [vmem:[#allocation2 + $0x24c8] sm:$0xff]
    %v1261 = vld [vmem:[#allocation2 + $0x24d0] sm:$0xff]
    %v1262 = vld [vmem:[#allocation2 + $0x24d8] sm:$0xff]
    %v1263 = vld [vmem:[#allocation2 + $0x24e0] sm:$0xff]
    %v1264 = vld [vmem:[#allocation2 + $0x24e8] sm:$0xff]
    %v1265 = vld [vmem:[#allocation2 + $0x24f0] sm:$0xff]
    %v1266 = vld [vmem:[#allocation2 + $0x24f8] sm:$0xff]
    %v1267 = vld [vmem:[#allocation2 + $0x2500] sm:$0xff]
    %v1268 = vld [vmem:[#allocation2 + $0x2508] sm:$0xff]
    %v1269 = vld [vmem:[#allocation2 + $0x2510] sm:$0xff]
    %v1270 = vld [vmem:[#allocation2 + $0x2518] sm:$0xff]
    %v1271 = vld [vmem:[#allocation2 + $0x2520] sm:$0xff]
    %v1272 = vld [vmem:[#allocation2 + $0x2528] sm:$0xff]
    %v1273 = vld [vmem:[#allocation2 + $0x2530] sm:$0xff]
    %v1274 = vld [vmem:[#allocation2 + $0x2538] sm:$0xff]
    %v1275 = vld [vmem:[#allocation2 + $0x2540] sm:$0xff]
    %v1276 = vld [vmem:[#allocation2 + $0x2548] sm:$0xff]
    %v1277 = vld [vmem:[#allocation2 + $0x2550] sm:$0xff]
    %v1278 = vld [vmem:[#allocation2 + $0x2558] sm:$0xff]
    %v1279 = vld [vmem:[#allocation2 + $0x2560] sm:$0xff]
    %v1280 = vld [vmem:[#allocation2 + $0x2568] sm:$0xff]
    %v1281 = vld [vmem:[#allocation2 + $0x2570] sm:$0xff]
    %v1282 = vld [vmem:[#allocation2 + $0x2578] sm:$0xff]
    %v1283 = vld [vmem:[#allocation2 + $0x2580] sm:$0xff]
    %v1284 = vld [vmem:[#allocation2 + $0x2588] sm:$0xff]
    %v1285 = vld [vmem:[#allocation2 + $0x2590] sm:$0xff]
    %v1286 = vld [vmem:[#allocation2 + $0x2598] sm:$0xff]
    %v1287 = vld [vmem:[#allocation2 + $0x25a0] sm:$0xff]
    %v1288 = vld [vmem:[#allocation2 + $0x25a8] sm:$0xff]
    %v1289 = vld [vmem:[#allocation2 + $0x25b0] sm:$0xff]
    %v1290 = vld [vmem:[#allocation2 + $0x25b8] sm:$0xff]
    %v1291 = vld [vmem:[#allocation2 + $0x25c0] sm:$0xff]
    %v1292 = vld [vmem:[#allocation2 + $0x25c8] sm:$0xff]
    %v1293 = vld [vmem:[#allocation2 + $0x25d0] sm:$0xff]
    %v1294 = vld [vmem:[#allocation2 + $0x25d8] sm:$0xff]
    %v1295 = vld [vmem:[#allocation2 + $0x25e0] sm:$0xff]
    %v1296 = vld [vmem:[#allocation2 + $0x25e8] sm:$0xff]
    %v1297 = vld [vmem:[#allocation2 + $0x25f0] sm:$0xff]
    %v1298 = vld [vmem:[#allocation2 + $0x25f8] sm:$0xff]
    %v1299 = vld [vmem:[#allocation2 + $0x2600] sm:$0xff]
    %v1300 = vld [vmem:[#allocation2 + $0x2608] sm:$0xff]
    %v1301 = vld [vmem:[#allocation2 + $0x2610] sm:$0xff]
    %v1302 = vld [vmem:[#allocation2 + $0x2618] sm:$0xff]
    %v1303 = vld [vmem:[#allocation2 + $0x2620] sm:$0xff]
    %v1304 = vld [vmem:[#allocation2 + $0x2628] sm:$0xff]
    %v1305 = vld [vmem:[#allocation2 + $0x2630] sm:$0xff]
    %v1306 = vld [vmem:[#allocation2 + $0x2638] sm:$0xff]
    %v1307 = vld [vmem:[#allocation2 + $0x2640] sm:$0xff]
    %v1308 = vld [vmem:[#allocation2 + $0x2648] sm:$0xff]
    %v1309 = vld [vmem:[#allocation2 + $0x2650] sm:$0xff]
    %v1310 = vld [vmem:[#allocation2 + $0x2658] sm:$0xff]
    %v1311 = vld [vmem:[#allocation2 + $0x2660] sm:$0xff]
    %v1312 = vld [vmem:[#allocation2 + $0x2668] sm:$0xff]
    %v1313 = vld [vmem:[#allocation2 + $0x2670] sm:$0xff]
    %v1314 = vld [vmem:[#allocation2 + $0x2678] sm:$0xff]
    %v1315 = vld [vmem:[#allocation2 + $0x2680] sm:$0xff]
    %v1316 = vld [vmem:[#allocation2 + $0x2688] sm:$0xff]
    %v1317 = vld [vmem:[#allocation2 + $0x2690] sm:$0xff]
    %v1318 = vld [vmem:[#allocation2 + $0x2698] sm:$0xff]
    %v1319 = vld [vmem:[#allocation2 + $0x26a0] sm:$0xff]
    %v1320 = vld [vmem:[#allocation2 + $0x26a8] sm:$0xff]
    %v1321 = vld [vmem:[#allocation2 + $0x26b0] sm:$0xff]
    %v1322 = vld [vmem:[#allocation2 + $0x26b8] sm:$0xff]
    %v1323 = vld [vmem:[#allocation2 + $0x26c0] sm:$0xff]
    %v1324 = vld [vmem:[#allocation2 + $0x26c8] sm:$0xff]
    %v1325 = vld [vmem:[#allocation2 + $0x26d0] sm:$0xff]
    %v1326 = vld [vmem:[#allocation2 + $0x26d8] sm:$0xff]
    %v1327 = vld [vmem:[#allocation2 + $0x26e0] sm:$0xff]
    %v1328 = vld [vmem:[#allocation2 + $0x26e8] sm:$0xff]
    %v1329 = vld [vmem:[#allocation2 + $0x26f0] sm:$0xff]
    %v1330 = vld [vmem:[#allocation2 + $0x26f8] sm:$0xff]
    %v1331 = vld [vmem:[#allocation2 + $0x2700] sm:$0xff]
    %v1332 = vld [vmem:[#allocation2 + $0x2708] sm:$0xff]
    %v1333 = vld [vmem:[#allocation2 + $0x2710] sm:$0xff]
    %v1334 = vld [vmem:[#allocation2 + $0x2718] sm:$0xff]
    %v1335 = vld [vmem:[#allocation2 + $0x2720] sm:$0xff]
    %v1336 = vld [vmem:[#allocation2 + $0x2728] sm:$0xff]
    %v1337 = vld [vmem:[#allocation2 + $0x2730] sm:$0xff]
    %v1338 = vld [vmem:[#allocation2 + $0x2738] sm:$0xff]
    %v1339 = vld [vmem:[#allocation2 + $0x2740] sm:$0xff]
    %v1340 = vld [vmem:[#allocation2 + $0x2748] sm:$0xff]
    %v1341 = vld [vmem:[#allocation2 + $0x2750] sm:$0xff]
    %v1342 = vld [vmem:[#allocation2 + $0x2758] sm:$0xff]
    %v1343 = vld [vmem:[#allocation2 + $0x2760] sm:$0xff]
    %v1344 = vld [vmem:[#allocation2 + $0x2768] sm:$0xff]
    %v1345 = vld [vmem:[#allocation2 + $0x2770] sm:$0xff]
    %v1346 = vld [vmem:[#allocation2 + $0x2778] sm:$0xff]
    %v1347 = vld [vmem:[#allocation2 + $0x2780] sm:$0xff]
    %v1348 = vld [vmem:[#allocation2 + $0x2788] sm:$0xff]
    %v1349 = vld [vmem:[#allocation2 + $0x2790] sm:$0xff]
    %v1350 = vld [vmem:[#allocation2 + $0x2798] sm:$0xff]
    %v1351 = vld [vmem:[#allocation2 + $0x27a0] sm:$0xff]
    %v1352 = vld [vmem:[#allocation2 + $0x27a8] sm:$0xff]
    %v1353 = vld [vmem:[#allocation2 + $0x27b0] sm:$0xff]
    %v1354 = vld [vmem:[#allocation2 + $0x27b8] sm:$0xff]
    %v1355 = vld [vmem:[#allocation2 + $0x27c0] sm:$0xff]
    %v1356 = vld [vmem:[#allocation2 + $0x27c8] sm:$0xff]
    %v1357 = vld [vmem:[#allocation2 + $0x27d0] sm:$0xff]
    %v1358 = vld [vmem:[#allocation2 + $0x27d8] sm:$0xff]
    %v1359 = vld [vmem:[#allocation2 + $0x27e0] sm:$0xff]
    %v1360 = vld [vmem:[#allocation2 + $0x27e8] sm:$0xff]
    %v1361 = vld [vmem:[#allocation2 + $0x27f0] sm:$0xff]
    %v1362 = vld [vmem:[#allocation2 + $0x27f8] sm:$0xff]
    %v1363 = vld [vmem:[#allocation2 + $0x2800] sm:$0xff]
    %v1364 = vld [vmem:[#allocation2 + $0x2808] sm:$0xff]
    %v1365 = vld [vmem:[#allocation2 + $0x2810] sm:$0xff]
    %v1366 = vld [vmem:[#allocation2 + $0x2818] sm:$0xff]
    %v1367 = vld [vmem:[#allocation2 + $0x2820] sm:$0xff]
    %v1368 = vld [vmem:[#allocation2 + $0x2828] sm:$0xff]
    %v1369 = vld [vmem:[#allocation2 + $0x2830] sm:$0xff]
    %v1370 = vld [vmem:[#allocation2 + $0x2838] sm:$0xff]
    %v1371 = vld [vmem:[#allocation2 + $0x2840] sm:$0xff]
    %v1372 = vld [vmem:[#allocation2 + $0x2848] sm:$0xff]
    %v1373 = vld [vmem:[#allocation2 + $0x2850] sm:$0xff]
    %v1374 = vld [vmem:[#allocation2 + $0x2858] sm:$0xff]
    %v1375 = vld [vmem:[#allocation2 + $0x2860] sm:$0xff]
    %v1376 = vld [vmem:[#allocation2 + $0x2868] sm:$0xff]
    %v1377 = vld [vmem:[#allocation2 + $0x2870] sm:$0xff]
    %v1378 = vld [vmem:[#allocation2 + $0x2878] sm:$0xff]
    %v1379 = vld [vmem:[#allocation2 + $0x2880] sm:$0xff]
    %v1380 = vld [vmem:[#allocation2 + $0x2888] sm:$0xff]
    %v1381 = vld [vmem:[#allocation2 + $0x2890] sm:$0xff]
    %v1382 = vld [vmem:[#allocation2 + $0x2898] sm:$0xff]
    %v1383 = vld [vmem:[#allocation2 + $0x28a0] sm:$0xff]
    %v1384 = vld [vmem:[#allocation2 + $0x28a8] sm:$0xff]
    %v1385 = vld [vmem:[#allocation2 + $0x28b0] sm:$0xff]
    %v1386 = vld [vmem:[#allocation2 + $0x28b8] sm:$0xff]
    %v1387 = vld [vmem:[#allocation2 + $0x28c0] sm:$0xff]
    %v1388 = vld [vmem:[#allocation2 + $0x28c8] sm:$0xff]
    %v1389 = vld [vmem:[#allocation2 + $0x28d0] sm:$0xff]
    %v1390 = vld [vmem:[#allocation2 + $0x28d8] sm:$0xff]
    %v1391 = vld [vmem:[#allocation2 + $0x28e0] sm:$0xff]
    %v1392 = vld [vmem:[#allocation2 + $0x28e8] sm:$0xff]
    %v1393 = vld [vmem:[#allocation2 + $0x28f0] sm:$0xff]
    %v1394 = vld [vmem:[#allocation2 + $0x28f8] sm:$0xff]
    %v1395 = vld [vmem:[#allocation2 + $0x2900] sm:$0xff]
    %v1396 = vld [vmem:[#allocation2 + $0x2908] sm:$0xff]
    %v1397 = vld [vmem:[#allocation2 + $0x2910] sm:$0xff]
    %v1398 = vld [vmem:[#allocation2 + $0x2918] sm:$0xff]
    %v1399 = vld [vmem:[#allocation2 + $0x2920] sm:$0xff]
    %v1400 = vld [vmem:[#allocation2 + $0x2928] sm:$0xff]
    %v1401 = vld [vmem:[#allocation2 + $0x2930] sm:$0xff]
    %v1402 = vld [vmem:[#allocation2 + $0x2938] sm:$0xff]
    %v1403 = vld [vmem:[#allocation2 + $0x2940] sm:$0xff]
    %v1404 = vld [vmem:[#allocation2 + $0x2948] sm:$0xff]
    %v1405 = vld [vmem:[#allocation2 + $0x2950] sm:$0xff]
    %v1406 = vld [vmem:[#allocation2 + $0x2958] sm:$0xff]
    %v1407 = vld [vmem:[#allocation2 + $0x2960] sm:$0xff]
    %v1408 = vld [vmem:[#allocation2 + $0x2968] sm:$0xff]
    %v1409 = vld [vmem:[#allocation2 + $0x2970] sm:$0xff]
    %v1410 = vld [vmem:[#allocation2 + $0x2978] sm:$0xff]
    %v1411 = vld [vmem:[#allocation2 + $0x2980] sm:$0xff]
    %v1412 = vld [vmem:[#allocation2 + $0x2988] sm:$0xff]
    %v1413 = vld [vmem:[#allocation2 + $0x2990] sm:$0xff]
    %v1414 = vld [vmem:[#allocation2 + $0x2998] sm:$0xff]
    %v1415 = vld [vmem:[#allocation2 + $0x29a0] sm:$0xff]
    %v1416 = vld [vmem:[#allocation2 + $0x29a8] sm:$0xff]
    %v1417 = vld [vmem:[#allocation2 + $0x29b0] sm:$0xff]
    %v1418 = vld [vmem:[#allocation2 + $0x29b8] sm:$0xff]
    %v1419 = vld [vmem:[#allocation2 + $0x29c0] sm:$0xff]
    %v1420 = vld [vmem:[#allocation2 + $0x29c8] sm:$0xff]
    %v1421 = vld [vmem:[#allocation2 + $0x29d0] sm:$0xff]
    %v1422 = vld [vmem:[#allocation2 + $0x29d8] sm:$0xff]
    %v1423 = vld [vmem:[#allocation2 + $0x29e0] sm:$0xff]
    %v1424 = vld [vmem:[#allocation2 + $0x29e8] sm:$0xff]
    %v1425 = vld [vmem:[#allocation2 + $0x29f0] sm:$0xff]
    %v1426 = vld [vmem:[#allocation2 + $0x29f8] sm:$0xff]
    %v1427 = vld [vmem:[#allocation2 + $0x2a00] sm:$0xff]
    %v1428 = vld [vmem:[#allocation2 + $0x2a08] sm:$0xff]
    %v1429 = vld [vmem:[#allocation2 + $0x2a10] sm:$0xff]
    %v1430 = vld [vmem:[#allocation2 + $0x2a18] sm:$0xff]
    %v1431 = vld [vmem:[#allocation2 + $0x2a20] sm:$0xff]
    %v1432 = vld [vmem:[#allocation2 + $0x2a28] sm:$0xff]
    %v1433 = vld [vmem:[#allocation2 + $0x2a30] sm:$0xff]
    %v1434 = vld [vmem:[#allocation2 + $0x2a38] sm:$0xff]
    %v1435 = vld [vmem:[#allocation2 + $0x2a40] sm:$0xff]
    %v1436 = vld [vmem:[#allocation2 + $0x2a48] sm:$0xff]
    %v1437 = vld [vmem:[#allocation2 + $0x2a50] sm:$0xff]
    %v1438 = vld [vmem:[#allocation2 + $0x2a58] sm:$0xff]
    %v1439 = vld [vmem:[#allocation2 + $0x2a60] sm:$0xff]
    %v1440 = vld [vmem:[#allocation2 + $0x2a68] sm:$0xff]
    %v1441 = vld [vmem:[#allocation2 + $0x2a70] sm:$0xff]
    %v1442 = vld [vmem:[#allocation2 + $0x2a78] sm:$0xff]
    %v1443 = vld [vmem:[#allocation2 + $0x2a80] sm:$0xff]
    %v1444 = vld [vmem:[#allocation2 + $0x2a88] sm:$0xff]
    %v1445 = vld [vmem:[#allocation2 + $0x2a90] sm:$0xff]
    %v1446 = vld [vmem:[#allocation2 + $0x2a98] sm:$0xff]
    %v1447 = vld [vmem:[#allocation2 + $0x2aa0] sm:$0xff]
    %v1448 = vld [vmem:[#allocation2 + $0x2aa8] sm:$0xff]
    %v1449 = vld [vmem:[#allocation2 + $0x2ab0] sm:$0xff]
    %v1450 = vld [vmem:[#allocation2 + $0x2ab8] sm:$0xff]
    %v1451 = vld [vmem:[#allocation2 + $0x2ac0] sm:$0xff]
    %v1452 = vld [vmem:[#allocation2 + $0x2ac8] sm:$0xff]
    %v1453 = vld [vmem:[#allocation2 + $0x2ad0] sm:$0xff]
    %v1454 = vld [vmem:[#allocation2 + $0x2ad8] sm:$0xff]
    %v1455 = vld [vmem:[#allocation2 + $0x2ae0] sm:$0xff]
    %v1456 = vld [vmem:[#allocation2 + $0x2ae8] sm:$0xff]
    %v1457 = vld [vmem:[#allocation2 + $0x2af0] sm:$0xff]
    %v1458 = vld [vmem:[#allocation2 + $0x2af8] sm:$0xff]
    %v1459 = vld [vmem:[#allocation2 + $0x2b00] sm:$0xff]
    %v1460 = vld [vmem:[#allocation2 + $0x2b08] sm:$0xff]
    %v1461 = vld [vmem:[#allocation2 + $0x2b10] sm:$0xff]
    %v1462 = vld [vmem:[#allocation2 + $0x2b18] sm:$0xff]
    %v1463 = vld [vmem:[#allocation2 + $0x2b20] sm:$0xff]
    %v1464 = vld [vmem:[#allocation2 + $0x2b28] sm:$0xff]
    %v1465 = vld [vmem:[#allocation2 + $0x2b30] sm:$0xff]
    %v1466 = vld [vmem:[#allocation2 + $0x2b38] sm:$0xff]
    %v1467 = vld [vmem:[#allocation2 + $0x2b40] sm:$0xff]
    %v1468 = vld [vmem:[#allocation2 + $0x2b48] sm:$0xff]
    %v1469 = vld [vmem:[#allocation2 + $0x2b50] sm:$0xff]
    %v1470 = vld [vmem:[#allocation2 + $0x2b58] sm:$0xff]
    %v1471 = vld [vmem:[#allocation2 + $0x2b60] sm:$0xff]
    %v1472 = vld [vmem:[#allocation2 + $0x2b68] sm:$0xff]
    %v1473 = vld [vmem:[#allocation2 + $0x2b70] sm:$0xff]
    %v1474 = vld [vmem:[#allocation2 + $0x2b78] sm:$0xff]
    %v1475 = vld [vmem:[#allocation2 + $0x2b80] sm:$0xff]
    %v1476 = vld [vmem:[#allocation2 + $0x2b88] sm:$0xff]
    %v1477 = vld [vmem:[#allocation2 + $0x2b90] sm:$0xff]
    %v1478 = vld [vmem:[#allocation2 + $0x2b98] sm:$0xff]
    %v1479 = vld [vmem:[#allocation2 + $0x2ba0] sm:$0xff]
    %v1480 = vld [vmem:[#allocation2 + $0x2ba8] sm:$0xff]
    %v1481 = vld [vmem:[#allocation2 + $0x2bb0] sm:$0xff]
    %v1482 = vld [vmem:[#allocation2 + $0x2bb8] sm:$0xff]
    %v1483 = vld [vmem:[#allocation2 + $0x2bc0] sm:$0xff]
    %v1484 = vld [vmem:[#allocation2 + $0x2bc8] sm:$0xff]
    %v1485 = vld [vmem:[#allocation2 + $0x2bd0] sm:$0xff]
    %v1486 = vld [vmem:[#allocation2 + $0x2bd8] sm:$0xff]
    %v1487 = vld [vmem:[#allocation2 + $0x2be0] sm:$0xff]
    %v1488 = vld [vmem:[#allocation2 + $0x2be8] sm:$0xff]
    %v1489 = vld [vmem:[#allocation2 + $0x2bf0] sm:$0xff]
    %v1490 = vld [vmem:[#allocation2 + $0x2bf8] sm:$0xff]
    %v1491 = vld [vmem:[#allocation2 + $0x2c00] sm:$0xff]
    %v1492 = vld [vmem:[#allocation2 + $0x2c08] sm:$0xff]
    %v1493 = vld [vmem:[#allocation2 + $0x2c10] sm:$0xff]
    %v1494 = vld [vmem:[#allocation2 + $0x2c18] sm:$0xff]
    %v1495 = vld [vmem:[#allocation2 + $0x2c20] sm:$0xff]
    %v1496 = vld [vmem:[#allocation2 + $0x2c28] sm:$0xff]
    %v1497 = vld [vmem:[#allocation2 + $0x2c30] sm:$0xff]
    %v1498 = vld [vmem:[#allocation2 + $0x2c38] sm:$0xff]
    %v1499 = vld [vmem:[#allocation2 + $0x2c40] sm:$0xff]
    %v1500 = vld [vmem:[#allocation2 + $0x2c48] sm:$0xff]
    %v1501 = vld [vmem:[#allocation2 + $0x2c50] sm:$0xff]
    %v1502 = vld [vmem:[#allocation2 + $0x2c58] sm:$0xff]
    %v1503 = vld [vmem:[#allocation2 + $0x2c60] sm:$0xff]
    %v1504 = vld [vmem:[#allocation2 + $0x2c68] sm:$0xff]
    %v1505 = vld [vmem:[#allocation2 + $0x2c70] sm:$0xff]
    %v1506 = vld [vmem:[#allocation2 + $0x2c78] sm:$0xff]
    %v1507 = vld [vmem:[#allocation2 + $0x2c80] sm:$0xff]
    %v1508 = vld [vmem:[#allocation2 + $0x2c88] sm:$0xff]
    %v1509 = vld [vmem:[#allocation2 + $0x2c90] sm:$0xff]
    %v1510 = vld [vmem:[#allocation2 + $0x2c98] sm:$0xff]
    %v1511 = vld [vmem:[#allocation2 + $0x2ca0] sm:$0xff]
    %v1512 = vld [vmem:[#allocation2 + $0x2ca8] sm:$0xff]
    %v1513 = vld [vmem:[#allocation2 + $0x2cb0] sm:$0xff]
    %v1514 = vld [vmem:[#allocation2 + $0x2cb8] sm:$0xff]
    %v1515 = vld [vmem:[#allocation2 + $0x2cc0] sm:$0xff]
    %v1516 = vld [vmem:[#allocation2 + $0x2cc8] sm:$0xff]
    %v1517 = vld [vmem:[#allocation2 + $0x2cd0] sm:$0xff]
    %v1518 = vld [vmem:[#allocation2 + $0x2cd8] sm:$0xff]
    %v1519 = vld [vmem:[#allocation2 + $0x2ce0] sm:$0xff]
    %v1520 = vld [vmem:[#allocation2 + $0x2ce8] sm:$0xff]
    %v1521 = vld [vmem:[#allocation2 + $0x2cf0] sm:$0xff]
    %v1522 = vld [vmem:[#allocation2 + $0x2cf8] sm:$0xff]
    %v1523 = vld [vmem:[#allocation2 + $0x2d00] sm:$0xff]
    %v1524 = vld [vmem:[#allocation2 + $0x2d08] sm:$0xff]
    %v1525 = vld [vmem:[#allocation2 + $0x2d10] sm:$0xff]
    %v1526 = vld [vmem:[#allocation2 + $0x2d18] sm:$0xff]
    %v1527 = vld [vmem:[#allocation2 + $0x2d20] sm:$0xff]
    %v1528 = vld [vmem:[#allocation2 + $0x2d28] sm:$0xff]
    %v1529 = vld [vmem:[#allocation2 + $0x2d30] sm:$0xff]
    %v1530 = vld [vmem:[#allocation2 + $0x2d38] sm:$0xff]
    %v1531 = vld [vmem:[#allocation2 + $0x2d40] sm:$0xff]
    %v1532 = vld [vmem:[#allocation2 + $0x2d48] sm:$0xff]
    %v1533 = vld [vmem:[#allocation2 + $0x2d50] sm:$0xff]
    %v1534 = vld [vmem:[#allocation2 + $0x2d58] sm:$0xff]
    %v1535 = vld [vmem:[#allocation2 + $0x2d60] sm:$0xff]
    %v1536 = vld [vmem:[#allocation2 + $0x2d68] sm:$0xff]
    %v1537 = vld [vmem:[#allocation2 + $0x2d70] sm:$0xff]
    %v1538 = vld [vmem:[#allocation2 + $0x2d78] sm:$0xff]
    %v1539 = vld [vmem:[#allocation2 + $0x2d80] sm:$0xff]
    %v1540 = vld [vmem:[#allocation2 + $0x2d88] sm:$0xff]
    %v1541 = vld [vmem:[#allocation2 + $0x2d90] sm:$0xff]
    %v1542 = vld [vmem:[#allocation2 + $0x2d98] sm:$0xff]
    %v1543 = vld [vmem:[#allocation2 + $0x2da0] sm:$0xff]
    %v1544 = vld [vmem:[#allocation2 + $0x2da8] sm:$0xff]
    %v1545 = vld [vmem:[#allocation2 + $0x2db0] sm:$0xff]
    %v1546 = vld [vmem:[#allocation2 + $0x2db8] sm:$0xff]
    %v1547 = vld [vmem:[#allocation2 + $0x2dc0] sm:$0xff]
    %v1548 = vld [vmem:[#allocation2 + $0x2dc8] sm:$0xff]
    %v1549 = vld [vmem:[#allocation2 + $0x2dd0] sm:$0xff]
    %v1550 = vld [vmem:[#allocation2 + $0x2dd8] sm:$0xff]
    %v1551 = vld [vmem:[#allocation2 + $0x2de0] sm:$0xff]
    %v1552 = vld [vmem:[#allocation2 + $0x2de8] sm:$0xff]
    %v1553 = vld [vmem:[#allocation2 + $0x2df0] sm:$0xff]
    %v1554 = vld [vmem:[#allocation2 + $0x2df8] sm:$0xff]
    %v1555 = vld [vmem:[#allocation2 + $0x2e00] sm:$0xff]
    %v1556 = vld [vmem:[#allocation2 + $0x2e08] sm:$0xff]
    %v1557 = vld [vmem:[#allocation2 + $0x2e10] sm:$0xff]
    %v1558 = vld [vmem:[#allocation2 + $0x2e18] sm:$0xff]
    %v1559 = vld [vmem:[#allocation2 + $0x2e20] sm:$0xff]
    %v1560 = vld [vmem:[#allocation2 + $0x2e28] sm:$0xff]
    %v1561 = vld [vmem:[#allocation2 + $0x2e30] sm:$0xff]
    %v1562 = vld [vmem:[#allocation2 + $0x2e38] sm:$0xff]
    %v1563 = vld [vmem:[#allocation2 + $0x2e40] sm:$0xff]
    %v1564 = vld [vmem:[#allocation2 + $0x2e48] sm:$0xff]
    %v1565 = vld [vmem:[#allocation2 + $0x2e50] sm:$0xff]
    %v1566 = vld [vmem:[#allocation2 + $0x2e58] sm:$0xff]
    %v1567 = vld [vmem:[#allocation2 + $0x2e60] sm:$0xff]
    %v1568 = vld [vmem:[#allocation2 + $0x2e68] sm:$0xff]
    %v1569 = vld [vmem:[#allocation2 + $0x2e70] sm:$0xff]
    %v1570 = vld [vmem:[#allocation2 + $0x2e78] sm:$0xff]
    %v1571 = vld [vmem:[#allocation2 + $0x2e80] sm:$0xff]
    %v1572 = vld [vmem:[#allocation2 + $0x2e88] sm:$0xff]
    %v1573 = vld [vmem:[#allocation2 + $0x2e90] sm:$0xff]
    %v1574 = vld [vmem:[#allocation2 + $0x2e98] sm:$0xff]
    %v1575 = vld [vmem:[#allocation2 + $0x2ea0] sm:$0xff]
    %v1576 = vld [vmem:[#allocation2 + $0x2ea8] sm:$0xff]
    %v1577 = vld [vmem:[#allocation2 + $0x2eb0] sm:$0xff]
    %v1578 = vld [vmem:[#allocation2 + $0x2eb8] sm:$0xff]
    %v1579 = vld [vmem:[#allocation2 + $0x2ec0] sm:$0xff]
    %v1580 = vld [vmem:[#allocation2 + $0x2ec8] sm:$0xff]
    %v1581 = vld [vmem:[#allocation2 + $0x2ed0] sm:$0xff]
    %v1582 = vld [vmem:[#allocation2 + $0x2ed8] sm:$0xff]
    %v1583 = vld [vmem:[#allocation2 + $0x2ee0] sm:$0xff]
    %v1584 = vld [vmem:[#allocation2 + $0x2ee8] sm:$0xff]
    %v1585 = vld [vmem:[#allocation2 + $0x2ef0] sm:$0xff]
    %v1586 = vld [vmem:[#allocation2 + $0x2ef8] sm:$0xff]
    %v1587 = vld [vmem:[#allocation2 + $0x2f00] sm:$0xff]
    %v1588 = vld [vmem:[#allocation2 + $0x2f08] sm:$0xff]
    %v1589 = vld [vmem:[#allocation2 + $0x2f10] sm:$0xff]
    %v1590 = vld [vmem:[#allocation2 + $0x2f18] sm:$0xff]
    %v1591 = vld [vmem:[#allocation2 + $0x2f20] sm:$0xff]
    %v1592 = vld [vmem:[#allocation2 + $0x2f28] sm:$0xff]
    %v1593 = vld [vmem:[#allocation2 + $0x2f30] sm:$0xff]
    %v1594 = vld [vmem:[#allocation2 + $0x2f38] sm:$0xff]
    %v1595 = vld [vmem:[#allocation2 + $0x2f40] sm:$0xff]
    %v1596 = vld [vmem:[#allocation2 + $0x2f48] sm:$0xff]
    %v1597 = vld [vmem:[#allocation2 + $0x2f50] sm:$0xff]
    %v1598 = vld [vmem:[#allocation2 + $0x2f58] sm:$0xff]
    %v1599 = vld [vmem:[#allocation2 + $0x2f60] sm:$0xff]
    %v1600 = vld [vmem:[#allocation2 + $0x2f68] sm:$0xff]
    %v1601 = vld [vmem:[#allocation2 + $0x2f70] sm:$0xff]
    %v1602 = vld [vmem:[#allocation2 + $0x2f78] sm:$0xff]
    %v1603 = vld [vmem:[#allocation2 + $0x2f80] sm:$0xff]
    %v1604 = vld [vmem:[#allocation2 + $0x2f88] sm:$0xff]
    %v1605 = vld [vmem:[#allocation2 + $0x2f90] sm:$0xff]
    %v1606 = vld [vmem:[#allocation2 + $0x2f98] sm:$0xff]
    %v1607 = vld [vmem:[#allocation2 + $0x2fa0] sm:$0xff]
    %v1608 = vld [vmem:[#allocation2 + $0x2fa8] sm:$0xff]
    %v1609 = vld [vmem:[#allocation2 + $0x2fb0] sm:$0xff]
    %v1610 = vld [vmem:[#allocation2 + $0x2fb8] sm:$0xff]
    %v1611 = vld [vmem:[#allocation2 + $0x2fc0] sm:$0xff]
    %v1612 = vld [vmem:[#allocation2 + $0x2fc8] sm:$0xff]
    %v1613 = vld [vmem:[#allocation2 + $0x2fd0] sm:$0xff]
    %v1614 = vld [vmem:[#allocation2 + $0x2fd8] sm:$0xff]
    %v1615 = vld [vmem:[#allocation2 + $0x2fe0] sm:$0xff]
    %v1616 = vld [vmem:[#allocation2 + $0x2fe8] sm:$0xff]
    %v1617 = vld [vmem:[#allocation2 + $0x2ff0] sm:$0xff]
    %v1618 = vld [vmem:[#allocation2 + $0x2ff8] sm:$0xff]
    %v1619 = vld [vmem:[#allocation2 + $0x3000] sm:$0xff]
    %v1620 = vld [vmem:[#allocation2 + $0x3008] sm:$0xff]
    %v1621 = vld [vmem:[#allocation2 + $0x3010] sm:$0xff]
    %v1622 = vld [vmem:[#allocation2 + $0x3018] sm:$0xff]
    %v1623 = vld [vmem:[#allocation2 + $0x3020] sm:$0xff]
    %v1624 = vld [vmem:[#allocation2 + $0x3028] sm:$0xff]
    %v1625 = vld [vmem:[#allocation2 + $0x3030] sm:$0xff]
    %v1626 = vld [vmem:[#allocation2 + $0x3038] sm:$0xff]
    %v1627 = vld [vmem:[#allocation2 + $0x3040] sm:$0xff]
    %v1628 = vld [vmem:[#allocation2 + $0x3048] sm:$0xff]
    %v1629 = vld [vmem:[#allocation2 + $0x3050] sm:$0xff]
    %v1630 = vld [vmem:[#allocation2 + $0x3058] sm:$0xff]
    %v1631 = vld [vmem:[#allocation2 + $0x3060] sm:$0xff]
    %v1632 = vld [vmem:[#allocation2 + $0x3068] sm:$0xff]
    %v1633 = vld [vmem:[#allocation2 + $0x3070] sm:$0xff]
    %v1634 = vld [vmem:[#allocation2 + $0x3078] sm:$0xff]
    %v1635 = vld [vmem:[#allocation2 + $0x3080] sm:$0xff]
    %v1636 = vld [vmem:[#allocation2 + $0x3088] sm:$0xff]
    %v1637 = vld [vmem:[#allocation2 + $0x3090] sm:$0xff]
    %v1638 = vld [vmem:[#allocation2 + $0x3098] sm:$0xff]
    %v1639 = vld [vmem:[#allocation2 + $0x30a0] sm:$0xff]
    %v1640 = vld [vmem:[#allocation2 + $0x30a8] sm:$0xff]
    %v1641 = vld [vmem:[#allocation2 + $0x30b0] sm:$0xff]
    %v1642 = vld [vmem:[#allocation2 + $0x30b8] sm:$0xff]
    %v1643 = vld [vmem:[#allocation2 + $0x30c0] sm:$0xff]
    %v1644 = vld [vmem:[#allocation2 + $0x30c8] sm:$0xff]
    %v1645 = vld [vmem:[#allocation2 + $0x30d0] sm:$0xff]
    %v1646 = vld [vmem:[#allocation2 + $0x30d8] sm:$0xff]
    %v1647 = vld [vmem:[#allocation2 + $0x30e0] sm:$0xff]
    %v1648 = vld [vmem:[#allocation2 + $0x30e8] sm:$0xff]
    %v1649 = vld [vmem:[#allocation2 + $0x30f0] sm:$0xff]
    %v1650 = vld [vmem:[#allocation2 + $0x30f8] sm:$0xff]
    %v1651 = vld [vmem:[#allocation2 + $0x3100] sm:$0xff]
    %v1652 = vld [vmem:[#allocation2 + $0x3108] sm:$0xff]
    %v1653 = vld [vmem:[#allocation2 + $0x3110] sm:$0xff]
    %v1654 = vld [vmem:[#allocation2 + $0x3118] sm:$0xff]
    %v1655 = vld [vmem:[#allocation2 + $0x3120] sm:$0xff]
    %v1656 = vld [vmem:[#allocation2 + $0x3128] sm:$0xff]
    %v1657 = vld [vmem:[#allocation2 + $0x3130] sm:$0xff]
    %v1658 = vld [vmem:[#allocation2 + $0x3138] sm:$0xff]
    %v1659 = vld [vmem:[#allocation2 + $0x3140] sm:$0xff]
    %v1660 = vld [vmem:[#allocation2 + $0x3148] sm:$0xff]
    %v1661 = vld [vmem:[#allocation2 + $0x3150] sm:$0xff]
    %v1662 = vld [vmem:[#allocation2 + $0x3158] sm:$0xff]
    %v1663 = vld [vmem:[#allocation2 + $0x3160] sm:$0xff]
    %v1664 = vld [vmem:[#allocation2 + $0x3168] sm:$0xff]
    %v1665 = vld [vmem:[#allocation2 + $0x3170] sm:$0xff]
    %v1666 = vld [vmem:[#allocation2 + $0x3178] sm:$0xff]
    %v1667 = vld [vmem:[#allocation2 + $0x3180] sm:$0xff]
    %v1668 = vld [vmem:[#allocation2 + $0x3188] sm:$0xff]
    %v1669 = vld [vmem:[#allocation2 + $0x3190] sm:$0xff]
    %v1670 = vld [vmem:[#allocation2 + $0x3198] sm:$0xff]
    %v1671 = vld [vmem:[#allocation2 + $0x31a0] sm:$0xff]
    %v1672 = vld [vmem:[#allocation2 + $0x31a8] sm:$0xff]
    %v1673 = vld [vmem:[#allocation2 + $0x31b0] sm:$0xff]
    %v1674 = vld [vmem:[#allocation2 + $0x31b8] sm:$0xff]
    %v1675 = vld [vmem:[#allocation2 + $0x31c0] sm:$0xff]
    %v1676 = vld [vmem:[#allocation2 + $0x31c8] sm:$0xff]
    %v1677 = vld [vmem:[#allocation2 + $0x31d0] sm:$0xff]
    %v1678 = vld [vmem:[#allocation2 + $0x31d8] sm:$0xff]
    %v1679 = vld [vmem:[#allocation2 + $0x31e0] sm:$0xff]
    %v1680 = vld [vmem:[#allocation2 + $0x31e8] sm:$0xff]
    %v1681 = vld [vmem:[#allocation2 + $0x31f0] sm:$0xff]
    %v1682 = vld [vmem:[#allocation2 + $0x31f8] sm:$0xff]
    %v1685 = vperm.slane %v81, 0
    %v1686 = vperm.slane %v81, 1
    %v1687 = vperm.slane %v81, 2
    %v1688 = vperm.slane %v81, 3
    %v1689 = vperm.slane %v81, 4
    %v1690 = vperm.slane %v81, 5
    %v1691 = vperm.slane %v81, 6
    %v1692 = vperm.slane %v81, 7
    %v1693 = vperm.slane %v82, 0
    %v1694 = vperm.slane %v82, 1
    %1705 = vmatpush.msra.mxu0 %v233
    %1706 = vmatpush.msra.mxu0 %v223
    %1707 = vmatpush.msra.mxu0 %v213
    %1708 = vmatpush.msra.mxu0 %v203
    %1709 = vmatpush.msra.mxu0 %v193
    %1710 = vmatpush.msra.mxu0 %v183
    %1711 = vmatpush.msra.mxu0 %v173
    %1712 = vmatpush.msra.mxu0 %v163
    %1713 = vmatpush.msra.mxu0 %v153
    %1714 = vmatpush.msra.mxu0 %v143
    %1715 = vmatpush.msra.mxu0 %v133
    %1716 = vmatpush.msra.mxu0 %v123
    %1717 = vmatpush.msra.mxu0 %v113
    %1718 = vmatpush.msra.mxu0 %v103
    %1719 = vmatpush.msra.mxu0 %v93
    %1720 = vmatpush.msra.mxu0 %v83
    %1721 = vmatmul.f32.gmra.mxu0 %v1685
    %v1722 = vpop.f32.mrf.mxu0
    %v1723 = vadd.f32 0.0, %v1722
    %1724 = vdwg.mxu0
    %1725 = vmatpush.msra.mxu0 %v393
    %1726 = vmatpush.msra.mxu0 %v383
    %1727 = vmatpush.msra.mxu0 %v373
    %1728 = vmatpush.msra.mxu0 %v363
    %1729 = vmatpush.msra.mxu0 %v353
    %1730 = vmatpush.msra.mxu0 %v343
    %1731 = vmatpush.msra.mxu0 %v333
    %1732 = vmatpush.msra.mxu0 %v323
    %1733 = vmatpush.msra.mxu0 %v313
    %1734 = vmatpush.msra.mxu0 %v303
    %1735 = vmatpush.msra.mxu0 %v293
    %1736 = vmatpush.msra.mxu0 %v283
    %1737 = vmatpush.msra.mxu0 %v273
    %1738 = vmatpush.msra.mxu0 %v263
    %1739 = vmatpush.msra.mxu0 %v253
    %1740 = vmatpush.msra.mxu0 %v243
    %1741 = vmatmul.f32.gmra.mxu0 %v1686
    %v1742 = vpop.f32.mrf.mxu0
    %v1743 = vadd.f32 %v1723, %v1742
    %1744 = vdwg.mxu0
    %1745 = vmatpush.msra.mxu0 %v553
    %1746 = vmatpush.msra.mxu0 %v543
    %1747 = vmatpush.msra.mxu0 %v533
    %1748 = vmatpush.msra.mxu0 %v523
    %1749 = vmatpush.msra.mxu0 %v513
    %1750 = vmatpush.msra.mxu0 %v503
    %1751 = vmatpush.msra.mxu0 %v493
    %1752 = vmatpush.msra.mxu0 %v483
    %1753 = vmatpush.msra.mxu0 %v473
    %1754 = vmatpush.msra.mxu0 %v463
    %1755 = vmatpush.msra.mxu0 %v453
    %1756 = vmatpush.msra.mxu0 %v443
    %1757 = vmatpush.msra.mxu0 %v433
    %1758 = vmatpush.msra.mxu0 %v423
    %1759 = vmatpush.msra.mxu0 %v413
    %1760 = vmatpush.msra.mxu0 %v403
    %1761 = vmatmul.f32.gmra.mxu0 %v1687
    %v1762 = vpop.f32.mrf.mxu0
    %v1763 = vadd.f32 %v1743, %v1762
    %1764 = vdwg.mxu0
    %1765 = vmatpush.msra.mxu0 %v713
    %1766 = vmatpush.msra.mxu0 %v703
    %1767 = vmatpush.msra.mxu0 %v693
    %1768 = vmatpush.msra.mxu0 %v683
    %1769 = vmatpush.msra.mxu0 %v673
    %1770 = vmatpush.msra.mxu0 %v663
    %1771 = vmatpush.msra.mxu0 %v653
    %1772 = vmatpush.msra.mxu0 %v643
    %1773 = vmatpush.msra.mxu0 %v633
    %1774 = vmatpush.msra.mxu0 %v623
    %1775 = vmatpush.msra.mxu0 %v613
    %1776 = vmatpush.msra.mxu0 %v603
    %1777 = vmatpush.msra.mxu0 %v593
    %1778 = vmatpush.msra.mxu0 %v583
    %1779 = vmatpush.msra.mxu0 %v573
    %1780 = vmatpush.msra.mxu0 %v563
    %1781 = vmatmul.f32.gmra.mxu0 %v1688
    %v1782 = vpop.f32.mrf.mxu0
    %v1783 = vadd.f32 %v1763, %v1782
    %1784 = vdwg.mxu0
    %1785 = vmatpush.msra.mxu0 %v873
    %1786 = vmatpush.msra.mxu0 %v863
    %1787 = vmatpush.msra.mxu0 %v853
    %1788 = vmatpush.msra.mxu0 %v843
    %1789 = vmatpush.msra.mxu0 %v833
    %1790 = vmatpush.msra.mxu0 %v823
    %1791 = vmatpush.msra.mxu0 %v813
    %1792 = vmatpush.msra.mxu0 %v803
    %1793 = vmatpush.msra.mxu0 %v793
    %1794 = vmatpush.msra.mxu0 %v783
    %1795 = vmatpush.msra.mxu0 %v773
    %1796 = vmatpush.msra.mxu0 %v763
    %1797 = vmatpush.msra.mxu0 %v753
    %1798 = vmatpush.msra.mxu0 %v743
    %1799 = vmatpush.msra.mxu0 %v733
    %1800 = vmatpush.msra.mxu0 %v723
    %1801 = vmatmul.f32.gmra.mxu0 %v1689
    %v1802 = vpop.f32.mrf.mxu0
    %v1803 = vadd.f32 %v1783, %v1802
    %1804 = vdwg.mxu0
    %1805 = vmatpush.msra.mxu0 %v1033
    %1806 = vmatpush.msra.mxu0 %v1023
    %1807 = vmatpush.msra.mxu0 %v1013
    %1808 = vmatpush.msra.mxu0 %v1003
    %1809 = vmatpush.msra.mxu0 %v993
    %1810 = vmatpush.msra.mxu0 %v983
    %1811 = vmatpush.msra.mxu0 %v973
    %1812 = vmatpush.msra.mxu0 %v963
    %1813 = vmatpush.msra.mxu0 %v953
    %1814 = vmatpush.msra.mxu0 %v943
    %1815 = vmatpush.msra.mxu0 %v933
    %1816 = vmatpush.msra.mxu0 %v923
    %1817 = vmatpush.msra.mxu0 %v913
    %1818 = vmatpush.msra.mxu0 %v903
    %1819 = vmatpush.msra.mxu0 %v893
    %1820 = vmatpush.msra.mxu0 %v883
    %1821 = vmatmul.f32.gmra.mxu0 %v1690
    %v1822 = vpop.f32.mrf.mxu0
    %v1823 = vadd.f32 %v1803, %v1822
    %1824 = vdwg.mxu0
    %1825 = vmatpush.msra.mxu0 %v1193
    %1826 = vmatpush.msra.mxu0 %v1183
    %1827 = vmatpush.msra.mxu0 %v1173
    %1828 = vmatpush.msra.mxu0 %v1163
    %1829 = vmatpush.msra.mxu0 %v1153
    %1830 = vmatpush.msra.mxu0 %v1143
    %1831 = vmatpush.msra.mxu0 %v1133
    %1832 = vmatpush.msra.mxu0 %v1123
    %1833 = vmatpush.msra.mxu0 %v1113
    %1834 = vmatpush.msra.mxu0 %v1103
    %1835 = vmatpush.msra.mxu0 %v1093
    %1836 = vmatpush.msra.mxu0 %v1083
    %1837 = vmatpush.msra.mxu0 %v1073
    %1838 = vmatpush.msra.mxu0 %v1063
    %1839 = vmatpush.msra.mxu0 %v1053
    %1840 = vmatpush.msra.mxu0 %v1043
    %1841 = vmatmul.f32.gmra.mxu0 %v1691
    %v1842 = vpop.f32.mrf.mxu0
    %v1843 = vadd.f32 %v1823, %v1842
    %1844 = vdwg.mxu0
    %1845 = vmatpush.msra.mxu0 %v1353
    %1846 = vmatpush.msra.mxu0 %v1343
    %1847 = vmatpush.msra.mxu0 %v1333
    %1848 = vmatpush.msra.mxu0 %v1323
    %1849 = vmatpush.msra.mxu0 %v1313
    %1850 = vmatpush.msra.mxu0 %v1303
    %1851 = vmatpush.msra.mxu0 %v1293
    %1852 = vmatpush.msra.mxu0 %v1283
    %1853 = vmatpush.msra.mxu0 %v1273
    %1854 = vmatpush.msra.mxu0 %v1263
    %1855 = vmatpush.msra.mxu0 %v1253
    %1856 = vmatpush.msra.mxu0 %v1243
    %1857 = vmatpush.msra.mxu0 %v1233
    %1858 = vmatpush.msra.mxu0 %v1223
    %1859 = vmatpush.msra.mxu0 %v1213
    %1860 = vmatpush.msra.mxu0 %v1203
    %1861 = vmatmul.f32.gmra.mxu0 %v1692
    %v1862 = vpop.f32.mrf.mxu0
    %v1863 = vadd.f32 %v1843, %v1862
    %1864 = vdwg.mxu0
    %1865 = vmatpush.msra.mxu0 %v1513
    %1866 = vmatpush.msra.mxu0 %v1503
    %1867 = vmatpush.msra.mxu0 %v1493
    %1868 = vmatpush.msra.mxu0 %v1483
    %1869 = vmatpush.msra.mxu0 %v1473
    %1870 = vmatpush.msra.mxu0 %v1463
    %1871 = vmatpush.msra.mxu0 %v1453
    %1872 = vmatpush.msra.mxu0 %v1443
    %1873 = vmatpush.msra.mxu0 %v1433
    %1874 = vmatpush.msra.mxu0 %v1423
    %1875 = vmatpush.msra.mxu0 %v1413
    %1876 = vmatpush.msra.mxu0 %v1403
    %1877 = vmatpush.msra.mxu0 %v1393
    %1878 = vmatpush.msra.mxu0 %v1383
    %1879 = vmatpush.msra.mxu0 %v1373
    %1880 = vmatpush.msra.mxu0 %v1363
    %1881 = vmatmul.f32.gmra.mxu0 %v1693
    %v1882 = vpop.f32.mrf.mxu0
    %v1883 = vadd.f32 %v1863, %v1882
    %1884 = vdwg.mxu0
    %1885 = vmatpush.msra.mxu0 %v1673
    %1886 = vmatpush.msra.mxu0 %v1663
    %1887 = vmatpush.msra.mxu0 %v1653
    %1888 = vmatpush.msra.mxu0 %v1643
    %1889 = vmatpush.msra.mxu0 %v1633
    %1890 = vmatpush.msra.mxu0 %v1623
    %1891 = vmatpush.msra.mxu0 %v1613
    %1892 = vmatpush.msra.mxu0 %v1603
    %1893 = vmatpush.msra.mxu0 %v1593
    %1894 = vmatpush.msra.mxu0 %v1583
    %1895 = vmatpush.msra.mxu0 %v1573
    %1896 = vmatpush.msra.mxu0 %v1563
    %1897 = vmatpush.msra.mxu0 %v1553
    %1898 = vmatpush.msra.mxu0 %v1543
    %1899 = vmatpush.msra.mxu0 %v1533
    %1900 = vmatpush.msra.mxu0 %v1523
    %1901 = vmatmul.f32.gmra.mxu0 %v1694
    %v1902 = vpop.f32.mrf.mxu0
    %v1903 = vadd.f32 %v1883, %v1902
    %1904 = vdwg.mxu0
    %1905 = vmatpush.msra.mxu0 %v234
    %1906 = vmatpush.msra.mxu0 %v224
    %1907 = vmatpush.msra.mxu0 %v214
    %1908 = vmatpush.msra.mxu0 %v204
    %1909 = vmatpush.msra.mxu0 %v194
    %1910 = vmatpush.msra.mxu0 %v184
    %1911 = vmatpush.msra.mxu0 %v174
    %1912 = vmatpush.msra.mxu0 %v164
    %1913 = vmatpush.msra.mxu0 %v154
    %1914 = vmatpush.msra.mxu0 %v144
    %1915 = vmatpush.msra.mxu0 %v134
    %1916 = vmatpush.msra.mxu0 %v124
    %1917 = vmatpush.msra.mxu0 %v114
    %1918 = vmatpush.msra.mxu0 %v104
    %1919 = vmatpush.msra.mxu0 %v94
    %1920 = vmatpush.msra.mxu0 %v84
    %1921 = vmatmul.f32.gmra.mxu0 %v1685
    %v1922 = vpop.f32.mrf.mxu0
    %v1923 = vadd.f32 0.0, %v1922
    %1924 = vdwg.mxu0
    %1925 = vmatpush.msra.mxu0 %v394
    %1926 = vmatpush.msra.mxu0 %v384
    %1927 = vmatpush.msra.mxu0 %v374
    %1928 = vmatpush.msra.mxu0 %v364
    %1929 = vmatpush.msra.mxu0 %v354
    %1930 = vmatpush.msra.mxu0 %v344
    %1931 = vmatpush.msra.mxu0 %v334
    %1932 = vmatpush.msra.mxu0 %v324
    %1933 = vmatpush.msra.mxu0 %v314
    %1934 = vmatpush.msra.mxu0 %v304
    %1935 = vmatpush.msra.mxu0 %v294
    %1936 = vmatpush.msra.mxu0 %v284
    %1937 = vmatpush.msra.mxu0 %v274
    %1938 = vmatpush.msra.mxu0 %v264
    %1939 = vmatpush.msra.mxu0 %v254
    %1940 = vmatpush.msra.mxu0 %v244
    %1941 = vmatmul.f32.gmra.mxu0 %v1686
    %v1942 = vpop.f32.mrf.mxu0
    %v1943 = vadd.f32 %v1923, %v1942
    %1944 = vdwg.mxu0
    %1945 = vmatpush.msra.mxu0 %v554
    %1946 = vmatpush.msra.mxu0 %v544
    %1947 = vmatpush.msra.mxu0 %v534
    %1948 = vmatpush.msra.mxu0 %v524
    %1949 = vmatpush.msra.mxu0 %v514
    %1950 = vmatpush.msra.mxu0 %v504
    %1951 = vmatpush.msra.mxu0 %v494
    %1952 = vmatpush.msra.mxu0 %v484
    %1953 = vmatpush.msra.mxu0 %v474
    %1954 = vmatpush.msra.mxu0 %v464
    %1955 = vmatpush.msra.mxu0 %v454
    %1956 = vmatpush.msra.mxu0 %v444
    %1957 = vmatpush.msra.mxu0 %v434
    %1958 = vmatpush.msra.mxu0 %v424
    %1959 = vmatpush.msra.mxu0 %v414
    %1960 = vmatpush.msra.mxu0 %v404
    %1961 = vmatmul.f32.gmra.mxu0 %v1687
    %v1962 = vpop.f32.mrf.mxu0
    %v1963 = vadd.f32 %v1943, %v1962
    %1964 = vdwg.mxu0
    %1965 = vmatpush.msra.mxu0 %v714
    %1966 = vmatpush.msra.mxu0 %v704
    %1967 = vmatpush.msra.mxu0 %v694
    %1968 = vmatpush.msra.mxu0 %v684
    %1969 = vmatpush.msra.mxu0 %v674
    %1970 = vmatpush.msra.mxu0 %v664
    %1971 = vmatpush.msra.mxu0 %v654
    %1972 = vmatpush.msra.mxu0 %v644
    %1973 = vmatpush.msra.mxu0 %v634
    %1974 = vmatpush.msra.mxu0 %v624
    %1975 = vmatpush.msra.mxu0 %v614
    %1976 = vmatpush.msra.mxu0 %v604
    %1977 = vmatpush.msra.mxu0 %v594
    %1978 = vmatpush.msra.mxu0 %v584
    %1979 = vmatpush.msra.mxu0 %v574
    %1980 = vmatpush.msra.mxu0 %v564
    %1981 = vmatmul.f32.gmra.mxu0 %v1688
    %v1982 = vpop.f32.mrf.mxu0
    %v1983 = vadd.f32 %v1963, %v1982
    %1984 = vdwg.mxu0
    %1985 = vmatpush.msra.mxu0 %v874
    %1986 = vmatpush.msra.mxu0 %v864
    %1987 = vmatpush.msra.mxu0 %v854
    %1988 = vmatpush.msra.mxu0 %v844
    %1989 = vmatpush.msra.mxu0 %v834
    %1990 = vmatpush.msra.mxu0 %v824
    %1991 = vmatpush.msra.mxu0 %v814
    %1992 = vmatpush.msra.mxu0 %v804
    %1993 = vmatpush.msra.mxu0 %v794
    %1994 = vmatpush.msra.mxu0 %v784
    %1995 = vmatpush.msra.mxu0 %v774
    %1996 = vmatpush.msra.mxu0 %v764
    %1997 = vmatpush.msra.mxu0 %v754
    %1998 = vmatpush.msra.mxu0 %v744
    %1999 = vmatpush.msra.mxu0 %v734
    %2000 = vmatpush.msra.mxu0 %v724
    %2001 = vmatmul.f32.gmra.mxu0 %v1689
    %v2002 = vpop.f32.mrf.mxu0
    %v2003 = vadd.f32 %v1983, %v2002
    %2004 = vdwg.mxu0
    %2005 = vmatpush.msra.mxu0 %v1034
    %2006 = vmatpush.msra.mxu0 %v1024
    %2007 = vmatpush.msra.mxu0 %v1014
    %2008 = vmatpush.msra.mxu0 %v1004
    %2009 = vmatpush.msra.mxu0 %v994
    %2010 = vmatpush.msra.mxu0 %v984
    %2011 = vmatpush.msra.mxu0 %v974
    %2012 = vmatpush.msra.mxu0 %v964
    %2013 = vmatpush.msra.mxu0 %v954
    %2014 = vmatpush.msra.mxu0 %v944
    %2015 = vmatpush.msra.mxu0 %v934
    %2016 = vmatpush.msra.mxu0 %v924
    %2017 = vmatpush.msra.mxu0 %v914
    %2018 = vmatpush.msra.mxu0 %v904
    %2019 = vmatpush.msra.mxu0 %v894
    %2020 = vmatpush.msra.mxu0 %v884
    %2021 = vmatmul.f32.gmra.mxu0 %v1690
    %v2022 = vpop.f32.mrf.mxu0
    %v2023 = vadd.f32 %v2003, %v2022
    %2024 = vdwg.mxu0
    %2025 = vmatpush.msra.mxu0 %v1194
    %2026 = vmatpush.msra.mxu0 %v1184
    %2027 = vmatpush.msra.mxu0 %v1174
    %2028 = vmatpush.msra.mxu0 %v1164
    %2029 = vmatpush.msra.mxu0 %v1154
    %2030 = vmatpush.msra.mxu0 %v1144
    %2031 = vmatpush.msra.mxu0 %v1134
    %2032 = vmatpush.msra.mxu0 %v1124
    %2033 = vmatpush.msra.mxu0 %v1114
    %2034 = vmatpush.msra.mxu0 %v1104
    %2035 = vmatpush.msra.mxu0 %v1094
    %2036 = vmatpush.msra.mxu0 %v1084
    %2037 = vmatpush.msra.mxu0 %v1074
    %2038 = vmatpush.msra.mxu0 %v1064
    %2039 = vmatpush.msra.mxu0 %v1054
    %2040 = vmatpush.msra.mxu0 %v1044
    %2041 = vmatmul.f32.gmra.mxu0 %v1691
    %v2042 = vpop.f32.mrf.mxu0
    %v2043 = vadd.f32 %v2023, %v2042
    %2044 = vdwg.mxu0
    %2045 = vmatpush.msra.mxu0 %v1354
    %2046 = vmatpush.msra.mxu0 %v1344
    %2047 = vmatpush.msra.mxu0 %v1334
    %2048 = vmatpush.msra.mxu0 %v1324
    %2049 = vmatpush.msra.mxu0 %v1314
    %2050 = vmatpush.msra.mxu0 %v1304
    %2051 = vmatpush.msra.mxu0 %v1294
    %2052 = vmatpush.msra.mxu0 %v1284
    %2053 = vmatpush.msra.mxu0 %v1274
    %2054 = vmatpush.msra.mxu0 %v1264
    %2055 = vmatpush.msra.mxu0 %v1254
    %2056 = vmatpush.msra.mxu0 %v1244
    %2057 = vmatpush.msra.mxu0 %v1234
    %2058 = vmatpush.msra.mxu0 %v1224
    %2059 = vmatpush.msra.mxu0 %v1214
    %2060 = vmatpush.msra.mxu0 %v1204
    %2061 = vmatmul.f32.gmra.mxu0 %v1692
    %v2062 = vpop.f32.mrf.mxu0
    %v2063 = vadd.f32 %v2043, %v2062
    %2064 = vdwg.mxu0
    %2065 = vmatpush.msra.mxu0 %v1514
    %2066 = vmatpush.msra.mxu0 %v1504
    %2067 = vmatpush.msra.mxu0 %v1494
    %2068 = vmatpush.msra.mxu0 %v1484
    %2069 = vmatpush.msra.mxu0 %v1474
    %2070 = vmatpush.msra.mxu0 %v1464
    %2071 = vmatpush.msra.mxu0 %v1454
    %2072 = vmatpush.msra.mxu0 %v1444
    %2073 = vmatpush.msra.mxu0 %v1434
    %2074 = vmatpush.msra.mxu0 %v1424
    %2075 = vmatpush.msra.mxu0 %v1414
    %2076 = vmatpush.msra.mxu0 %v1404
    %2077 = vmatpush.msra.mxu0 %v1394
    %2078 = vmatpush.msra.mxu0 %v1384
    %2079 = vmatpush.msra.mxu0 %v1374
    %2080 = vmatpush.msra.mxu0 %v1364
    %2081 = vmatmul.f32.gmra.mxu0 %v1693
    %v2082 = vpop.f32.mrf.mxu0
    %v2083 = vadd.f32 %v2063, %v2082
    %2084 = vdwg.mxu0
    %2085 = vmatpush.msra.mxu0 %v1674
    %2086 = vmatpush.msra.mxu0 %v1664
    %2087 = vmatpush.msra.mxu0 %v1654
    %2088 = vmatpush.msra.mxu0 %v1644
    %2089 = vmatpush.msra.mxu0 %v1634
    %2090 = vmatpush.msra.mxu0 %v1624
    %2091 = vmatpush.msra.mxu0 %v1614
    %2092 = vmatpush.msra.mxu0 %v1604
    %2093 = vmatpush.msra.mxu0 %v1594
    %2094 = vmatpush.msra.mxu0 %v1584
    %2095 = vmatpush.msra.mxu0 %v1574
    %2096 = vmatpush.msra.mxu0 %v1564
    %2097 = vmatpush.msra.mxu0 %v1554
    %2098 = vmatpush.msra.mxu0 %v1544
    %2099 = vmatpush.msra.mxu0 %v1534
    %2100 = vmatpush.msra.mxu0 %v1524
    %2101 = vmatmul.f32.gmra.mxu0 %v1694
    %v2102 = vpop.f32.mrf.mxu0
    %v2103 = vadd.f32 %v2083, %v2102
    %2104 = vdwg.mxu0
    %2105 = vmatpush.msra.mxu0 %v235
    %2106 = vmatpush.msra.mxu0 %v225
    %2107 = vmatpush.msra.mxu0 %v215
    %2108 = vmatpush.msra.mxu0 %v205
    %2109 = vmatpush.msra.mxu0 %v195
    %2110 = vmatpush.msra.mxu0 %v185
    %2111 = vmatpush.msra.mxu0 %v175
    %2112 = vmatpush.msra.mxu0 %v165
    %2113 = vmatpush.msra.mxu0 %v155
    %2114 = vmatpush.msra.mxu0 %v145
    %2115 = vmatpush.msra.mxu0 %v135
    %2116 = vmatpush.msra.mxu0 %v125
    %2117 = vmatpush.msra.mxu0 %v115
    %2118 = vmatpush.msra.mxu0 %v105
    %2119 = vmatpush.msra.mxu0 %v95
    %2120 = vmatpush.msra.mxu0 %v85
    %2121 = vmatmul.f32.gmra.mxu0 %v1685
    %v2122 = vpop.f32.mrf.mxu0
    %v2123 = vadd.f32 0.0, %v2122
    %2124 = vdwg.mxu0
    %2125 = vmatpush.msra.mxu0 %v395
    %2126 = vmatpush.msra.mxu0 %v385
    %2127 = vmatpush.msra.mxu0 %v375
    %2128 = vmatpush.msra.mxu0 %v365
    %2129 = vmatpush.msra.mxu0 %v355
    %2130 = vmatpush.msra.mxu0 %v345
    %2131 = vmatpush.msra.mxu0 %v335
    %2132 = vmatpush.msra.mxu0 %v325
    %2133 = vmatpush.msra.mxu0 %v315
    %2134 = vmatpush.msra.mxu0 %v305
    %2135 = vmatpush.msra.mxu0 %v295
    %2136 = vmatpush.msra.mxu0 %v285
    %2137 = vmatpush.msra.mxu0 %v275
    %2138 = vmatpush.msra.mxu0 %v265
    %2139 = vmatpush.msra.mxu0 %v255
    %2140 = vmatpush.msra.mxu0 %v245
    %2141 = vmatmul.f32.gmra.mxu0 %v1686
    %v2142 = vpop.f32.mrf.mxu0
    %v2143 = vadd.f32 %v2123, %v2142
    %2144 = vdwg.mxu0
    %2145 = vmatpush.msra.mxu0 %v555
    %2146 = vmatpush.msra.mxu0 %v545
    %2147 = vmatpush.msra.mxu0 %v535
    %2148 = vmatpush.msra.mxu0 %v525
    %2149 = vmatpush.msra.mxu0 %v515
    %2150 = vmatpush.msra.mxu0 %v505
    %2151 = vmatpush.msra.mxu0 %v495
    %2152 = vmatpush.msra.mxu0 %v485
    %2153 = vmatpush.msra.mxu0 %v475
    %2154 = vmatpush.msra.mxu0 %v465
    %2155 = vmatpush.msra.mxu0 %v455
    %2156 = vmatpush.msra.mxu0 %v445
    %2157 = vmatpush.msra.mxu0 %v435
    %2158 = vmatpush.msra.mxu0 %v425
    %2159 = vmatpush.msra.mxu0 %v415
    %2160 = vmatpush.msra.mxu0 %v405
    %2161 = vmatmul.f32.gmra.mxu0 %v1687
    %v2162 = vpop.f32.mrf.mxu0
    %v2163 = vadd.f32 %v2143, %v2162
    %2164 = vdwg.mxu0
    %2165 = vmatpush.msra.mxu0 %v715
    %2166 = vmatpush.msra.mxu0 %v705
    %2167 = vmatpush.msra.mxu0 %v695
    %2168 = vmatpush.msra.mxu0 %v685
    %2169 = vmatpush.msra.mxu0 %v675
    %2170 = vmatpush.msra.mxu0 %v665
    %2171 = vmatpush.msra.mxu0 %v655
    %2172 = vmatpush.msra.mxu0 %v645
    %2173 = vmatpush.msra.mxu0 %v635
    %2174 = vmatpush.msra.mxu0 %v625
    %2175 = vmatpush.msra.mxu0 %v615
    %2176 = vmatpush.msra.mxu0 %v605
    %2177 = vmatpush.msra.mxu0 %v595
    %2178 = vmatpush.msra.mxu0 %v585
    %2179 = vmatpush.msra.mxu0 %v575
    %2180 = vmatpush.msra.mxu0 %v565
    %2181 = vmatmul.f32.gmra.mxu0 %v1688
    %v2182 = vpop.f32.mrf.mxu0
    %v2183 = vadd.f32 %v2163, %v2182
    %2184 = vdwg.mxu0
    %2185 = vmatpush.msra.mxu0 %v875
    %2186 = vmatpush.msra.mxu0 %v865
    %2187 = vmatpush.msra.mxu0 %v855
    %2188 = vmatpush.msra.mxu0 %v845
    %2189 = vmatpush.msra.mxu0 %v835
    %2190 = vmatpush.msra.mxu0 %v825
    %2191 = vmatpush.msra.mxu0 %v815
    %2192 = vmatpush.msra.mxu0 %v805
    %2193 = vmatpush.msra.mxu0 %v795
    %2194 = vmatpush.msra.mxu0 %v785
    %2195 = vmatpush.msra.mxu0 %v775
    %2196 = vmatpush.msra.mxu0 %v765
    %2197 = vmatpush.msra.mxu0 %v755
    %2198 = vmatpush.msra.mxu0 %v745
    %2199 = vmatpush.msra.mxu0 %v735
    %2200 = vmatpush.msra.mxu0 %v725
    %2201 = vmatmul.f32.gmra.mxu0 %v1689
    %v2202 = vpop.f32.mrf.mxu0
    %v2203 = vadd.f32 %v2183, %v2202
    %2204 = vdwg.mxu0
    %2205 = vmatpush.msra.mxu0 %v1035
    %2206 = vmatpush.msra.mxu0 %v1025
    %2207 = vmatpush.msra.mxu0 %v1015
    %2208 = vmatpush.msra.mxu0 %v1005
    %2209 = vmatpush.msra.mxu0 %v995
    %2210 = vmatpush.msra.mxu0 %v985
    %2211 = vmatpush.msra.mxu0 %v975
    %2212 = vmatpush.msra.mxu0 %v965
    %2213 = vmatpush.msra.mxu0 %v955
    %2214 = vmatpush.msra.mxu0 %v945
    %2215 = vmatpush.msra.mxu0 %v935
    %2216 = vmatpush.msra.mxu0 %v925
    %2217 = vmatpush.msra.mxu0 %v915
    %2218 = vmatpush.msra.mxu0 %v905
    %2219 = vmatpush.msra.mxu0 %v895
    %2220 = vmatpush.msra.mxu0 %v885
    %2221 = vmatmul.f32.gmra.mxu0 %v1690
    %v2222 = vpop.f32.mrf.mxu0
    %v2223 = vadd.f32 %v2203, %v2222
    %2224 = vdwg.mxu0
    %2225 = vmatpush.msra.mxu0 %v1195
    %2226 = vmatpush.msra.mxu0 %v1185
    %2227 = vmatpush.msra.mxu0 %v1175
    %2228 = vmatpush.msra.mxu0 %v1165
    %2229 = vmatpush.msra.mxu0 %v1155
    %2230 = vmatpush.msra.mxu0 %v1145
    %2231 = vmatpush.msra.mxu0 %v1135
    %2232 = vmatpush.msra.mxu0 %v1125
    %2233 = vmatpush.msra.mxu0 %v1115
    %2234 = vmatpush.msra.mxu0 %v1105
    %2235 = vmatpush.msra.mxu0 %v1095
    %2236 = vmatpush.msra.mxu0 %v1085
    %2237 = vmatpush.msra.mxu0 %v1075
    %2238 = vmatpush.msra.mxu0 %v1065
    %2239 = vmatpush.msra.mxu0 %v1055
    %2240 = vmatpush.msra.mxu0 %v1045
    %2241 = vmatmul.f32.gmra.mxu0 %v1691
    %v2242 = vpop.f32.mrf.mxu0
    %v2243 = vadd.f32 %v2223, %v2242
    %2244 = vdwg.mxu0
    %2245 = vmatpush.msra.mxu0 %v1355
    %2246 = vmatpush.msra.mxu0 %v1345
    %2247 = vmatpush.msra.mxu0 %v1335
    %2248 = vmatpush.msra.mxu0 %v1325
    %2249 = vmatpush.msra.mxu0 %v1315
    %2250 = vmatpush.msra.mxu0 %v1305
    %2251 = vmatpush.msra.mxu0 %v1295
    %2252 = vmatpush.msra.mxu0 %v1285
    %2253 = vmatpush.msra.mxu0 %v1275
    %2254 = vmatpush.msra.mxu0 %v1265
    %2255 = vmatpush.msra.mxu0 %v1255
    %2256 = vmatpush.msra.mxu0 %v1245
    %2257 = vmatpush.msra.mxu0 %v1235
    %2258 = vmatpush.msra.mxu0 %v1225
    %2259 = vmatpush.msra.mxu0 %v1215
    %2260 = vmatpush.msra.mxu0 %v1205
    %2261 = vmatmul.f32.gmra.mxu0 %v1692
    %v2262 = vpop.f32.mrf.mxu0
    %v2263 = vadd.f32 %v2243, %v2262
    %2264 = vdwg.mxu0
    %2265 = vmatpush.msra.mxu0 %v1515
    %2266 = vmatpush.msra.mxu0 %v1505
    %2267 = vmatpush.msra.mxu0 %v1495
    %2268 = vmatpush.msra.mxu0 %v1485
    %2269 = vmatpush.msra.mxu0 %v1475
    %2270 = vmatpush.msra.mxu0 %v1465
    %2271 = vmatpush.msra.mxu0 %v1455
    %2272 = vmatpush.msra.mxu0 %v1445
    %2273 = vmatpush.msra.mxu0 %v1435
    %2274 = vmatpush.msra.mxu0 %v1425
    %2275 = vmatpush.msra.mxu0 %v1415
    %2276 = vmatpush.msra.mxu0 %v1405
    %2277 = vmatpush.msra.mxu0 %v1395
    %2278 = vmatpush.msra.mxu0 %v1385
    %2279 = vmatpush.msra.mxu0 %v1375
    %2280 = vmatpush.msra.mxu0 %v1365
    %2281 = vmatmul.f32.gmra.mxu0 %v1693
    %v2282 = vpop.f32.mrf.mxu0
    %v2283 = vadd.f32 %v2263, %v2282
    %2284 = vdwg.mxu0
    %2285 = vmatpush.msra.mxu0 %v1675
    %2286 = vmatpush.msra.mxu0 %v1665
    %2287 = vmatpush.msra.mxu0 %v1655
    %2288 = vmatpush.msra.mxu0 %v1645
    %2289 = vmatpush.msra.mxu0 %v1635
    %2290 = vmatpush.msra.mxu0 %v1625
    %2291 = vmatpush.msra.mxu0 %v1615
    %2292 = vmatpush.msra.mxu0 %v1605
    %2293 = vmatpush.msra.mxu0 %v1595
    %2294 = vmatpush.msra.mxu0 %v1585
    %2295 = vmatpush.msra.mxu0 %v1575
    %2296 = vmatpush.msra.mxu0 %v1565
    %2297 = vmatpush.msra.mxu0 %v1555
    %2298 = vmatpush.msra.mxu0 %v1545
    %2299 = vmatpush.msra.mxu0 %v1535
    %2300 = vmatpush.msra.mxu0 %v1525
    %2301 = vmatmul.f32.gmra.mxu0 %v1694
    %v2302 = vpop.f32.mrf.mxu0
    %v2303 = vadd.f32 %v2283, %v2302
    %2304 = vdwg.mxu0
    %2305 = vmatpush.msra.mxu0 %v236
    %2306 = vmatpush.msra.mxu0 %v226
    %2307 = vmatpush.msra.mxu0 %v216
    %2308 = vmatpush.msra.mxu0 %v206
    %2309 = vmatpush.msra.mxu0 %v196
    %2310 = vmatpush.msra.mxu0 %v186
    %2311 = vmatpush.msra.mxu0 %v176
    %2312 = vmatpush.msra.mxu0 %v166
    %2313 = vmatpush.msra.mxu0 %v156
    %2314 = vmatpush.msra.mxu0 %v146
    %2315 = vmatpush.msra.mxu0 %v136
    %2316 = vmatpush.msra.mxu0 %v126
    %2317 = vmatpush.msra.mxu0 %v116
    %2318 = vmatpush.msra.mxu0 %v106
    %2319 = vmatpush.msra.mxu0 %v96
    %2320 = vmatpush.msra.mxu0 %v86
    %2321 = vmatmul.f32.gmra.mxu0 %v1685
    %v2322 = vpop.f32.mrf.mxu0
    %v2323 = vadd.f32 0.0, %v2322
    %2324 = vdwg.mxu0
    %2325 = vmatpush.msra.mxu0 %v396
    %2326 = vmatpush.msra.mxu0 %v386
    %2327 = vmatpush.msra.mxu0 %v376
    %2328 = vmatpush.msra.mxu0 %v366
    %2329 = vmatpush.msra.mxu0 %v356
    %2330 = vmatpush.msra.mxu0 %v346
    %2331 = vmatpush.msra.mxu0 %v336
    %2332 = vmatpush.msra.mxu0 %v326
    %2333 = vmatpush.msra.mxu0 %v316
    %2334 = vmatpush.msra.mxu0 %v306
    %2335 = vmatpush.msra.mxu0 %v296
    %2336 = vmatpush.msra.mxu0 %v286
    %2337 = vmatpush.msra.mxu0 %v276
    %2338 = vmatpush.msra.mxu0 %v266
    %2339 = vmatpush.msra.mxu0 %v256
    %2340 = vmatpush.msra.mxu0 %v246
    %2341 = vmatmul.f32.gmra.mxu0 %v1686
    %v2342 = vpop.f32.mrf.mxu0
    %v2343 = vadd.f32 %v2323, %v2342
    %2344 = vdwg.mxu0
    %2345 = vmatpush.msra.mxu0 %v556
    %2346 = vmatpush.msra.mxu0 %v546
    %2347 = vmatpush.msra.mxu0 %v536
    %2348 = vmatpush.msra.mxu0 %v526
    %2349 = vmatpush.msra.mxu0 %v516
    %2350 = vmatpush.msra.mxu0 %v506
    %2351 = vmatpush.msra.mxu0 %v496
    %2352 = vmatpush.msra.mxu0 %v486
    %2353 = vmatpush.msra.mxu0 %v476
    %2354 = vmatpush.msra.mxu0 %v466
    %2355 = vmatpush.msra.mxu0 %v456
    %2356 = vmatpush.msra.mxu0 %v446
    %2357 = vmatpush.msra.mxu0 %v436
    %2358 = vmatpush.msra.mxu0 %v426
    %2359 = vmatpush.msra.mxu0 %v416
    %2360 = vmatpush.msra.mxu0 %v406
    %2361 = vmatmul.f32.gmra.mxu0 %v1687
    %v2362 = vpop.f32.mrf.mxu0
    %v2363 = vadd.f32 %v2343, %v2362
    %2364 = vdwg.mxu0
    %2365 = vmatpush.msra.mxu0 %v716
    %2366 = vmatpush.msra.mxu0 %v706
    %2367 = vmatpush.msra.mxu0 %v696
    %2368 = vmatpush.msra.mxu0 %v686
    %2369 = vmatpush.msra.mxu0 %v676
    %2370 = vmatpush.msra.mxu0 %v666
    %2371 = vmatpush.msra.mxu0 %v656
    %2372 = vmatpush.msra.mxu0 %v646
    %2373 = vmatpush.msra.mxu0 %v636
    %2374 = vmatpush.msra.mxu0 %v626
    %2375 = vmatpush.msra.mxu0 %v616
    %2376 = vmatpush.msra.mxu0 %v606
    %2377 = vmatpush.msra.mxu0 %v596
    %2378 = vmatpush.msra.mxu0 %v586
    %2379 = vmatpush.msra.mxu0 %v576
    %2380 = vmatpush.msra.mxu0 %v566
    %2381 = vmatmul.f32.gmra.mxu0 %v1688
    %v2382 = vpop.f32.mrf.mxu0
    %v2383 = vadd.f32 %v2363, %v2382
    %2384 = vdwg.mxu0
    %2385 = vmatpush.msra.mxu0 %v876
    %2386 = vmatpush.msra.mxu0 %v866
    %2387 = vmatpush.msra.mxu0 %v856
    %2388 = vmatpush.msra.mxu0 %v846
    %2389 = vmatpush.msra.mxu0 %v836
    %2390 = vmatpush.msra.mxu0 %v826
    %2391 = vmatpush.msra.mxu0 %v816
    %2392 = vmatpush.msra.mxu0 %v806
    %2393 = vmatpush.msra.mxu0 %v796
    %2394 = vmatpush.msra.mxu0 %v786
    %2395 = vmatpush.msra.mxu0 %v776
    %2396 = vmatpush.msra.mxu0 %v766
    %2397 = vmatpush.msra.mxu0 %v756
    %2398 = vmatpush.msra.mxu0 %v746
    %2399 = vmatpush.msra.mxu0 %v736
    %2400 = vmatpush.msra.mxu0 %v726
    %2401 = vmatmul.f32.gmra.mxu0 %v1689
    %v2402 = vpop.f32.mrf.mxu0
    %v2403 = vadd.f32 %v2383, %v2402
    %2404 = vdwg.mxu0
    %2405 = vmatpush.msra.mxu0 %v1036
    %2406 = vmatpush.msra.mxu0 %v1026
    %2407 = vmatpush.msra.mxu0 %v1016
    %2408 = vmatpush.msra.mxu0 %v1006
    %2409 = vmatpush.msra.mxu0 %v996
    %2410 = vmatpush.msra.mxu0 %v986
    %2411 = vmatpush.msra.mxu0 %v976
    %2412 = vmatpush.msra.mxu0 %v966
    %2413 = vmatpush.msra.mxu0 %v956
    %2414 = vmatpush.msra.mxu0 %v946
    %2415 = vmatpush.msra.mxu0 %v936
    %2416 = vmatpush.msra.mxu0 %v926
    %2417 = vmatpush.msra.mxu0 %v916
    %2418 = vmatpush.msra.mxu0 %v906
    %2419 = vmatpush.msra.mxu0 %v896
    %2420 = vmatpush.msra.mxu0 %v886
    %2421 = vmatmul.f32.gmra.mxu0 %v1690
    %v2422 = vpop.f32.mrf.mxu0
    %v2423 = vadd.f32 %v2403, %v2422
    %2424 = vdwg.mxu0
    %2425 = vmatpush.msra.mxu0 %v1196
    %2426 = vmatpush.msra.mxu0 %v1186
    %2427 = vmatpush.msra.mxu0 %v1176
    %2428 = vmatpush.msra.mxu0 %v1166
    %2429 = vmatpush.msra.mxu0 %v1156
    %2430 = vmatpush.msra.mxu0 %v1146
    %2431 = vmatpush.msra.mxu0 %v1136
    %2432 = vmatpush.msra.mxu0 %v1126
    %2433 = vmatpush.msra.mxu0 %v1116
    %2434 = vmatpush.msra.mxu0 %v1106
    %2435 = vmatpush.msra.mxu0 %v1096
    %2436 = vmatpush.msra.mxu0 %v1086
    %2437 = vmatpush.msra.mxu0 %v1076
    %2438 = vmatpush.msra.mxu0 %v1066
    %2439 = vmatpush.msra.mxu0 %v1056
    %2440 = vmatpush.msra.mxu0 %v1046
    %2441 = vmatmul.f32.gmra.mxu0 %v1691
    %v2442 = vpop.f32.mrf.mxu0
    %v2443 = vadd.f32 %v2423, %v2442
    %2444 = vdwg.mxu0
    %2445 = vmatpush.msra.mxu0 %v1356
    %2446 = vmatpush.msra.mxu0 %v1346
    %2447 = vmatpush.msra.mxu0 %v1336
    %2448 = vmatpush.msra.mxu0 %v1326
    %2449 = vmatpush.msra.mxu0 %v1316
    %2450 = vmatpush.msra.mxu0 %v1306
    %2451 = vmatpush.msra.mxu0 %v1296
    %2452 = vmatpush.msra.mxu0 %v1286
    %2453 = vmatpush.msra.mxu0 %v1276
    %2454 = vmatpush.msra.mxu0 %v1266
    %2455 = vmatpush.msra.mxu0 %v1256
    %2456 = vmatpush.msra.mxu0 %v1246
    %2457 = vmatpush.msra.mxu0 %v1236
    %2458 = vmatpush.msra.mxu0 %v1226
    %2459 = vmatpush.msra.mxu0 %v1216
    %2460 = vmatpush.msra.mxu0 %v1206
    %2461 = vmatmul.f32.gmra.mxu0 %v1692
    %v2462 = vpop.f32.mrf.mxu0
    %v2463 = vadd.f32 %v2443, %v2462
    %2464 = vdwg.mxu0
    %2465 = vmatpush.msra.mxu0 %v1516
    %2466 = vmatpush.msra.mxu0 %v1506
    %2467 = vmatpush.msra.mxu0 %v1496
    %2468 = vmatpush.msra.mxu0 %v1486
    %2469 = vmatpush.msra.mxu0 %v1476
    %2470 = vmatpush.msra.mxu0 %v1466
    %2471 = vmatpush.msra.mxu0 %v1456
    %2472 = vmatpush.msra.mxu0 %v1446
    %2473 = vmatpush.msra.mxu0 %v1436
    %2474 = vmatpush.msra.mxu0 %v1426
    %2475 = vmatpush.msra.mxu0 %v1416
    %2476 = vmatpush.msra.mxu0 %v1406
    %2477 = vmatpush.msra.mxu0 %v1396
    %2478 = vmatpush.msra.mxu0 %v1386
    %2479 = vmatpush.msra.mxu0 %v1376
    %2480 = vmatpush.msra.mxu0 %v1366
    %2481 = vmatmul.f32.gmra.mxu0 %v1693
    %v2482 = vpop.f32.mrf.mxu0
    %v2483 = vadd.f32 %v2463, %v2482
    %2484 = vdwg.mxu0
    %2485 = vmatpush.msra.mxu0 %v1676
    %2486 = vmatpush.msra.mxu0 %v1666
    %2487 = vmatpush.msra.mxu0 %v1656
    %2488 = vmatpush.msra.mxu0 %v1646
    %2489 = vmatpush.msra.mxu0 %v1636
    %2490 = vmatpush.msra.mxu0 %v1626
    %2491 = vmatpush.msra.mxu0 %v1616
    %2492 = vmatpush.msra.mxu0 %v1606
    %2493 = vmatpush.msra.mxu0 %v1596
    %2494 = vmatpush.msra.mxu0 %v1586
    %2495 = vmatpush.msra.mxu0 %v1576
    %2496 = vmatpush.msra.mxu0 %v1566
    %2497 = vmatpush.msra.mxu0 %v1556
    %2498 = vmatpush.msra.mxu0 %v1546
    %2499 = vmatpush.msra.mxu0 %v1536
    %2500 = vmatpush.msra.mxu0 %v1526
    %2501 = vmatmul.f32.gmra.mxu0 %v1694
    %v2502 = vpop.f32.mrf.mxu0
    %v2503 = vadd.f32 %v2483, %v2502
    %2504 = vdwg.mxu0
    %2505 = vmatpush.msra.mxu0 %v237
    %2506 = vmatpush.msra.mxu0 %v227
    %2507 = vmatpush.msra.mxu0 %v217
    %2508 = vmatpush.msra.mxu0 %v207
    %2509 = vmatpush.msra.mxu0 %v197
    %2510 = vmatpush.msra.mxu0 %v187
    %2511 = vmatpush.msra.mxu0 %v177
    %2512 = vmatpush.msra.mxu0 %v167
    %2513 = vmatpush.msra.mxu0 %v157
    %2514 = vmatpush.msra.mxu0 %v147
    %2515 = vmatpush.msra.mxu0 %v137
    %2516 = vmatpush.msra.mxu0 %v127
    %2517 = vmatpush.msra.mxu0 %v117
    %2518 = vmatpush.msra.mxu0 %v107
    %2519 = vmatpush.msra.mxu0 %v97
    %2520 = vmatpush.msra.mxu0 %v87
    %2521 = vmatmul.f32.gmra.mxu0 %v1685
    %v2522 = vpop.f32.mrf.mxu0
    %v2523 = vadd.f32 0.0, %v2522
    %2524 = vdwg.mxu0
    %2525 = vmatpush.msra.mxu0 %v397
    %2526 = vmatpush.msra.mxu0 %v387
    %2527 = vmatpush.msra.mxu0 %v377
    %2528 = vmatpush.msra.mxu0 %v367
    %2529 = vmatpush.msra.mxu0 %v357
    %2530 = vmatpush.msra.mxu0 %v347
    %2531 = vmatpush.msra.mxu0 %v337
    %2532 = vmatpush.msra.mxu0 %v327
    %2533 = vmatpush.msra.mxu0 %v317
    %2534 = vmatpush.msra.mxu0 %v307
    %2535 = vmatpush.msra.mxu0 %v297
    %2536 = vmatpush.msra.mxu0 %v287
    %2537 = vmatpush.msra.mxu0 %v277
    %2538 = vmatpush.msra.mxu0 %v267
    %2539 = vmatpush.msra.mxu0 %v257
    %2540 = vmatpush.msra.mxu0 %v247
    %2541 = vmatmul.f32.gmra.mxu0 %v1686
    %v2542 = vpop.f32.mrf.mxu0
    %v2543 = vadd.f32 %v2523, %v2542
    %2544 = vdwg.mxu0
    %2545 = vmatpush.msra.mxu0 %v557
    %2546 = vmatpush.msra.mxu0 %v547
    %2547 = vmatpush.msra.mxu0 %v537
    %2548 = vmatpush.msra.mxu0 %v527
    %2549 = vmatpush.msra.mxu0 %v517
    %2550 = vmatpush.msra.mxu0 %v507
    %2551 = vmatpush.msra.mxu0 %v497
    %2552 = vmatpush.msra.mxu0 %v487
    %2553 = vmatpush.msra.mxu0 %v477
    %2554 = vmatpush.msra.mxu0 %v467
    %2555 = vmatpush.msra.mxu0 %v457
    %2556 = vmatpush.msra.mxu0 %v447
    %2557 = vmatpush.msra.mxu0 %v437
    %2558 = vmatpush.msra.mxu0 %v427
    %2559 = vmatpush.msra.mxu0 %v417
    %2560 = vmatpush.msra.mxu0 %v407
    %2561 = vmatmul.f32.gmra.mxu0 %v1687
    %v2562 = vpop.f32.mrf.mxu0
    %v2563 = vadd.f32 %v2543, %v2562
    %2564 = vdwg.mxu0
    %2565 = vmatpush.msra.mxu0 %v717
    %2566 = vmatpush.msra.mxu0 %v707
    %2567 = vmatpush.msra.mxu0 %v697
    %2568 = vmatpush.msra.mxu0 %v687
    %2569 = vmatpush.msra.mxu0 %v677
    %2570 = vmatpush.msra.mxu0 %v667
    %2571 = vmatpush.msra.mxu0 %v657
    %2572 = vmatpush.msra.mxu0 %v647
    %2573 = vmatpush.msra.mxu0 %v637
    %2574 = vmatpush.msra.mxu0 %v627
    %2575 = vmatpush.msra.mxu0 %v617
    %2576 = vmatpush.msra.mxu0 %v607
    %2577 = vmatpush.msra.mxu0 %v597
    %2578 = vmatpush.msra.mxu0 %v587
    %2579 = vmatpush.msra.mxu0 %v577
    %2580 = vmatpush.msra.mxu0 %v567
    %2581 = vmatmul.f32.gmra.mxu0 %v1688
    %v2582 = vpop.f32.mrf.mxu0
    %v2583 = vadd.f32 %v2563, %v2582
    %2584 = vdwg.mxu0
    %2585 = vmatpush.msra.mxu0 %v877
    %2586 = vmatpush.msra.mxu0 %v867
    %2587 = vmatpush.msra.mxu0 %v857
    %2588 = vmatpush.msra.mxu0 %v847
    %2589 = vmatpush.msra.mxu0 %v837
    %2590 = vmatpush.msra.mxu0 %v827
    %2591 = vmatpush.msra.mxu0 %v817
    %2592 = vmatpush.msra.mxu0 %v807
    %2593 = vmatpush.msra.mxu0 %v797
    %2594 = vmatpush.msra.mxu0 %v787
    %2595 = vmatpush.msra.mxu0 %v777
    %2596 = vmatpush.msra.mxu0 %v767
    %2597 = vmatpush.msra.mxu0 %v757
    %2598 = vmatpush.msra.mxu0 %v747
    %2599 = vmatpush.msra.mxu0 %v737
    %2600 = vmatpush.msra.mxu0 %v727
    %2601 = vmatmul.f32.gmra.mxu0 %v1689
    %v2602 = vpop.f32.mrf.mxu0
    %v2603 = vadd.f32 %v2583, %v2602
    %2604 = vdwg.mxu0
    %2605 = vmatpush.msra.mxu0 %v1037
    %2606 = vmatpush.msra.mxu0 %v1027
    %2607 = vmatpush.msra.mxu0 %v1017
    %2608 = vmatpush.msra.mxu0 %v1007
    %2609 = vmatpush.msra.mxu0 %v997
    %2610 = vmatpush.msra.mxu0 %v987
    %2611 = vmatpush.msra.mxu0 %v977
    %2612 = vmatpush.msra.mxu0 %v967
    %2613 = vmatpush.msra.mxu0 %v957
    %2614 = vmatpush.msra.mxu0 %v947
    %2615 = vmatpush.msra.mxu0 %v937
    %2616 = vmatpush.msra.mxu0 %v927
    %2617 = vmatpush.msra.mxu0 %v917
    %2618 = vmatpush.msra.mxu0 %v907
    %2619 = vmatpush.msra.mxu0 %v897
    %2620 = vmatpush.msra.mxu0 %v887
    %2621 = vmatmul.f32.gmra.mxu0 %v1690
    %v2622 = vpop.f32.mrf.mxu0
    %v2623 = vadd.f32 %v2603, %v2622
    %2624 = vdwg.mxu0
    %2625 = vmatpush.msra.mxu0 %v1197
    %2626 = vmatpush.msra.mxu0 %v1187
    %2627 = vmatpush.msra.mxu0 %v1177
    %2628 = vmatpush.msra.mxu0 %v1167
    %2629 = vmatpush.msra.mxu0 %v1157
    %2630 = vmatpush.msra.mxu0 %v1147
    %2631 = vmatpush.msra.mxu0 %v1137
    %2632 = vmatpush.msra.mxu0 %v1127
    %2633 = vmatpush.msra.mxu0 %v1117
    %2634 = vmatpush.msra.mxu0 %v1107
    %2635 = vmatpush.msra.mxu0 %v1097
    %2636 = vmatpush.msra.mxu0 %v1087
    %2637 = vmatpush.msra.mxu0 %v1077
    %2638 = vmatpush.msra.mxu0 %v1067
    %2639 = vmatpush.msra.mxu0 %v1057
    %2640 = vmatpush.msra.mxu0 %v1047
    %2641 = vmatmul.f32.gmra.mxu0 %v1691
    %v2642 = vpop.f32.mrf.mxu0
    %v2643 = vadd.f32 %v2623, %v2642
    %2644 = vdwg.mxu0
    %2645 = vmatpush.msra.mxu0 %v1357
    %2646 = vmatpush.msra.mxu0 %v1347
    %2647 = vmatpush.msra.mxu0 %v1337
    %2648 = vmatpush.msra.mxu0 %v1327
    %2649 = vmatpush.msra.mxu0 %v1317
    %2650 = vmatpush.msra.mxu0 %v1307
    %2651 = vmatpush.msra.mxu0 %v1297
    %2652 = vmatpush.msra.mxu0 %v1287
    %2653 = vmatpush.msra.mxu0 %v1277
    %2654 = vmatpush.msra.mxu0 %v1267
    %2655 = vmatpush.msra.mxu0 %v1257
    %2656 = vmatpush.msra.mxu0 %v1247
    %2657 = vmatpush.msra.mxu0 %v1237
    %2658 = vmatpush.msra.mxu0 %v1227
    %2659 = vmatpush.msra.mxu0 %v1217
    %2660 = vmatpush.msra.mxu0 %v1207
    %2661 = vmatmul.f32.gmra.mxu0 %v1692
    %v2662 = vpop.f32.mrf.mxu0
    %v2663 = vadd.f32 %v2643, %v2662
    %2664 = vdwg.mxu0
    %2665 = vmatpush.msra.mxu0 %v1517
    %2666 = vmatpush.msra.mxu0 %v1507
    %2667 = vmatpush.msra.mxu0 %v1497
    %2668 = vmatpush.msra.mxu0 %v1487
    %2669 = vmatpush.msra.mxu0 %v1477
    %2670 = vmatpush.msra.mxu0 %v1467
    %2671 = vmatpush.msra.mxu0 %v1457
    %2672 = vmatpush.msra.mxu0 %v1447
    %2673 = vmatpush.msra.mxu0 %v1437
    %2674 = vmatpush.msra.mxu0 %v1427
    %2675 = vmatpush.msra.mxu0 %v1417
    %2676 = vmatpush.msra.mxu0 %v1407
    %2677 = vmatpush.msra.mxu0 %v1397
    %2678 = vmatpush.msra.mxu0 %v1387
    %2679 = vmatpush.msra.mxu0 %v1377
    %2680 = vmatpush.msra.mxu0 %v1367
    %2681 = vmatmul.f32.gmra.mxu0 %v1693
    %v2682 = vpop.f32.mrf.mxu0
    %v2683 = vadd.f32 %v2663, %v2682
    %2684 = vdwg.mxu0
    %2685 = vmatpush.msra.mxu0 %v1677
    %2686 = vmatpush.msra.mxu0 %v1667
    %2687 = vmatpush.msra.mxu0 %v1657
    %2688 = vmatpush.msra.mxu0 %v1647
    %2689 = vmatpush.msra.mxu0 %v1637
    %2690 = vmatpush.msra.mxu0 %v1627
    %2691 = vmatpush.msra.mxu0 %v1617
    %2692 = vmatpush.msra.mxu0 %v1607
    %2693 = vmatpush.msra.mxu0 %v1597
    %2694 = vmatpush.msra.mxu0 %v1587
    %2695 = vmatpush.msra.mxu0 %v1577
    %2696 = vmatpush.msra.mxu0 %v1567
    %2697 = vmatpush.msra.mxu0 %v1557
    %2698 = vmatpush.msra.mxu0 %v1547
    %2699 = vmatpush.msra.mxu0 %v1537
    %2700 = vmatpush.msra.mxu0 %v1527
    %2701 = vmatmul.f32.gmra.mxu0 %v1694
    %v2702 = vpop.f32.mrf.mxu0
    %v2703 = vadd.f32 %v2683, %v2702
    %2704 = vdwg.mxu0
    %2705 = vmatpush.msra.mxu0 %v238
    %2706 = vmatpush.msra.mxu0 %v228
    %2707 = vmatpush.msra.mxu0 %v218
    %2708 = vmatpush.msra.mxu0 %v208
    %2709 = vmatpush.msra.mxu0 %v198
    %2710 = vmatpush.msra.mxu0 %v188
    %2711 = vmatpush.msra.mxu0 %v178
    %2712 = vmatpush.msra.mxu0 %v168
    %2713 = vmatpush.msra.mxu0 %v158
    %2714 = vmatpush.msra.mxu0 %v148
    %2715 = vmatpush.msra.mxu0 %v138
    %2716 = vmatpush.msra.mxu0 %v128
    %2717 = vmatpush.msra.mxu0 %v118
    %2718 = vmatpush.msra.mxu0 %v108
    %2719 = vmatpush.msra.mxu0 %v98
    %2720 = vmatpush.msra.mxu0 %v88
    %2721 = vmatmul.f32.gmra.mxu0 %v1685
    %v2722 = vpop.f32.mrf.mxu0
    %v2723 = vadd.f32 0.0, %v2722
    %2724 = vdwg.mxu0
    %2725 = vmatpush.msra.mxu0 %v398
    %2726 = vmatpush.msra.mxu0 %v388
    %2727 = vmatpush.msra.mxu0 %v378
    %2728 = vmatpush.msra.mxu0 %v368
    %2729 = vmatpush.msra.mxu0 %v358
    %2730 = vmatpush.msra.mxu0 %v348
    %2731 = vmatpush.msra.mxu0 %v338
    %2732 = vmatpush.msra.mxu0 %v328
    %2733 = vmatpush.msra.mxu0 %v318
    %2734 = vmatpush.msra.mxu0 %v308
    %2735 = vmatpush.msra.mxu0 %v298
    %2736 = vmatpush.msra.mxu0 %v288
    %2737 = vmatpush.msra.mxu0 %v278
    %2738 = vmatpush.msra.mxu0 %v268
    %2739 = vmatpush.msra.mxu0 %v258
    %2740 = vmatpush.msra.mxu0 %v248
    %2741 = vmatmul.f32.gmra.mxu0 %v1686
    %v2742 = vpop.f32.mrf.mxu0
    %v2743 = vadd.f32 %v2723, %v2742
    %2744 = vdwg.mxu0
    %2745 = vmatpush.msra.mxu0 %v558
    %2746 = vmatpush.msra.mxu0 %v548
    %2747 = vmatpush.msra.mxu0 %v538
    %2748 = vmatpush.msra.mxu0 %v528
    %2749 = vmatpush.msra.mxu0 %v518
    %2750 = vmatpush.msra.mxu0 %v508
    %2751 = vmatpush.msra.mxu0 %v498
    %2752 = vmatpush.msra.mxu0 %v488
    %2753 = vmatpush.msra.mxu0 %v478
    %2754 = vmatpush.msra.mxu0 %v468
    %2755 = vmatpush.msra.mxu0 %v458
    %2756 = vmatpush.msra.mxu0 %v448
    %2757 = vmatpush.msra.mxu0 %v438
    %2758 = vmatpush.msra.mxu0 %v428
    %2759 = vmatpush.msra.mxu0 %v418
    %2760 = vmatpush.msra.mxu0 %v408
    %2761 = vmatmul.f32.gmra.mxu0 %v1687
    %v2762 = vpop.f32.mrf.mxu0
    %v2763 = vadd.f32 %v2743, %v2762
    %2764 = vdwg.mxu0
    %2765 = vmatpush.msra.mxu0 %v718
    %2766 = vmatpush.msra.mxu0 %v708
    %2767 = vmatpush.msra.mxu0 %v698
    %2768 = vmatpush.msra.mxu0 %v688
    %2769 = vmatpush.msra.mxu0 %v678
    %2770 = vmatpush.msra.mxu0 %v668
    %2771 = vmatpush.msra.mxu0 %v658
    %2772 = vmatpush.msra.mxu0 %v648
    %2773 = vmatpush.msra.mxu0 %v638
    %2774 = vmatpush.msra.mxu0 %v628
    %2775 = vmatpush.msra.mxu0 %v618
    %2776 = vmatpush.msra.mxu0 %v608
    %2777 = vmatpush.msra.mxu0 %v598
    %2778 = vmatpush.msra.mxu0 %v588
    %2779 = vmatpush.msra.mxu0 %v578
    %2780 = vmatpush.msra.mxu0 %v568
    %2781 = vmatmul.f32.gmra.mxu0 %v1688
    %v2782 = vpop.f32.mrf.mxu0
    %v2783 = vadd.f32 %v2763, %v2782
    %2784 = vdwg.mxu0
    %2785 = vmatpush.msra.mxu0 %v878
    %2786 = vmatpush.msra.mxu0 %v868
    %2787 = vmatpush.msra.mxu0 %v858
    %2788 = vmatpush.msra.mxu0 %v848
    %2789 = vmatpush.msra.mxu0 %v838
    %2790 = vmatpush.msra.mxu0 %v828
    %2791 = vmatpush.msra.mxu0 %v818
    %2792 = vmatpush.msra.mxu0 %v808
    %2793 = vmatpush.msra.mxu0 %v798
    %2794 = vmatpush.msra.mxu0 %v788
    %2795 = vmatpush.msra.mxu0 %v778
    %2796 = vmatpush.msra.mxu0 %v768
    %2797 = vmatpush.msra.mxu0 %v758
    %2798 = vmatpush.msra.mxu0 %v748
    %2799 = vmatpush.msra.mxu0 %v738
    %2800 = vmatpush.msra.mxu0 %v728
    %2801 = vmatmul.f32.gmra.mxu0 %v1689
    %v2802 = vpop.f32.mrf.mxu0
    %v2803 = vadd.f32 %v2783, %v2802
    %2804 = vdwg.mxu0
    %2805 = vmatpush.msra.mxu0 %v1038
    %2806 = vmatpush.msra.mxu0 %v1028
    %2807 = vmatpush.msra.mxu0 %v1018
    %2808 = vmatpush.msra.mxu0 %v1008
    %2809 = vmatpush.msra.mxu0 %v998
    %2810 = vmatpush.msra.mxu0 %v988
    %2811 = vmatpush.msra.mxu0 %v978
    %2812 = vmatpush.msra.mxu0 %v968
    %2813 = vmatpush.msra.mxu0 %v958
    %2814 = vmatpush.msra.mxu0 %v948
    %2815 = vmatpush.msra.mxu0 %v938
    %2816 = vmatpush.msra.mxu0 %v928
    %2817 = vmatpush.msra.mxu0 %v918
    %2818 = vmatpush.msra.mxu0 %v908
    %2819 = vmatpush.msra.mxu0 %v898
    %2820 = vmatpush.msra.mxu0 %v888
    %2821 = vmatmul.f32.gmra.mxu0 %v1690
    %v2822 = vpop.f32.mrf.mxu0
    %v2823 = vadd.f32 %v2803, %v2822
    %2824 = vdwg.mxu0
    %2825 = vmatpush.msra.mxu0 %v1198
    %2826 = vmatpush.msra.mxu0 %v1188
    %2827 = vmatpush.msra.mxu0 %v1178
    %2828 = vmatpush.msra.mxu0 %v1168
    %2829 = vmatpush.msra.mxu0 %v1158
    %2830 = vmatpush.msra.mxu0 %v1148
    %2831 = vmatpush.msra.mxu0 %v1138
    %2832 = vmatpush.msra.mxu0 %v1128
    %2833 = vmatpush.msra.mxu0 %v1118
    %2834 = vmatpush.msra.mxu0 %v1108
    %2835 = vmatpush.msra.mxu0 %v1098
    %2836 = vmatpush.msra.mxu0 %v1088
    %2837 = vmatpush.msra.mxu0 %v1078
    %2838 = vmatpush.msra.mxu0 %v1068
    %2839 = vmatpush.msra.mxu0 %v1058
    %2840 = vmatpush.msra.mxu0 %v1048
    %2841 = vmatmul.f32.gmra.mxu0 %v1691
    %v2842 = vpop.f32.mrf.mxu0
    %v2843 = vadd.f32 %v2823, %v2842
    %2844 = vdwg.mxu0
    %2845 = vmatpush.msra.mxu0 %v1358
    %2846 = vmatpush.msra.mxu0 %v1348
    %2847 = vmatpush.msra.mxu0 %v1338
    %2848 = vmatpush.msra.mxu0 %v1328
    %2849 = vmatpush.msra.mxu0 %v1318
    %2850 = vmatpush.msra.mxu0 %v1308
    %2851 = vmatpush.msra.mxu0 %v1298
    %2852 = vmatpush.msra.mxu0 %v1288
    %2853 = vmatpush.msra.mxu0 %v1278
    %2854 = vmatpush.msra.mxu0 %v1268
    %2855 = vmatpush.msra.mxu0 %v1258
    %2856 = vmatpush.msra.mxu0 %v1248
    %2857 = vmatpush.msra.mxu0 %v1238
    %2858 = vmatpush.msra.mxu0 %v1228
    %2859 = vmatpush.msra.mxu0 %v1218
    %2860 = vmatpush.msra.mxu0 %v1208
    %2861 = vmatmul.f32.gmra.mxu0 %v1692
    %v2862 = vpop.f32.mrf.mxu0
    %v2863 = vadd.f32 %v2843, %v2862
    %2864 = vdwg.mxu0
    %2865 = vmatpush.msra.mxu0 %v1518
    %2866 = vmatpush.msra.mxu0 %v1508
    %2867 = vmatpush.msra.mxu0 %v1498
    %2868 = vmatpush.msra.mxu0 %v1488
    %2869 = vmatpush.msra.mxu0 %v1478
    %2870 = vmatpush.msra.mxu0 %v1468
    %2871 = vmatpush.msra.mxu0 %v1458
    %2872 = vmatpush.msra.mxu0 %v1448
    %2873 = vmatpush.msra.mxu0 %v1438
    %2874 = vmatpush.msra.mxu0 %v1428
    %2875 = vmatpush.msra.mxu0 %v1418
    %2876 = vmatpush.msra.mxu0 %v1408
    %2877 = vmatpush.msra.mxu0 %v1398
    %2878 = vmatpush.msra.mxu0 %v1388
    %2879 = vmatpush.msra.mxu0 %v1378
    %2880 = vmatpush.msra.mxu0 %v1368
    %2881 = vmatmul.f32.gmra.mxu0 %v1693
    %v2882 = vpop.f32.mrf.mxu0
    %v2883 = vadd.f32 %v2863, %v2882
    %2884 = vdwg.mxu0
    %2885 = vmatpush.msra.mxu0 %v1678
    %2886 = vmatpush.msra.mxu0 %v1668
    %2887 = vmatpush.msra.mxu0 %v1658
    %2888 = vmatpush.msra.mxu0 %v1648
    %2889 = vmatpush.msra.mxu0 %v1638
    %2890 = vmatpush.msra.mxu0 %v1628
    %2891 = vmatpush.msra.mxu0 %v1618
    %2892 = vmatpush.msra.mxu0 %v1608
    %2893 = vmatpush.msra.mxu0 %v1598
    %2894 = vmatpush.msra.mxu0 %v1588
    %2895 = vmatpush.msra.mxu0 %v1578
    %2896 = vmatpush.msra.mxu0 %v1568
    %2897 = vmatpush.msra.mxu0 %v1558
    %2898 = vmatpush.msra.mxu0 %v1548
    %2899 = vmatpush.msra.mxu0 %v1538
    %2900 = vmatpush.msra.mxu0 %v1528
    %2901 = vmatmul.f32.gmra.mxu0 %v1694
    %v2902 = vpop.f32.mrf.mxu0
    %v2903 = vadd.f32 %v2883, %v2902
    %2904 = vdwg.mxu0
    %2905 = vmatpush.msra.mxu0 %v239
    %2906 = vmatpush.msra.mxu0 %v229
    %2907 = vmatpush.msra.mxu0 %v219
    %2908 = vmatpush.msra.mxu0 %v209
    %2909 = vmatpush.msra.mxu0 %v199
    %2910 = vmatpush.msra.mxu0 %v189
    %2911 = vmatpush.msra.mxu0 %v179
    %2912 = vmatpush.msra.mxu0 %v169
    %2913 = vmatpush.msra.mxu0 %v159
    %2914 = vmatpush.msra.mxu0 %v149
    %2915 = vmatpush.msra.mxu0 %v139
    %2916 = vmatpush.msra.mxu0 %v129
    %2917 = vmatpush.msra.mxu0 %v119
    %2918 = vmatpush.msra.mxu0 %v109
    %2919 = vmatpush.msra.mxu0 %v99
    %2920 = vmatpush.msra.mxu0 %v89
    %2921 = vmatmul.f32.gmra.mxu0 %v1685
    %v2922 = vpop.f32.mrf.mxu0
    %v2923 = vadd.f32 0.0, %v2922
    %2924 = vdwg.mxu0
    %2925 = vmatpush.msra.mxu0 %v399
    %2926 = vmatpush.msra.mxu0 %v389
    %2927 = vmatpush.msra.mxu0 %v379
    %2928 = vmatpush.msra.mxu0 %v369
    %2929 = vmatpush.msra.mxu0 %v359
    %2930 = vmatpush.msra.mxu0 %v349
    %2931 = vmatpush.msra.mxu0 %v339
    %2932 = vmatpush.msra.mxu0 %v329
    %2933 = vmatpush.msra.mxu0 %v319
    %2934 = vmatpush.msra.mxu0 %v309
    %2935 = vmatpush.msra.mxu0 %v299
    %2936 = vmatpush.msra.mxu0 %v289
    %2937 = vmatpush.msra.mxu0 %v279
    %2938 = vmatpush.msra.mxu0 %v269
    %2939 = vmatpush.msra.mxu0 %v259
    %2940 = vmatpush.msra.mxu0 %v249
    %2941 = vmatmul.f32.gmra.mxu0 %v1686
    %v2942 = vpop.f32.mrf.mxu0
    %v2943 = vadd.f32 %v2923, %v2942
    %2944 = vdwg.mxu0
    %2945 = vmatpush.msra.mxu0 %v559
    %2946 = vmatpush.msra.mxu0 %v549
    %2947 = vmatpush.msra.mxu0 %v539
    %2948 = vmatpush.msra.mxu0 %v529
    %2949 = vmatpush.msra.mxu0 %v519
    %2950 = vmatpush.msra.mxu0 %v509
    %2951 = vmatpush.msra.mxu0 %v499
    %2952 = vmatpush.msra.mxu0 %v489
    %2953 = vmatpush.msra.mxu0 %v479
    %2954 = vmatpush.msra.mxu0 %v469
    %2955 = vmatpush.msra.mxu0 %v459
    %2956 = vmatpush.msra.mxu0 %v449
    %2957 = vmatpush.msra.mxu0 %v439
    %2958 = vmatpush.msra.mxu0 %v429
    %2959 = vmatpush.msra.mxu0 %v419
    %2960 = vmatpush.msra.mxu0 %v409
    %2961 = vmatmul.f32.gmra.mxu0 %v1687
    %v2962 = vpop.f32.mrf.mxu0
    %v2963 = vadd.f32 %v2943, %v2962
    %2964 = vdwg.mxu0
    %2965 = vmatpush.msra.mxu0 %v719
    %2966 = vmatpush.msra.mxu0 %v709
    %2967 = vmatpush.msra.mxu0 %v699
    %2968 = vmatpush.msra.mxu0 %v689
    %2969 = vmatpush.msra.mxu0 %v679
    %2970 = vmatpush.msra.mxu0 %v669
    %2971 = vmatpush.msra.mxu0 %v659
    %2972 = vmatpush.msra.mxu0 %v649
    %2973 = vmatpush.msra.mxu0 %v639
    %2974 = vmatpush.msra.mxu0 %v629
    %2975 = vmatpush.msra.mxu0 %v619
    %2976 = vmatpush.msra.mxu0 %v609
    %2977 = vmatpush.msra.mxu0 %v599
    %2978 = vmatpush.msra.mxu0 %v589
    %2979 = vmatpush.msra.mxu0 %v579
    %2980 = vmatpush.msra.mxu0 %v569
    %2981 = vmatmul.f32.gmra.mxu0 %v1688
    %v2982 = vpop.f32.mrf.mxu0
    %v2983 = vadd.f32 %v2963, %v2982
    %2984 = vdwg.mxu0
    %2985 = vmatpush.msra.mxu0 %v879
    %2986 = vmatpush.msra.mxu0 %v869
    %2987 = vmatpush.msra.mxu0 %v859
    %2988 = vmatpush.msra.mxu0 %v849
    %2989 = vmatpush.msra.mxu0 %v839
    %2990 = vmatpush.msra.mxu0 %v829
    %2991 = vmatpush.msra.mxu0 %v819
    %2992 = vmatpush.msra.mxu0 %v809
    %2993 = vmatpush.msra.mxu0 %v799
    %2994 = vmatpush.msra.mxu0 %v789
    %2995 = vmatpush.msra.mxu0 %v779
    %2996 = vmatpush.msra.mxu0 %v769
    %2997 = vmatpush.msra.mxu0 %v759
    %2998 = vmatpush.msra.mxu0 %v749
    %2999 = vmatpush.msra.mxu0 %v739
    %3000 = vmatpush.msra.mxu0 %v729
    %3001 = vmatmul.f32.gmra.mxu0 %v1689
    %v3002 = vpop.f32.mrf.mxu0
    %v3003 = vadd.f32 %v2983, %v3002
    %3004 = vdwg.mxu0
    %3005 = vmatpush.msra.mxu0 %v1039
    %3006 = vmatpush.msra.mxu0 %v1029
    %3007 = vmatpush.msra.mxu0 %v1019
    %3008 = vmatpush.msra.mxu0 %v1009
    %3009 = vmatpush.msra.mxu0 %v999
    %3010 = vmatpush.msra.mxu0 %v989
    %3011 = vmatpush.msra.mxu0 %v979
    %3012 = vmatpush.msra.mxu0 %v969
    %3013 = vmatpush.msra.mxu0 %v959
    %3014 = vmatpush.msra.mxu0 %v949
    %3015 = vmatpush.msra.mxu0 %v939
    %3016 = vmatpush.msra.mxu0 %v929
    %3017 = vmatpush.msra.mxu0 %v919
    %3018 = vmatpush.msra.mxu0 %v909
    %3019 = vmatpush.msra.mxu0 %v899
    %3020 = vmatpush.msra.mxu0 %v889
    %3021 = vmatmul.f32.gmra.mxu0 %v1690
    %v3022 = vpop.f32.mrf.mxu0
    %v3023 = vadd.f32 %v3003, %v3022
    %3024 = vdwg.mxu0
    %3025 = vmatpush.msra.mxu0 %v1199
    %3026 = vmatpush.msra.mxu0 %v1189
    %3027 = vmatpush.msra.mxu0 %v1179
    %3028 = vmatpush.msra.mxu0 %v1169
    %3029 = vmatpush.msra.mxu0 %v1159
    %3030 = vmatpush.msra.mxu0 %v1149
    %3031 = vmatpush.msra.mxu0 %v1139
    %3032 = vmatpush.msra.mxu0 %v1129
    %3033 = vmatpush.msra.mxu0 %v1119
    %3034 = vmatpush.msra.mxu0 %v1109
    %3035 = vmatpush.msra.mxu0 %v1099
    %3036 = vmatpush.msra.mxu0 %v1089
    %3037 = vmatpush.msra.mxu0 %v1079
    %3038 = vmatpush.msra.mxu0 %v1069
    %3039 = vmatpush.msra.mxu0 %v1059
    %3040 = vmatpush.msra.mxu0 %v1049
    %3041 = vmatmul.f32.gmra.mxu0 %v1691
    %v3042 = vpop.f32.mrf.mxu0
    %v3043 = vadd.f32 %v3023, %v3042
    %3044 = vdwg.mxu0
    %3045 = vmatpush.msra.mxu0 %v1359
    %3046 = vmatpush.msra.mxu0 %v1349
    %3047 = vmatpush.msra.mxu0 %v1339
    %3048 = vmatpush.msra.mxu0 %v1329
    %3049 = vmatpush.msra.mxu0 %v1319
    %3050 = vmatpush.msra.mxu0 %v1309
    %3051 = vmatpush.msra.mxu0 %v1299
    %3052 = vmatpush.msra.mxu0 %v1289
    %3053 = vmatpush.msra.mxu0 %v1279
    %3054 = vmatpush.msra.mxu0 %v1269
    %3055 = vmatpush.msra.mxu0 %v1259
    %3056 = vmatpush.msra.mxu0 %v1249
    %3057 = vmatpush.msra.mxu0 %v1239
    %3058 = vmatpush.msra.mxu0 %v1229
    %3059 = vmatpush.msra.mxu0 %v1219
    %3060 = vmatpush.msra.mxu0 %v1209
    %3061 = vmatmul.f32.gmra.mxu0 %v1692
    %v3062 = vpop.f32.mrf.mxu0
    %v3063 = vadd.f32 %v3043, %v3062
    %3064 = vdwg.mxu0
    %3065 = vmatpush.msra.mxu0 %v1519
    %3066 = vmatpush.msra.mxu0 %v1509
    %3067 = vmatpush.msra.mxu0 %v1499
    %3068 = vmatpush.msra.mxu0 %v1489
    %3069 = vmatpush.msra.mxu0 %v1479
    %3070 = vmatpush.msra.mxu0 %v1469
    %3071 = vmatpush.msra.mxu0 %v1459
    %3072 = vmatpush.msra.mxu0 %v1449
    %3073 = vmatpush.msra.mxu0 %v1439
    %3074 = vmatpush.msra.mxu0 %v1429
    %3075 = vmatpush.msra.mxu0 %v1419
    %3076 = vmatpush.msra.mxu0 %v1409
    %3077 = vmatpush.msra.mxu0 %v1399
    %3078 = vmatpush.msra.mxu0 %v1389
    %3079 = vmatpush.msra.mxu0 %v1379
    %3080 = vmatpush.msra.mxu0 %v1369
    %3081 = vmatmul.f32.gmra.mxu0 %v1693
    %v3082 = vpop.f32.mrf.mxu0
    %v3083 = vadd.f32 %v3063, %v3082
    %3084 = vdwg.mxu0
    %3085 = vmatpush.msra.mxu0 %v1679
    %3086 = vmatpush.msra.mxu0 %v1669
    %3087 = vmatpush.msra.mxu0 %v1659
    %3088 = vmatpush.msra.mxu0 %v1649
    %3089 = vmatpush.msra.mxu0 %v1639
    %3090 = vmatpush.msra.mxu0 %v1629
    %3091 = vmatpush.msra.mxu0 %v1619
    %3092 = vmatpush.msra.mxu0 %v1609
    %3093 = vmatpush.msra.mxu0 %v1599
    %3094 = vmatpush.msra.mxu0 %v1589
    %3095 = vmatpush.msra.mxu0 %v1579
    %3096 = vmatpush.msra.mxu0 %v1569
    %3097 = vmatpush.msra.mxu0 %v1559
    %3098 = vmatpush.msra.mxu0 %v1549
    %3099 = vmatpush.msra.mxu0 %v1539
    %3100 = vmatpush.msra.mxu0 %v1529
    %3101 = vmatmul.f32.gmra.mxu0 %v1694
    %v3102 = vpop.f32.mrf.mxu0
    %v3103 = vadd.f32 %v3083, %v3102
    %3104 = vdwg.mxu0
    %3105 = vmatpush.msra.mxu0 %v240
    %3106 = vmatpush.msra.mxu0 %v230
    %3107 = vmatpush.msra.mxu0 %v220
    %3108 = vmatpush.msra.mxu0 %v210
    %3109 = vmatpush.msra.mxu0 %v200
    %3110 = vmatpush.msra.mxu0 %v190
    %3111 = vmatpush.msra.mxu0 %v180
    %3112 = vmatpush.msra.mxu0 %v170
    %3113 = vmatpush.msra.mxu0 %v160
    %3114 = vmatpush.msra.mxu0 %v150
    %3115 = vmatpush.msra.mxu0 %v140
    %3116 = vmatpush.msra.mxu0 %v130
    %3117 = vmatpush.msra.mxu0 %v120
    %3118 = vmatpush.msra.mxu0 %v110
    %3119 = vmatpush.msra.mxu0 %v100
    %3120 = vmatpush.msra.mxu0 %v90
    %3121 = vmatmul.f32.gmra.mxu0 %v1685
    %v3122 = vpop.f32.mrf.mxu0
    %v3123 = vadd.f32 0.0, %v3122
    %3124 = vdwg.mxu0
    %3125 = vmatpush.msra.mxu0 %v400
    %3126 = vmatpush.msra.mxu0 %v390
    %3127 = vmatpush.msra.mxu0 %v380
    %3128 = vmatpush.msra.mxu0 %v370
    %3129 = vmatpush.msra.mxu0 %v360
    %3130 = vmatpush.msra.mxu0 %v350
    %3131 = vmatpush.msra.mxu0 %v340
    %3132 = vmatpush.msra.mxu0 %v330
    %3133 = vmatpush.msra.mxu0 %v320
    %3134 = vmatpush.msra.mxu0 %v310
    %3135 = vmatpush.msra.mxu0 %v300
    %3136 = vmatpush.msra.mxu0 %v290
    %3137 = vmatpush.msra.mxu0 %v280
    %3138 = vmatpush.msra.mxu0 %v270
    %3139 = vmatpush.msra.mxu0 %v260
    %3140 = vmatpush.msra.mxu0 %v250
    %3141 = vmatmul.f32.gmra.mxu0 %v1686
    %v3142 = vpop.f32.mrf.mxu0
    %v3143 = vadd.f32 %v3123, %v3142
    %3144 = vdwg.mxu0
    %3145 = vmatpush.msra.mxu0 %v560
    %3146 = vmatpush.msra.mxu0 %v550
    %3147 = vmatpush.msra.mxu0 %v540
    %3148 = vmatpush.msra.mxu0 %v530
    %3149 = vmatpush.msra.mxu0 %v520
    %3150 = vmatpush.msra.mxu0 %v510
    %3151 = vmatpush.msra.mxu0 %v500
    %3152 = vmatpush.msra.mxu0 %v490
    %3153 = vmatpush.msra.mxu0 %v480
    %3154 = vmatpush.msra.mxu0 %v470
    %3155 = vmatpush.msra.mxu0 %v460
    %3156 = vmatpush.msra.mxu0 %v450
    %3157 = vmatpush.msra.mxu0 %v440
    %3158 = vmatpush.msra.mxu0 %v430
    %3159 = vmatpush.msra.mxu0 %v420
    %3160 = vmatpush.msra.mxu0 %v410
    %3161 = vmatmul.f32.gmra.mxu0 %v1687
    %v3162 = vpop.f32.mrf.mxu0
    %v3163 = vadd.f32 %v3143, %v3162
    %3164 = vdwg.mxu0
    %3165 = vmatpush.msra.mxu0 %v720
    %3166 = vmatpush.msra.mxu0 %v710
    %3167 = vmatpush.msra.mxu0 %v700
    %3168 = vmatpush.msra.mxu0 %v690
    %3169 = vmatpush.msra.mxu0 %v680
    %3170 = vmatpush.msra.mxu0 %v670
    %3171 = vmatpush.msra.mxu0 %v660
    %3172 = vmatpush.msra.mxu0 %v650
    %3173 = vmatpush.msra.mxu0 %v640
    %3174 = vmatpush.msra.mxu0 %v630
    %3175 = vmatpush.msra.mxu0 %v620
    %3176 = vmatpush.msra.mxu0 %v610
    %3177 = vmatpush.msra.mxu0 %v600
    %3178 = vmatpush.msra.mxu0 %v590
    %3179 = vmatpush.msra.mxu0 %v580
    %3180 = vmatpush.msra.mxu0 %v570
    %3181 = vmatmul.f32.gmra.mxu0 %v1688
    %v3182 = vpop.f32.mrf.mxu0
    %v3183 = vadd.f32 %v3163, %v3182
    %3184 = vdwg.mxu0
    %3185 = vmatpush.msra.mxu0 %v880
    %3186 = vmatpush.msra.mxu0 %v870
    %3187 = vmatpush.msra.mxu0 %v860
    %3188 = vmatpush.msra.mxu0 %v850
    %3189 = vmatpush.msra.mxu0 %v840
    %3190 = vmatpush.msra.mxu0 %v830
    %3191 = vmatpush.msra.mxu0 %v820
    %3192 = vmatpush.msra.mxu0 %v810
    %3193 = vmatpush.msra.mxu0 %v800
    %3194 = vmatpush.msra.mxu0 %v790
    %3195 = vmatpush.msra.mxu0 %v780
    %3196 = vmatpush.msra.mxu0 %v770
    %3197 = vmatpush.msra.mxu0 %v760
    %3198 = vmatpush.msra.mxu0 %v750
    %3199 = vmatpush.msra.mxu0 %v740
    %3200 = vmatpush.msra.mxu0 %v730
    %3201 = vmatmul.f32.gmra.mxu0 %v1689
    %v3202 = vpop.f32.mrf.mxu0
    %v3203 = vadd.f32 %v3183, %v3202
    %3204 = vdwg.mxu0
    %3205 = vmatpush.msra.mxu0 %v1040
    %3206 = vmatpush.msra.mxu0 %v1030
    %3207 = vmatpush.msra.mxu0 %v1020
    %3208 = vmatpush.msra.mxu0 %v1010
    %3209 = vmatpush.msra.mxu0 %v1000
    %3210 = vmatpush.msra.mxu0 %v990
    %3211 = vmatpush.msra.mxu0 %v980
    %3212 = vmatpush.msra.mxu0 %v970
    %3213 = vmatpush.msra.mxu0 %v960
    %3214 = vmatpush.msra.mxu0 %v950
    %3215 = vmatpush.msra.mxu0 %v940
    %3216 = vmatpush.msra.mxu0 %v930
    %3217 = vmatpush.msra.mxu0 %v920
    %3218 = vmatpush.msra.mxu0 %v910
    %3219 = vmatpush.msra.mxu0 %v900
    %3220 = vmatpush.msra.mxu0 %v890
    %3221 = vmatmul.f32.gmra.mxu0 %v1690
    %v3222 = vpop.f32.mrf.mxu0
    %v3223 = vadd.f32 %v3203, %v3222
    %3224 = vdwg.mxu0
    %3225 = vmatpush.msra.mxu0 %v1200
    %3226 = vmatpush.msra.mxu0 %v1190
    %3227 = vmatpush.msra.mxu0 %v1180
    %3228 = vmatpush.msra.mxu0 %v1170
    %3229 = vmatpush.msra.mxu0 %v1160
    %3230 = vmatpush.msra.mxu0 %v1150
    %3231 = vmatpush.msra.mxu0 %v1140
    %3232 = vmatpush.msra.mxu0 %v1130
    %3233 = vmatpush.msra.mxu0 %v1120
    %3234 = vmatpush.msra.mxu0 %v1110
    %3235 = vmatpush.msra.mxu0 %v1100
    %3236 = vmatpush.msra.mxu0 %v1090
    %3237 = vmatpush.msra.mxu0 %v1080
    %3238 = vmatpush.msra.mxu0 %v1070
    %3239 = vmatpush.msra.mxu0 %v1060
    %3240 = vmatpush.msra.mxu0 %v1050
    %3241 = vmatmul.f32.gmra.mxu0 %v1691
    %v3242 = vpop.f32.mrf.mxu0
    %v3243 = vadd.f32 %v3223, %v3242
    %3244 = vdwg.mxu0
    %3245 = vmatpush.msra.mxu0 %v1360
    %3246 = vmatpush.msra.mxu0 %v1350
    %3247 = vmatpush.msra.mxu0 %v1340
    %3248 = vmatpush.msra.mxu0 %v1330
    %3249 = vmatpush.msra.mxu0 %v1320
    %3250 = vmatpush.msra.mxu0 %v1310
    %3251 = vmatpush.msra.mxu0 %v1300
    %3252 = vmatpush.msra.mxu0 %v1290
    %3253 = vmatpush.msra.mxu0 %v1280
    %3254 = vmatpush.msra.mxu0 %v1270
    %3255 = vmatpush.msra.mxu0 %v1260
    %3256 = vmatpush.msra.mxu0 %v1250
    %3257 = vmatpush.msra.mxu0 %v1240
    %3258 = vmatpush.msra.mxu0 %v1230
    %3259 = vmatpush.msra.mxu0 %v1220
    %3260 = vmatpush.msra.mxu0 %v1210
    %3261 = vmatmul.f32.gmra.mxu0 %v1692
    %v3262 = vpop.f32.mrf.mxu0
    %v3263 = vadd.f32 %v3243, %v3262
    %3264 = vdwg.mxu0
    %3265 = vmatpush.msra.mxu0 %v1520
    %3266 = vmatpush.msra.mxu0 %v1510
    %3267 = vmatpush.msra.mxu0 %v1500
    %3268 = vmatpush.msra.mxu0 %v1490
    %3269 = vmatpush.msra.mxu0 %v1480
    %3270 = vmatpush.msra.mxu0 %v1470
    %3271 = vmatpush.msra.mxu0 %v1460
    %3272 = vmatpush.msra.mxu0 %v1450
    %3273 = vmatpush.msra.mxu0 %v1440
    %3274 = vmatpush.msra.mxu0 %v1430
    %3275 = vmatpush.msra.mxu0 %v1420
    %3276 = vmatpush.msra.mxu0 %v1410
    %3277 = vmatpush.msra.mxu0 %v1400
    %3278 = vmatpush.msra.mxu0 %v1390
    %3279 = vmatpush.msra.mxu0 %v1380
    %3280 = vmatpush.msra.mxu0 %v1370
    %3281 = vmatmul.f32.gmra.mxu0 %v1693
    %v3282 = vpop.f32.mrf.mxu0
    %v3283 = vadd.f32 %v3263, %v3282
    %3284 = vdwg.mxu0
    %3285 = vmatpush.msra.mxu0 %v1680
    %3286 = vmatpush.msra.mxu0 %v1670
    %3287 = vmatpush.msra.mxu0 %v1660
    %3288 = vmatpush.msra.mxu0 %v1650
    %3289 = vmatpush.msra.mxu0 %v1640
    %3290 = vmatpush.msra.mxu0 %v1630
    %3291 = vmatpush.msra.mxu0 %v1620
    %3292 = vmatpush.msra.mxu0 %v1610
    %3293 = vmatpush.msra.mxu0 %v1600
    %3294 = vmatpush.msra.mxu0 %v1590
    %3295 = vmatpush.msra.mxu0 %v1580
    %3296 = vmatpush.msra.mxu0 %v1570
    %3297 = vmatpush.msra.mxu0 %v1560
    %3298 = vmatpush.msra.mxu0 %v1550
    %3299 = vmatpush.msra.mxu0 %v1540
    %3300 = vmatpush.msra.mxu0 %v1530
    %3301 = vmatmul.f32.gmra.mxu0 %v1694
    %v3302 = vpop.f32.mrf.mxu0
    %v3303 = vadd.f32 %v3283, %v3302
    %3304 = vdwg.mxu0
    %3305 = vmatpush.msra.mxu0 %v241
    %3306 = vmatpush.msra.mxu0 %v231
    %3307 = vmatpush.msra.mxu0 %v221
    %3308 = vmatpush.msra.mxu0 %v211
    %3309 = vmatpush.msra.mxu0 %v201
    %3310 = vmatpush.msra.mxu0 %v191
    %3311 = vmatpush.msra.mxu0 %v181
    %3312 = vmatpush.msra.mxu0 %v171
    %3313 = vmatpush.msra.mxu0 %v161
    %3314 = vmatpush.msra.mxu0 %v151
    %3315 = vmatpush.msra.mxu0 %v141
    %3316 = vmatpush.msra.mxu0 %v131
    %3317 = vmatpush.msra.mxu0 %v121
    %3318 = vmatpush.msra.mxu0 %v111
    %3319 = vmatpush.msra.mxu0 %v101
    %3320 = vmatpush.msra.mxu0 %v91
    %3321 = vmatmul.f32.gmra.mxu0 %v1685
    %v3322 = vpop.f32.mrf.mxu0
    %v3323 = vadd.f32 0.0, %v3322
    %3324 = vdwg.mxu0
    %3325 = vmatpush.msra.mxu0 %v401
    %3326 = vmatpush.msra.mxu0 %v391
    %3327 = vmatpush.msra.mxu0 %v381
    %3328 = vmatpush.msra.mxu0 %v371
    %3329 = vmatpush.msra.mxu0 %v361
    %3330 = vmatpush.msra.mxu0 %v351
    %3331 = vmatpush.msra.mxu0 %v341
    %3332 = vmatpush.msra.mxu0 %v331
    %3333 = vmatpush.msra.mxu0 %v321
    %3334 = vmatpush.msra.mxu0 %v311
    %3335 = vmatpush.msra.mxu0 %v301
    %3336 = vmatpush.msra.mxu0 %v291
    %3337 = vmatpush.msra.mxu0 %v281
    %3338 = vmatpush.msra.mxu0 %v271
    %3339 = vmatpush.msra.mxu0 %v261
    %3340 = vmatpush.msra.mxu0 %v251
    %3341 = vmatmul.f32.gmra.mxu0 %v1686
    %v3342 = vpop.f32.mrf.mxu0
    %v3343 = vadd.f32 %v3323, %v3342
    %3344 = vdwg.mxu0
    %3345 = vmatpush.msra.mxu0 %v561
    %3346 = vmatpush.msra.mxu0 %v551
    %3347 = vmatpush.msra.mxu0 %v541
    %3348 = vmatpush.msra.mxu0 %v531
    %3349 = vmatpush.msra.mxu0 %v521
    %3350 = vmatpush.msra.mxu0 %v511
    %3351 = vmatpush.msra.mxu0 %v501
    %3352 = vmatpush.msra.mxu0 %v491
    %3353 = vmatpush.msra.mxu0 %v481
    %3354 = vmatpush.msra.mxu0 %v471
    %3355 = vmatpush.msra.mxu0 %v461
    %3356 = vmatpush.msra.mxu0 %v451
    %3357 = vmatpush.msra.mxu0 %v441
    %3358 = vmatpush.msra.mxu0 %v431
    %3359 = vmatpush.msra.mxu0 %v421
    %3360 = vmatpush.msra.mxu0 %v411
    %3361 = vmatmul.f32.gmra.mxu0 %v1687
    %v3362 = vpop.f32.mrf.mxu0
    %v3363 = vadd.f32 %v3343, %v3362
    %3364 = vdwg.mxu0
    %3365 = vmatpush.msra.mxu0 %v721
    %3366 = vmatpush.msra.mxu0 %v711
    %3367 = vmatpush.msra.mxu0 %v701
    %3368 = vmatpush.msra.mxu0 %v691
    %3369 = vmatpush.msra.mxu0 %v681
    %3370 = vmatpush.msra.mxu0 %v671
    %3371 = vmatpush.msra.mxu0 %v661
    %3372 = vmatpush.msra.mxu0 %v651
    %3373 = vmatpush.msra.mxu0 %v641
    %3374 = vmatpush.msra.mxu0 %v631
    %3375 = vmatpush.msra.mxu0 %v621
    %3376 = vmatpush.msra.mxu0 %v611
    %3377 = vmatpush.msra.mxu0 %v601
    %3378 = vmatpush.msra.mxu0 %v591
    %3379 = vmatpush.msra.mxu0 %v581
    %3380 = vmatpush.msra.mxu0 %v571
    %3381 = vmatmul.f32.gmra.mxu0 %v1688
    %v3382 = vpop.f32.mrf.mxu0
    %v3383 = vadd.f32 %v3363, %v3382
    %3384 = vdwg.mxu0
    %3385 = vmatpush.msra.mxu0 %v881
    %3386 = vmatpush.msra.mxu0 %v871
    %3387 = vmatpush.msra.mxu0 %v861
    %3388 = vmatpush.msra.mxu0 %v851
    %3389 = vmatpush.msra.mxu0 %v841
    %3390 = vmatpush.msra.mxu0 %v831
    %3391 = vmatpush.msra.mxu0 %v821
    %3392 = vmatpush.msra.mxu0 %v811
    %3393 = vmatpush.msra.mxu0 %v801
    %3394 = vmatpush.msra.mxu0 %v791
    %3395 = vmatpush.msra.mxu0 %v781
    %3396 = vmatpush.msra.mxu0 %v771
    %3397 = vmatpush.msra.mxu0 %v761
    %3398 = vmatpush.msra.mxu0 %v751
    %3399 = vmatpush.msra.mxu0 %v741
    %3400 = vmatpush.msra.mxu0 %v731
    %3401 = vmatmul.f32.gmra.mxu0 %v1689
    %v3402 = vpop.f32.mrf.mxu0
    %v3403 = vadd.f32 %v3383, %v3402
    %3404 = vdwg.mxu0
    %3405 = vmatpush.msra.mxu0 %v1041
    %3406 = vmatpush.msra.mxu0 %v1031
    %3407 = vmatpush.msra.mxu0 %v1021
    %3408 = vmatpush.msra.mxu0 %v1011
    %3409 = vmatpush.msra.mxu0 %v1001
    %3410 = vmatpush.msra.mxu0 %v991
    %3411 = vmatpush.msra.mxu0 %v981
    %3412 = vmatpush.msra.mxu0 %v971
    %3413 = vmatpush.msra.mxu0 %v961
    %3414 = vmatpush.msra.mxu0 %v951
    %3415 = vmatpush.msra.mxu0 %v941
    %3416 = vmatpush.msra.mxu0 %v931
    %3417 = vmatpush.msra.mxu0 %v921
    %3418 = vmatpush.msra.mxu0 %v911
    %3419 = vmatpush.msra.mxu0 %v901
    %3420 = vmatpush.msra.mxu0 %v891
    %3421 = vmatmul.f32.gmra.mxu0 %v1690
    %v3422 = vpop.f32.mrf.mxu0
    %v3423 = vadd.f32 %v3403, %v3422
    %3424 = vdwg.mxu0
    %3425 = vmatpush.msra.mxu0 %v1201
    %3426 = vmatpush.msra.mxu0 %v1191
    %3427 = vmatpush.msra.mxu0 %v1181
    %3428 = vmatpush.msra.mxu0 %v1171
    %3429 = vmatpush.msra.mxu0 %v1161
    %3430 = vmatpush.msra.mxu0 %v1151
    %3431 = vmatpush.msra.mxu0 %v1141
    %3432 = vmatpush.msra.mxu0 %v1131
    %3433 = vmatpush.msra.mxu0 %v1121
    %3434 = vmatpush.msra.mxu0 %v1111
    %3435 = vmatpush.msra.mxu0 %v1101
    %3436 = vmatpush.msra.mxu0 %v1091
    %3437 = vmatpush.msra.mxu0 %v1081
    %3438 = vmatpush.msra.mxu0 %v1071
    %3439 = vmatpush.msra.mxu0 %v1061
    %3440 = vmatpush.msra.mxu0 %v1051
    %3441 = vmatmul.f32.gmra.mxu0 %v1691
    %v3442 = vpop.f32.mrf.mxu0
    %v3443 = vadd.f32 %v3423, %v3442
    %3444 = vdwg.mxu0
    %3445 = vmatpush.msra.mxu0 %v1361
    %3446 = vmatpush.msra.mxu0 %v1351
    %3447 = vmatpush.msra.mxu0 %v1341
    %3448 = vmatpush.msra.mxu0 %v1331
    %3449 = vmatpush.msra.mxu0 %v1321
    %3450 = vmatpush.msra.mxu0 %v1311
    %3451 = vmatpush.msra.mxu0 %v1301
    %3452 = vmatpush.msra.mxu0 %v1291
    %3453 = vmatpush.msra.mxu0 %v1281
    %3454 = vmatpush.msra.mxu0 %v1271
    %3455 = vmatpush.msra.mxu0 %v1261
    %3456 = vmatpush.msra.mxu0 %v1251
    %3457 = vmatpush.msra.mxu0 %v1241
    %3458 = vmatpush.msra.mxu0 %v1231
    %3459 = vmatpush.msra.mxu0 %v1221
    %3460 = vmatpush.msra.mxu0 %v1211
    %3461 = vmatmul.f32.gmra.mxu0 %v1692
    %v3462 = vpop.f32.mrf.mxu0
    %v3463 = vadd.f32 %v3443, %v3462
    %3464 = vdwg.mxu0
    %3465 = vmatpush.msra.mxu0 %v1521
    %3466 = vmatpush.msra.mxu0 %v1511
    %3467 = vmatpush.msra.mxu0 %v1501
    %3468 = vmatpush.msra.mxu0 %v1491
    %3469 = vmatpush.msra.mxu0 %v1481
    %3470 = vmatpush.msra.mxu0 %v1471
    %3471 = vmatpush.msra.mxu0 %v1461
    %3472 = vmatpush.msra.mxu0 %v1451
    %3473 = vmatpush.msra.mxu0 %v1441
    %3474 = vmatpush.msra.mxu0 %v1431
    %3475 = vmatpush.msra.mxu0 %v1421
    %3476 = vmatpush.msra.mxu0 %v1411
    %3477 = vmatpush.msra.mxu0 %v1401
    %3478 = vmatpush.msra.mxu0 %v1391
    %3479 = vmatpush.msra.mxu0 %v1381
    %3480 = vmatpush.msra.mxu0 %v1371
    %3481 = vmatmul.f32.gmra.mxu0 %v1693
    %v3482 = vpop.f32.mrf.mxu0
    %v3483 = vadd.f32 %v3463, %v3482
    %3484 = vdwg.mxu0
    %3485 = vmatpush.msra.mxu0 %v1681
    %3486 = vmatpush.msra.mxu0 %v1671
    %3487 = vmatpush.msra.mxu0 %v1661
    %3488 = vmatpush.msra.mxu0 %v1651
    %3489 = vmatpush.msra.mxu0 %v1641
    %3490 = vmatpush.msra.mxu0 %v1631
    %3491 = vmatpush.msra.mxu0 %v1621
    %3492 = vmatpush.msra.mxu0 %v1611
    %3493 = vmatpush.msra.mxu0 %v1601
    %3494 = vmatpush.msra.mxu0 %v1591
    %3495 = vmatpush.msra.mxu0 %v1581
    %3496 = vmatpush.msra.mxu0 %v1571
    %3497 = vmatpush.msra.mxu0 %v1561
    %3498 = vmatpush.msra.mxu0 %v1551
    %3499 = vmatpush.msra.mxu0 %v1541
    %3500 = vmatpush.msra.mxu0 %v1531
    %3501 = vmatmul.f32.gmra.mxu0 %v1694
    %v3502 = vpop.f32.mrf.mxu0
    %v3503 = vadd.f32 %v3483, %v3502
    %3504 = vdwg.mxu0
    %3505 = vmatpush.msra.mxu0 %v242
    %3506 = vmatpush.msra.mxu0 %v232
    %3507 = vmatpush.msra.mxu0 %v222
    %3508 = vmatpush.msra.mxu0 %v212
    %3509 = vmatpush.msra.mxu0 %v202
    %3510 = vmatpush.msra.mxu0 %v192
    %3511 = vmatpush.msra.mxu0 %v182
    %3512 = vmatpush.msra.mxu0 %v172
    %3513 = vmatpush.msra.mxu0 %v162
    %3514 = vmatpush.msra.mxu0 %v152
    %3515 = vmatpush.msra.mxu0 %v142
    %3516 = vmatpush.msra.mxu0 %v132
    %3517 = vmatpush.msra.mxu0 %v122
    %3518 = vmatpush.msra.mxu0 %v112
    %3519 = vmatpush.msra.mxu0 %v102
    %3520 = vmatpush.msra.mxu0 %v92
    %3521 = vmatmul.f32.gmra.mxu0 %v1685
    %v3522 = vpop.f32.mrf.mxu0
    %v3523 = vadd.f32 0.0, %v3522
    %3524 = vdwg.mxu0
    %3525 = vmatpush.msra.mxu0 %v402
    %3526 = vmatpush.msra.mxu0 %v392
    %3527 = vmatpush.msra.mxu0 %v382
    %3528 = vmatpush.msra.mxu0 %v372
    %3529 = vmatpush.msra.mxu0 %v362
    %3530 = vmatpush.msra.mxu0 %v352
    %3531 = vmatpush.msra.mxu0 %v342
    %3532 = vmatpush.msra.mxu0 %v332
    %3533 = vmatpush.msra.mxu0 %v322
    %3534 = vmatpush.msra.mxu0 %v312
    %3535 = vmatpush.msra.mxu0 %v302
    %3536 = vmatpush.msra.mxu0 %v292
    %3537 = vmatpush.msra.mxu0 %v282
    %3538 = vmatpush.msra.mxu0 %v272
    %3539 = vmatpush.msra.mxu0 %v262
    %3540 = vmatpush.msra.mxu0 %v252
    %3541 = vmatmul.f32.gmra.mxu0 %v1686
    %v3542 = vpop.f32.mrf.mxu0
    %v3543 = vadd.f32 %v3523, %v3542
    %3544 = vdwg.mxu0
    %3545 = vmatpush.msra.mxu0 %v562
    %3546 = vmatpush.msra.mxu0 %v552
    %3547 = vmatpush.msra.mxu0 %v542
    %3548 = vmatpush.msra.mxu0 %v532
    %3549 = vmatpush.msra.mxu0 %v522
    %3550 = vmatpush.msra.mxu0 %v512
    %3551 = vmatpush.msra.mxu0 %v502
    %3552 = vmatpush.msra.mxu0 %v492
    %3553 = vmatpush.msra.mxu0 %v482
    %3554 = vmatpush.msra.mxu0 %v472
    %3555 = vmatpush.msra.mxu0 %v462
    %3556 = vmatpush.msra.mxu0 %v452
    %3557 = vmatpush.msra.mxu0 %v442
    %3558 = vmatpush.msra.mxu0 %v432
    %3559 = vmatpush.msra.mxu0 %v422
    %3560 = vmatpush.msra.mxu0 %v412
    %3561 = vmatmul.f32.gmra.mxu0 %v1687
    %v3562 = vpop.f32.mrf.mxu0
    %v3563 = vadd.f32 %v3543, %v3562
    %3564 = vdwg.mxu0
    %3565 = vmatpush.msra.mxu0 %v722
    %3566 = vmatpush.msra.mxu0 %v712
    %3567 = vmatpush.msra.mxu0 %v702
    %3568 = vmatpush.msra.mxu0 %v692
    %3569 = vmatpush.msra.mxu0 %v682
    %3570 = vmatpush.msra.mxu0 %v672
    %3571 = vmatpush.msra.mxu0 %v662
    %3572 = vmatpush.msra.mxu0 %v652
    %3573 = vmatpush.msra.mxu0 %v642
    %3574 = vmatpush.msra.mxu0 %v632
    %3575 = vmatpush.msra.mxu0 %v622
    %3576 = vmatpush.msra.mxu0 %v612
    %3577 = vmatpush.msra.mxu0 %v602
    %3578 = vmatpush.msra.mxu0 %v592
    %3579 = vmatpush.msra.mxu0 %v582
    %3580 = vmatpush.msra.mxu0 %v572
    %3581 = vmatmul.f32.gmra.mxu0 %v1688
    %v3582 = vpop.f32.mrf.mxu0
    %v3583 = vadd.f32 %v3563, %v3582
    %3584 = vdwg.mxu0
    %3585 = vmatpush.msra.mxu0 %v882
    %3586 = vmatpush.msra.mxu0 %v872
    %3587 = vmatpush.msra.mxu0 %v862
    %3588 = vmatpush.msra.mxu0 %v852
    %3589 = vmatpush.msra.mxu0 %v842
    %3590 = vmatpush.msra.mxu0 %v832
    %3591 = vmatpush.msra.mxu0 %v822
    %3592 = vmatpush.msra.mxu0 %v812
    %3593 = vmatpush.msra.mxu0 %v802
    %3594 = vmatpush.msra.mxu0 %v792
    %3595 = vmatpush.msra.mxu0 %v782
    %3596 = vmatpush.msra.mxu0 %v772
    %3597 = vmatpush.msra.mxu0 %v762
    %3598 = vmatpush.msra.mxu0 %v752
    %3599 = vmatpush.msra.mxu0 %v742
    %3600 = vmatpush.msra.mxu0 %v732
    %3601 = vmatmul.f32.gmra.mxu0 %v1689
    %v3602 = vpop.f32.mrf.mxu0
    %v3603 = vadd.f32 %v3583, %v3602
    %3604 = vdwg.mxu0
    %3605 = vmatpush.msra.mxu0 %v1042
    %3606 = vmatpush.msra.mxu0 %v1032
    %3607 = vmatpush.msra.mxu0 %v1022
    %3608 = vmatpush.msra.mxu0 %v1012
    %3609 = vmatpush.msra.mxu0 %v1002
    %3610 = vmatpush.msra.mxu0 %v992
    %3611 = vmatpush.msra.mxu0 %v982
    %3612 = vmatpush.msra.mxu0 %v972
    %3613 = vmatpush.msra.mxu0 %v962
    %3614 = vmatpush.msra.mxu0 %v952
    %3615 = vmatpush.msra.mxu0 %v942
    %3616 = vmatpush.msra.mxu0 %v932
    %3617 = vmatpush.msra.mxu0 %v922
    %3618 = vmatpush.msra.mxu0 %v912
    %3619 = vmatpush.msra.mxu0 %v902
    %3620 = vmatpush.msra.mxu0 %v892
    %3621 = vmatmul.f32.gmra.mxu0 %v1690
    %v3622 = vpop.f32.mrf.mxu0
    %v3623 = vadd.f32 %v3603, %v3622
    %3624 = vdwg.mxu0
    %3625 = vmatpush.msra.mxu0 %v1202
    %3626 = vmatpush.msra.mxu0 %v1192
    %3627 = vmatpush.msra.mxu0 %v1182
    %3628 = vmatpush.msra.mxu0 %v1172
    %3629 = vmatpush.msra.mxu0 %v1162
    %3630 = vmatpush.msra.mxu0 %v1152
    %3631 = vmatpush.msra.mxu0 %v1142
    %3632 = vmatpush.msra.mxu0 %v1132
    %3633 = vmatpush.msra.mxu0 %v1122
    %3634 = vmatpush.msra.mxu0 %v1112
    %3635 = vmatpush.msra.mxu0 %v1102
    %3636 = vmatpush.msra.mxu0 %v1092
    %3637 = vmatpush.msra.mxu0 %v1082
    %3638 = vmatpush.msra.mxu0 %v1072
    %3639 = vmatpush.msra.mxu0 %v1062
    %3640 = vmatpush.msra.mxu0 %v1052
    %3641 = vmatmul.f32.gmra.mxu0 %v1691
    %v3642 = vpop.f32.mrf.mxu0
    %v3643 = vadd.f32 %v3623, %v3642
    %3644 = vdwg.mxu0
    %3645 = vmatpush.msra.mxu0 %v1362
    %3646 = vmatpush.msra.mxu0 %v1352
    %3647 = vmatpush.msra.mxu0 %v1342
    %3648 = vmatpush.msra.mxu0 %v1332
    %3649 = vmatpush.msra.mxu0 %v1322
    %3650 = vmatpush.msra.mxu0 %v1312
    %3651 = vmatpush.msra.mxu0 %v1302
    %3652 = vmatpush.msra.mxu0 %v1292
    %3653 = vmatpush.msra.mxu0 %v1282
    %3654 = vmatpush.msra.mxu0 %v1272
    %3655 = vmatpush.msra.mxu0 %v1262
    %3656 = vmatpush.msra.mxu0 %v1252
    %3657 = vmatpush.msra.mxu0 %v1242
    %3658 = vmatpush.msra.mxu0 %v1232
    %3659 = vmatpush.msra.mxu0 %v1222
    %3660 = vmatpush.msra.mxu0 %v1212
    %3661 = vmatmul.f32.gmra.mxu0 %v1692
    %v3662 = vpop.f32.mrf.mxu0
    %v3663 = vadd.f32 %v3643, %v3662
    %3664 = vdwg.mxu0
    %3665 = vmatpush.msra.mxu0 %v1522
    %3666 = vmatpush.msra.mxu0 %v1512
    %3667 = vmatpush.msra.mxu0 %v1502
    %3668 = vmatpush.msra.mxu0 %v1492
    %3669 = vmatpush.msra.mxu0 %v1482
    %3670 = vmatpush.msra.mxu0 %v1472
    %3671 = vmatpush.msra.mxu0 %v1462
    %3672 = vmatpush.msra.mxu0 %v1452
    %3673 = vmatpush.msra.mxu0 %v1442
    %3674 = vmatpush.msra.mxu0 %v1432
    %3675 = vmatpush.msra.mxu0 %v1422
    %3676 = vmatpush.msra.mxu0 %v1412
    %3677 = vmatpush.msra.mxu0 %v1402
    %3678 = vmatpush.msra.mxu0 %v1392
    %3679 = vmatpush.msra.mxu0 %v1382
    %3680 = vmatpush.msra.mxu0 %v1372
    %3681 = vmatmul.f32.gmra.mxu0 %v1693
    %v3682 = vpop.f32.mrf.mxu0
    %v3683 = vadd.f32 %v3663, %v3682
    %3684 = vdwg.mxu0
    %3685 = vmatpush.msra.mxu0 %v1682
    %3686 = vmatpush.msra.mxu0 %v1672
    %3687 = vmatpush.msra.mxu0 %v1662
    %3688 = vmatpush.msra.mxu0 %v1652
    %3689 = vmatpush.msra.mxu0 %v1642
    %3690 = vmatpush.msra.mxu0 %v1632
    %3691 = vmatpush.msra.mxu0 %v1622
    %3692 = vmatpush.msra.mxu0 %v1612
    %3693 = vmatpush.msra.mxu0 %v1602
    %3694 = vmatpush.msra.mxu0 %v1592
    %3695 = vmatpush.msra.mxu0 %v1582
    %3696 = vmatpush.msra.mxu0 %v1572
    %3697 = vmatpush.msra.mxu0 %v1562
    %3698 = vmatpush.msra.mxu0 %v1552
    %3699 = vmatpush.msra.mxu0 %v1542
    %3700 = vmatpush.msra.mxu0 %v1532
    %3701 = vmatmul.f32.gmra.mxu0 %v1694
    %v3702 = vpop.f32.mrf.mxu0
    %v3703 = vadd.f32 %v3683, %v3702
    %3704 = vdwg.mxu0
    %v3705 = vmul.f32 %v1903, %v1903
    %v3706 = vmul.f32 %v2103, %v2103
    %v3707 = vmul.f32 %v2303, %v2303
    %v3708 = vmul.f32 %v2503, %v2503
    %v3709 = vmul.f32 %v2703, %v2703
    %v3710 = vmul.f32 %v2903, %v2903
    %v3711 = vmul.f32 %v3103, %v3103
    %v3712 = vmul.f32 %v3303, %v3303
    %v3713 = vmul.f32 %v3503, %v3503
    %v3714 = vmul.f32 %v3703, %v3703
    %v3715 = vld [vmem:[#allocation5] sm:$0xff]
    %v3716 = vld [vmem:[#allocation5 + $0x8] sm:$0xff]
    %v3717 = vld [vmem:[#allocation5 + $0x10] sm:$0xff]
    %v3718 = vld [vmem:[#allocation5 + $0x18] sm:$0xff]
    %v3719 = vld [vmem:[#allocation5 + $0x20] sm:$0xff]
    %v3720 = vld [vmem:[#allocation5 + $0x28] sm:$0xff]
    %v3721 = vld [vmem:[#allocation5 + $0x30] sm:$0xff]
    %v3722 = vld [vmem:[#allocation5 + $0x38] sm:$0xff]
    %v3723 = vld [vmem:[#allocation5 + $0x40] sm:$0xff]
    %v3724 = vld [vmem:[#allocation5 + $0x48] sm:$0xff]
    %v3725 = vld [vmem:[#allocation5 + $0x50] sm:$0xff]
    %v3726 = vld [vmem:[#allocation5 + $0x58] sm:$0xff]
    %v3727 = vld [vmem:[#allocation5 + $0x60] sm:$0xff]
    %v3728 = vld [vmem:[#allocation5 + $0x68] sm:$0xff]
    %v3729 = vld [vmem:[#allocation5 + $0x70] sm:$0xff]
    %v3730 = vld [vmem:[#allocation5 + $0x78] sm:$0xff]
    %v3731 = vld [vmem:[#allocation5 + $0x80] sm:$0xff]
    %v3732 = vld [vmem:[#allocation5 + $0x88] sm:$0xff]
    %v3733 = vld [vmem:[#allocation5 + $0x90] sm:$0xff]
    %v3734 = vld [vmem:[#allocation5 + $0x98] sm:$0xff]
    %v3735 = vld [vmem:[#allocation5 + $0xa0] sm:$0xff]
    %v3736 = vld [vmem:[#allocation5 + $0xa8] sm:$0xff]
    %v3737 = vld [vmem:[#allocation5 + $0xb0] sm:$0xff]
    %v3738 = vld [vmem:[#allocation5 + $0xb8] sm:$0xff]
    %v3739 = vld [vmem:[#allocation5 + $0xc0] sm:$0xff]
    %v3740 = vld [vmem:[#allocation5 + $0xc8] sm:$0xff]
    %v3741 = vld [vmem:[#allocation5 + $0xd0] sm:$0xff]
    %v3742 = vld [vmem:[#allocation5 + $0xd8] sm:$0xff]
    %v3743 = vld [vmem:[#allocation5 + $0xe0] sm:$0xff]
    %v3744 = vld [vmem:[#allocation5 + $0xe8] sm:$0xff]
    %v3745 = vld [vmem:[#allocation5 + $0xf0] sm:$0xff]
    %v3746 = vld [vmem:[#allocation5 + $0xf8] sm:$0xff]
    %v3747 = vld [vmem:[#allocation5 + $0x100] sm:$0xff]
    %v3748 = vld [vmem:[#allocation5 + $0x108] sm:$0xff]
    %v3749 = vld [vmem:[#allocation5 + $0x110] sm:$0xff]
    %v3750 = vld [vmem:[#allocation5 + $0x118] sm:$0xff]
    %v3751 = vld [vmem:[#allocation5 + $0x120] sm:$0xff]
    %v3752 = vld [vmem:[#allocation5 + $0x128] sm:$0xff]
    %v3753 = vld [vmem:[#allocation5 + $0x130] sm:$0xff]
    %v3754 = vld [vmem:[#allocation5 + $0x138] sm:$0xff]
    %v3755 = vld [vmem:[#allocation5 + $0x140] sm:$0xff]
    %v3756 = vld [vmem:[#allocation5 + $0x148] sm:$0xff]
    %v3757 = vld [vmem:[#allocation5 + $0x150] sm:$0xff]
    %v3758 = vld [vmem:[#allocation5 + $0x158] sm:$0xff]
    %v3759 = vld [vmem:[#allocation5 + $0x160] sm:$0xff]
    %v3760 = vld [vmem:[#allocation5 + $0x168] sm:$0xff]
    %v3761 = vld [vmem:[#allocation5 + $0x170] sm:$0xff]
    %v3762 = vld [vmem:[#allocation5 + $0x178] sm:$0xff]
    %v3763 = vld [vmem:[#allocation5 + $0x180] sm:$0xff]
    %v3764 = vld [vmem:[#allocation5 + $0x188] sm:$0xff]
    %v3765 = vld [vmem:[#allocation5 + $0x190] sm:$0xff]
    %v3766 = vld [vmem:[#allocation5 + $0x198] sm:$0xff]
    %v3767 = vld [vmem:[#allocation5 + $0x1a0] sm:$0xff]
    %v3768 = vld [vmem:[#allocation5 + $0x1a8] sm:$0xff]
    %v3769 = vld [vmem:[#allocation5 + $0x1b0] sm:$0xff]
    %v3770 = vld [vmem:[#allocation5 + $0x1b8] sm:$0xff]
    %v3771 = vld [vmem:[#allocation5 + $0x1c0] sm:$0xff]
    %v3772 = vld [vmem:[#allocation5 + $0x1c8] sm:$0xff]
    %v3773 = vld [vmem:[#allocation5 + $0x1d0] sm:$0xff]
    %v3774 = vld [vmem:[#allocation5 + $0x1d8] sm:$0xff]
    %v3775 = vld [vmem:[#allocation5 + $0x1e0] sm:$0xff]
    %v3776 = vld [vmem:[#allocation5 + $0x1e8] sm:$0xff]
    %v3777 = vld [vmem:[#allocation5 + $0x1f0] sm:$0xff]
    %v3778 = vld [vmem:[#allocation5 + $0x1f8] sm:$0xff]
    %v3779 = vld [vmem:[#allocation5 + $0x200] sm:$0xff]
    %v3780 = vld [vmem:[#allocation5 + $0x208] sm:$0xff]
    %v3781 = vld [vmem:[#allocation5 + $0x210] sm:$0xff]
    %v3782 = vld [vmem:[#allocation5 + $0x218] sm:$0xff]
    %v3783 = vld [vmem:[#allocation5 + $0x220] sm:$0xff]
    %v3784 = vld [vmem:[#allocation5 + $0x228] sm:$0xff]
    %v3785 = vld [vmem:[#allocation5 + $0x230] sm:$0xff]
    %v3786 = vld [vmem:[#allocation5 + $0x238] sm:$0xff]
    %v3787 = vld [vmem:[#allocation5 + $0x240] sm:$0xff]
    %v3788 = vld [vmem:[#allocation5 + $0x248] sm:$0xff]
    %v3789 = vld [vmem:[#allocation5 + $0x250] sm:$0xff]
    %v3790 = vld [vmem:[#allocation5 + $0x258] sm:$0xff]
    %v3791 = vld [vmem:[#allocation5 + $0x260] sm:$0xff]
    %v3792 = vld [vmem:[#allocation5 + $0x268] sm:$0xff]
    %v3793 = vld [vmem:[#allocation5 + $0x270] sm:$0xff]
    %v3794 = vld [vmem:[#allocation5 + $0x278] sm:$0xff]
    %v3795 = vld [vmem:[#allocation5 + $0x280] sm:$0xff]
    %v3796 = vld [vmem:[#allocation5 + $0x288] sm:$0xff]
    %v3797 = vld [vmem:[#allocation5 + $0x290] sm:$0xff]
    %v3798 = vld [vmem:[#allocation5 + $0x298] sm:$0xff]
    %v3799 = vld [vmem:[#allocation5 + $0x2a0] sm:$0xff]
    %v3800 = vld [vmem:[#allocation5 + $0x2a8] sm:$0xff]
    %v3801 = vld [vmem:[#allocation5 + $0x2b0] sm:$0xff]
    %v3802 = vld [vmem:[#allocation5 + $0x2b8] sm:$0xff]
    %v3803 = vld [vmem:[#allocation5 + $0x2c0] sm:$0xff]
    %v3804 = vld [vmem:[#allocation5 + $0x2c8] sm:$0xff]
    %v3805 = vld [vmem:[#allocation5 + $0x2d0] sm:$0xff]
    %v3806 = vld [vmem:[#allocation5 + $0x2d8] sm:$0xff]
    %v3807 = vld [vmem:[#allocation5 + $0x2e0] sm:$0xff]
    %v3808 = vld [vmem:[#allocation5 + $0x2e8] sm:$0xff]
    %v3809 = vld [vmem:[#allocation5 + $0x2f0] sm:$0xff]
    %v3810 = vld [vmem:[#allocation5 + $0x2f8] sm:$0xff]
    %v3811 = vld [vmem:[#allocation5 + $0x300] sm:$0xff]
    %v3812 = vld [vmem:[#allocation5 + $0x308] sm:$0xff]
    %v3813 = vld [vmem:[#allocation5 + $0x310] sm:$0xff]
    %v3814 = vld [vmem:[#allocation5 + $0x318] sm:$0xff]
    %v3815 = vld [vmem:[#allocation5 + $0x320] sm:$0xff]
    %v3816 = vld [vmem:[#allocation5 + $0x328] sm:$0xff]
    %v3817 = vld [vmem:[#allocation5 + $0x330] sm:$0xff]
    %v3818 = vld [vmem:[#allocation5 + $0x338] sm:$0xff]
    %v3819 = vld [vmem:[#allocation5 + $0x340] sm:$0xff]
    %v3820 = vld [vmem:[#allocation5 + $0x348] sm:$0xff]
    %v3821 = vld [vmem:[#allocation5 + $0x350] sm:$0xff]
    %v3822 = vld [vmem:[#allocation5 + $0x358] sm:$0xff]
    %v3823 = vld [vmem:[#allocation5 + $0x360] sm:$0xff]
    %v3824 = vld [vmem:[#allocation5 + $0x368] sm:$0xff]
    %v3825 = vld [vmem:[#allocation5 + $0x370] sm:$0xff]
    %v3826 = vld [vmem:[#allocation5 + $0x378] sm:$0xff]
    %v3827 = vld [vmem:[#allocation5 + $0x380] sm:$0xff]
    %v3828 = vld [vmem:[#allocation5 + $0x388] sm:$0xff]
    %v3829 = vld [vmem:[#allocation5 + $0x390] sm:$0xff]
    %v3830 = vld [vmem:[#allocation5 + $0x398] sm:$0xff]
    %v3831 = vld [vmem:[#allocation5 + $0x3a0] sm:$0xff]
    %v3832 = vld [vmem:[#allocation5 + $0x3a8] sm:$0xff]
    %v3833 = vld [vmem:[#allocation5 + $0x3b0] sm:$0xff]
    %v3834 = vld [vmem:[#allocation5 + $0x3b8] sm:$0xff]
    %v3835 = vld [vmem:[#allocation5 + $0x3c0] sm:$0xff]
    %v3836 = vld [vmem:[#allocation5 + $0x3c8] sm:$0xff]
    %v3837 = vld [vmem:[#allocation5 + $0x3d0] sm:$0xff]
    %v3838 = vld [vmem:[#allocation5 + $0x3d8] sm:$0xff]
    %v3839 = vld [vmem:[#allocation5 + $0x3e0] sm:$0xff]
    %v3840 = vld [vmem:[#allocation5 + $0x3e8] sm:$0xff]
    %v3841 = vld [vmem:[#allocation5 + $0x3f0] sm:$0xff]
    %v3842 = vld [vmem:[#allocation5 + $0x3f8] sm:$0xff]
    %v3843 = vld [vmem:[#allocation5 + $0x400] sm:$0xff]
    %v3844 = vld [vmem:[#allocation5 + $0x408] sm:$0xff]
    %v3845 = vld [vmem:[#allocation5 + $0x410] sm:$0xff]
    %v3846 = vld [vmem:[#allocation5 + $0x418] sm:$0xff]
    %v3847 = vld [vmem:[#allocation5 + $0x420] sm:$0xff]
    %v3848 = vld [vmem:[#allocation5 + $0x428] sm:$0xff]
    %v3849 = vld [vmem:[#allocation5 + $0x430] sm:$0xff]
    %v3850 = vld [vmem:[#allocation5 + $0x438] sm:$0xff]
    %v3851 = vld [vmem:[#allocation5 + $0x440] sm:$0xff]
    %v3852 = vld [vmem:[#allocation5 + $0x448] sm:$0xff]
    %v3853 = vld [vmem:[#allocation5 + $0x450] sm:$0xff]
    %v3854 = vld [vmem:[#allocation5 + $0x458] sm:$0xff]
    %v3855 = vld [vmem:[#allocation5 + $0x460] sm:$0xff]
    %v3856 = vld [vmem:[#allocation5 + $0x468] sm:$0xff]
    %v3857 = vld [vmem:[#allocation5 + $0x470] sm:$0xff]
    %v3858 = vld [vmem:[#allocation5 + $0x478] sm:$0xff]
    %v3859 = vld [vmem:[#allocation5 + $0x480] sm:$0xff]
    %v3860 = vld [vmem:[#allocation5 + $0x488] sm:$0xff]
    %v3861 = vld [vmem:[#allocation5 + $0x490] sm:$0xff]
    %v3862 = vld [vmem:[#allocation5 + $0x498] sm:$0xff]
    %v3863 = vld [vmem:[#allocation5 + $0x4a0] sm:$0xff]
    %v3864 = vld [vmem:[#allocation5 + $0x4a8] sm:$0xff]
    %v3865 = vld [vmem:[#allocation5 + $0x4b0] sm:$0xff]
    %v3866 = vld [vmem:[#allocation5 + $0x4b8] sm:$0xff]
    %v3867 = vld [vmem:[#allocation5 + $0x4c0] sm:$0xff]
    %v3868 = vld [vmem:[#allocation5 + $0x4c8] sm:$0xff]
    %v3869 = vld [vmem:[#allocation5 + $0x4d0] sm:$0xff]
    %v3870 = vld [vmem:[#allocation5 + $0x4d8] sm:$0xff]
    %v3871 = vld [vmem:[#allocation5 + $0x4e0] sm:$0xff]
    %v3872 = vld [vmem:[#allocation5 + $0x4e8] sm:$0xff]
    %v3873 = vld [vmem:[#allocation5 + $0x4f0] sm:$0xff]
    %v3874 = vld [vmem:[#allocation5 + $0x4f8] sm:$0xff]
    %3875 = vmatpush.msra.mxu0 %v3730
    %3876 = vmatpush.msra.mxu0 %v3729
    %3877 = vmatpush.msra.mxu0 %v3728
    %3878 = vmatpush.msra.mxu0 %v3727
    %3879 = vmatpush.msra.mxu0 %v3726
    %3880 = vmatpush.msra.mxu0 %v3725
    %3881 = vmatpush.msra.mxu0 %v3724
    %3882 = vmatpush.msra.mxu0 %v3723
    %3883 = vmatpush.msra.mxu0 %v3722
    %3884 = vmatpush.msra.mxu0 %v3721
    %3885 = vmatpush.msra.mxu0 %v3720
    %3886 = vmatpush.msra.mxu0 %v3719
    %3887 = vmatpush.msra.mxu0 %v3718
    %3888 = vmatpush.msra.mxu0 %v3717
    %3889 = vmatpush.msra.mxu0 %v3716
    %3890 = vmatpush.msra.mxu0 %v3715
    %3891 = vmatmul.f32.gmra.mxu0 %v3705
    %v3892 = vpop.f32.mrf.mxu0
    %v3893 = vadd.f32 0.0, %v3892
    %3894 = vdwg.mxu0
    %3895 = vmatpush.msra.mxu0 %v3746
    %3896 = vmatpush.msra.mxu0 %v3745
    %3897 = vmatpush.msra.mxu0 %v3744
    %3898 = vmatpush.msra.mxu0 %v3743
    %3899 = vmatpush.msra.mxu0 %v3742
    %3900 = vmatpush.msra.mxu0 %v3741
    %3901 = vmatpush.msra.mxu0 %v3740
    %3902 = vmatpush.msra.mxu0 %v3739
    %3903 = vmatpush.msra.mxu0 %v3738
    %3904 = vmatpush.msra.mxu0 %v3737
    %3905 = vmatpush.msra.mxu0 %v3736
    %3906 = vmatpush.msra.mxu0 %v3735
    %3907 = vmatpush.msra.mxu0 %v3734
    %3908 = vmatpush.msra.mxu0 %v3733
    %3909 = vmatpush.msra.mxu0 %v3732
    %3910 = vmatpush.msra.mxu0 %v3731
    %3911 = vmatmul.f32.gmra.mxu0 %v3706
    %v3912 = vpop.f32.mrf.mxu0
    %v3913 = vadd.f32 %v3893, %v3912
    %3914 = vdwg.mxu0
    %3915 = vmatpush.msra.mxu0 %v3762
    %3916 = vmatpush.msra.mxu0 %v3761
    %3917 = vmatpush.msra.mxu0 %v3760
    %3918 = vmatpush.msra.mxu0 %v3759
    %3919 = vmatpush.msra.mxu0 %v3758
    %3920 = vmatpush.msra.mxu0 %v3757
    %3921 = vmatpush.msra.mxu0 %v3756
    %3922 = vmatpush.msra.mxu0 %v3755
    %3923 = vmatpush.msra.mxu0 %v3754
    %3924 = vmatpush.msra.mxu0 %v3753
    %3925 = vmatpush.msra.mxu0 %v3752
    %3926 = vmatpush.msra.mxu0 %v3751
    %3927 = vmatpush.msra.mxu0 %v3750
    %3928 = vmatpush.msra.mxu0 %v3749
    %3929 = vmatpush.msra.mxu0 %v3748
    %3930 = vmatpush.msra.mxu0 %v3747
    %3931 = vmatmul.f32.gmra.mxu0 %v3707
    %v3932 = vpop.f32.mrf.mxu0
    %v3933 = vadd.f32 %v3913, %v3932
    %3934 = vdwg.mxu0
    %3935 = vmatpush.msra.mxu0 %v3778
    %3936 = vmatpush.msra.mxu0 %v3777
    %3937 = vmatpush.msra.mxu0 %v3776
    %3938 = vmatpush.msra.mxu0 %v3775
    %3939 = vmatpush.msra.mxu0 %v3774
    %3940 = vmatpush.msra.mxu0 %v3773
    %3941 = vmatpush.msra.mxu0 %v3772
    %3942 = vmatpush.msra.mxu0 %v3771
    %3943 = vmatpush.msra.mxu0 %v3770
    %3944 = vmatpush.msra.mxu0 %v3769
    %3945 = vmatpush.msra.mxu0 %v3768
    %3946 = vmatpush.msra.mxu0 %v3767
    %3947 = vmatpush.msra.mxu0 %v3766
    %3948 = vmatpush.msra.mxu0 %v3765
    %3949 = vmatpush.msra.mxu0 %v3764
    %3950 = vmatpush.msra.mxu0 %v3763
    %3951 = vmatmul.f32.gmra.mxu0 %v3708
    %v3952 = vpop.f32.mrf.mxu0
    %v3953 = vadd.f32 %v3933, %v3952
    %3954 = vdwg.mxu0
    %3955 = vmatpush.msra.mxu0 %v3794
    %3956 = vmatpush.msra.mxu0 %v3793
    %3957 = vmatpush.msra.mxu0 %v3792
    %3958 = vmatpush.msra.mxu0 %v3791
    %3959 = vmatpush.msra.mxu0 %v3790
    %3960 = vmatpush.msra.mxu0 %v3789
    %3961 = vmatpush.msra.mxu0 %v3788
    %3962 = vmatpush.msra.mxu0 %v3787
    %3963 = vmatpush.msra.mxu0 %v3786
    %3964 = vmatpush.msra.mxu0 %v3785
    %3965 = vmatpush.msra.mxu0 %v3784
    %3966 = vmatpush.msra.mxu0 %v3783
    %3967 = vmatpush.msra.mxu0 %v3782
    %3968 = vmatpush.msra.mxu0 %v3781
    %3969 = vmatpush.msra.mxu0 %v3780
    %3970 = vmatpush.msra.mxu0 %v3779
    %3971 = vmatmul.f32.gmra.mxu0 %v3709
    %v3972 = vpop.f32.mrf.mxu0
    %v3973 = vadd.f32 %v3953, %v3972
    %3974 = vdwg.mxu0
    %3975 = vmatpush.msra.mxu0 %v3810
    %3976 = vmatpush.msra.mxu0 %v3809
    %3977 = vmatpush.msra.mxu0 %v3808
    %3978 = vmatpush.msra.mxu0 %v3807
    %3979 = vmatpush.msra.mxu0 %v3806
    %3980 = vmatpush.msra.mxu0 %v3805
    %3981 = vmatpush.msra.mxu0 %v3804
    %3982 = vmatpush.msra.mxu0 %v3803
    %3983 = vmatpush.msra.mxu0 %v3802
    %3984 = vmatpush.msra.mxu0 %v3801
    %3985 = vmatpush.msra.mxu0 %v3800
    %3986 = vmatpush.msra.mxu0 %v3799
    %3987 = vmatpush.msra.mxu0 %v3798
    %3988 = vmatpush.msra.mxu0 %v3797
    %3989 = vmatpush.msra.mxu0 %v3796
    %3990 = vmatpush.msra.mxu0 %v3795
    %3991 = vmatmul.f32.gmra.mxu0 %v3710
    %v3992 = vpop.f32.mrf.mxu0
    %v3993 = vadd.f32 %v3973, %v3992
    %3994 = vdwg.mxu0
    %3995 = vmatpush.msra.mxu0 %v3826
    %3996 = vmatpush.msra.mxu0 %v3825
    %3997 = vmatpush.msra.mxu0 %v3824
    %3998 = vmatpush.msra.mxu0 %v3823
    %3999 = vmatpush.msra.mxu0 %v3822
    %4000 = vmatpush.msra.mxu0 %v3821
    %4001 = vmatpush.msra.mxu0 %v3820
    %4002 = vmatpush.msra.mxu0 %v3819
    %4003 = vmatpush.msra.mxu0 %v3818
    %4004 = vmatpush.msra.mxu0 %v3817
    %4005 = vmatpush.msra.mxu0 %v3816
    %4006 = vmatpush.msra.mxu0 %v3815
    %4007 = vmatpush.msra.mxu0 %v3814
    %4008 = vmatpush.msra.mxu0 %v3813
    %4009 = vmatpush.msra.mxu0 %v3812
    %4010 = vmatpush.msra.mxu0 %v3811
    %4011 = vmatmul.f32.gmra.mxu0 %v3711
    %v4012 = vpop.f32.mrf.mxu0
    %v4013 = vadd.f32 %v3993, %v4012
    %4014 = vdwg.mxu0
    %4015 = vmatpush.msra.mxu0 %v3842
    %4016 = vmatpush.msra.mxu0 %v3841
    %4017 = vmatpush.msra.mxu0 %v3840
    %4018 = vmatpush.msra.mxu0 %v3839
    %4019 = vmatpush.msra.mxu0 %v3838
    %4020 = vmatpush.msra.mxu0 %v3837
    %4021 = vmatpush.msra.mxu0 %v3836
    %4022 = vmatpush.msra.mxu0 %v3835
    %4023 = vmatpush.msra.mxu0 %v3834
    %4024 = vmatpush.msra.mxu0 %v3833
    %4025 = vmatpush.msra.mxu0 %v3832
    %4026 = vmatpush.msra.mxu0 %v3831
    %4027 = vmatpush.msra.mxu0 %v3830
    %4028 = vmatpush.msra.mxu0 %v3829
    %4029 = vmatpush.msra.mxu0 %v3828
    %4030 = vmatpush.msra.mxu0 %v3827
    %4031 = vmatmul.f32.gmra.mxu0 %v3712
    %v4032 = vpop.f32.mrf.mxu0
    %v4033 = vadd.f32 %v4013, %v4032
    %4034 = vdwg.mxu0
    %4035 = vmatpush.msra.mxu0 %v3858
    %4036 = vmatpush.msra.mxu0 %v3857
    %4037 = vmatpush.msra.mxu0 %v3856
    %4038 = vmatpush.msra.mxu0 %v3855
    %4039 = vmatpush.msra.mxu0 %v3854
    %4040 = vmatpush.msra.mxu0 %v3853
    %4041 = vmatpush.msra.mxu0 %v3852
    %4042 = vmatpush.msra.mxu0 %v3851
    %4043 = vmatpush.msra.mxu0 %v3850
    %4044 = vmatpush.msra.mxu0 %v3849
    %4045 = vmatpush.msra.mxu0 %v3848
    %4046 = vmatpush.msra.mxu0 %v3847
    %4047 = vmatpush.msra.mxu0 %v3846
    %4048 = vmatpush.msra.mxu0 %v3845
    %4049 = vmatpush.msra.mxu0 %v3844
    %4050 = vmatpush.msra.mxu0 %v3843
    %4051 = vmatmul.f32.gmra.mxu0 %v3713
    %v4052 = vpop.f32.mrf.mxu0
    %v4053 = vadd.f32 %v4033, %v4052
    %4054 = vdwg.mxu0
    %4055 = vmatpush.msra.mxu0 %v3874
    %4056 = vmatpush.msra.mxu0 %v3873
    %4057 = vmatpush.msra.mxu0 %v3872
    %4058 = vmatpush.msra.mxu0 %v3871
    %4059 = vmatpush.msra.mxu0 %v3870
    %4060 = vmatpush.msra.mxu0 %v3869
    %4061 = vmatpush.msra.mxu0 %v3868
    %4062 = vmatpush.msra.mxu0 %v3867
    %4063 = vmatpush.msra.mxu0 %v3866
    %4064 = vmatpush.msra.mxu0 %v3865
    %4065 = vmatpush.msra.mxu0 %v3864
    %4066 = vmatpush.msra.mxu0 %v3863
    %4067 = vmatpush.msra.mxu0 %v3862
    %4068 = vmatpush.msra.mxu0 %v3861
    %4069 = vmatpush.msra.mxu0 %v3860
    %4070 = vmatpush.msra.mxu0 %v3859
    %4071 = vmatmul.f32.gmra.mxu0 %v3714
    %v4072 = vpop.f32.mrf.mxu0
    %v4073 = vadd.f32 %v4053, %v4072
    %4074 = vdwg.mxu0
    %v4075 = vrsqrt.pop %v4073
    %v4076 = vmul.f32 %v4075, %v4073
    %v4077 = vmul.f32 %v4076, %v4075
    %v4078 = vmul.f32 0.5, %v4077
    %v4079 = vsub.f32 1.5, %v4078
    %v4080 = vmul.f32 %v4075, %v4079
    %v4081 = vmul.f32 %v4073, %v4080
    %vm4082 = vcmp.eq.f32.partialorder %v4073, inf
    %v4083 = vsel %vm4082, %v4073, %v4081
    %vm4084 = vcmp.eq.f32.partialorder %v4073, 0.0
    %v4085 = vand.u32 %v4073, 2147483648
    %v4086 = vsel %vm4084, %v4085, %v4083
    %4087 = vst [vmem:[#allocation10] sm:$0x1] %v4086
    // Predicated region
    $region34: #{tpu_custom_call.1} parent=1 // pred_check
      _
    $region35: #{tpu_custom_call.1} parent=1 // pred_check_branch
      %4089 = sbr.rel (0) target = $region37
    $region36: #{tpu_custom_call.1} parent=1 // pred_region
      %4091 = vsyncadd [#allocation4], 0
      %s4093 = sshll.u32 [#allocation10], 4
      %s4094 = int_to_ptr.vmem [resolvable:$true] %s4093
      %s4095 = sshll.u32 %s4, 4
      %s4096 = int_to_ptr.hbm [resolvable:$true] %s4095
      %4098 = dma.vmem_to_hbm [thread:$0]  %s4094, 16, %s4096, [#allocation4]
    $region37: #{tpu_custom_call.1} parent=1 // pred_fallthru
      _
    // Predicated region
    $region38: #{tpu_custom_call.1} parent=1 // pred_check
      _
    $region39: #{tpu_custom_call.1} parent=1 // pred_check_branch
      %4100 = sbr.rel (0) target = $region41
    $region40: #{tpu_custom_call.1} parent=1 // pred_region
      %4102 = dma.done [#allocation4], 16
    $region41: #{tpu_custom_call.1} parent=1 // pred_fallthru
      _
    %4103 = vsyncpa [#allocation3], 1
    %4104 = vsyncpa [#allocation6], 1
    %4105 = vsyncpa [#allocation9], 1
    %4106 = vsyncpa [#allocation4], 1

</llo_original>
